<compile_context>
chip_gen: v5e
topology: v5e:2x2
jax: 0.10.0
libtpu: 0.0.40
codegen_flags: <defaults>
</compile_context>

<pallas_src>
import functools

import jax
import jax.numpy as jnp
from jax import lax
from jax.experimental import pallas as pl
from jax.experimental.pallas import tpu as pltpu


# ---------------------------------------------------------------------------
# Pallas kernel
# ---------------------------------------------------------------------------
def rrcnn_kernel(
    x_ref,        # (1, Cin, Lg)     padded+flattened chunk of images (mxu dtype)
    mask_ref,     # (1, Lg) f32      1.0 at real pixels, 0.0 at pad ring
    w1_ref,       # (Cout, Cin)      1x1 input conv weight (mxu dtype)
    b1_ref,       # (Cout, 1) f32    1x1 input conv bias
    ws1_ref,      # (Cout, 9*Cout)   stacked dw*pw*bn taps, recblock 1 (mxu dtype)
    bias1_ref,    # (Cout, 1) f32    fused bias, recblock 1
    ws2_ref,      # (Cout, 9*Cout)   recblock 2
    bias2_ref,    # (Cout, 1) f32
    out_ref,      # (1, Cout, Lg)
    ybuf,         # VMEM (Cout, halo + Lg + halo), stage dtype
    stage,        # VMEM (9*Cout, Lg), stage dtype
    *, Wp, Cout, Lg, halo,
):
  f32 = jnp.float32
  sdt = ybuf.dtype            # staging dtype (f32 or mxu dtype)

  # Zero only the halos, once per grid step; the centre is always overwritten
  # before it is read.  (Halos guarantee the shifted reads below never touch
  # undefined VMEM, so no NaN can leak through the mask multiplies.)
  ybuf[:, pl.ds(0, halo)] = jnp.zeros((Cout, halo), sdt)
  ybuf[:, pl.ds(halo + Lg, halo)] = jnp.zeros((Cout, halo), sdt)

  mask = mask_ref[...]                                    # (1, Lg) f32

  # --- 1x1 input conv: lane axis = flattened padded space -------------------
  w1 = w1_ref[...]
  x0 = jnp.dot(w1, x_ref[0], preferred_element_type=f32)  # (Cout, Lg)
  x0 = (x0 + b1_ref[...]) * mask                          # zero the pad ring
  # TODO(synk): Dropout(p=0.2) treated as identity (eval mode).

  # Flattened offsets of the 3x3 taps in the (W+2)-wide row-major layout.
  taps = tuple((kh - 1) * Wp + (kw - 1) for kh in range(3) for kw in range(3))

  def conv_one(y, ws, bias, apply_mask=True):
    # Stage the activation (one cast) into the halo-padded buffer, then build
    # the (9*Cout, Lg) stacked operand: row block t = activation shifted by
    # tap offset d_t.  The MXU then does a single K = 9*Cout matmul against
    # fully aligned staging rows.
    y_s = y.astype(sdt)
    ybuf[:, pl.ds(halo, Lg)] = y_s
    for t, d in enumerate(taps):
      if d == 0:
        stage[pl.ds(t * Cout, Cout), :] = y_s              # reuse registers
      else:
        stage[pl.ds(t * Cout, Cout), :] = ybuf[:, pl.ds(halo + d, Lg)]
    operand = stage[...].astype(ws.dtype)                  # no-op if sdt == mxu
    acc = jnp.dot(ws, operand, preferred_element_type=f32)
    acc = jnp.maximum(acc + bias, 0.0)                     # bias: (Cout,1) bcast
    return acc * mask if apply_mask else acc

  def recblock(y, ws, bias, last=False):
    # RecurrentBlock.forward with t=2:
    #   i=0: x1 = conv(x); x1 = x + x1; x1 = conv(x1)
    #   i=1:               x1 = x + x1; x1 = conv(x1)
    y1 = conv_one(y, ws, bias)
    y1 = conv_one(y + y1, ws, bias)
    # The very last conv's pad positions are sliced off in the wrapper, so the
    # mask multiply can be skipped there.
    y1 = conv_one(y + y1, ws, bias, apply_mask=not last)
    return y1

  # Scope the weights/bias reads to their own recblock (vreg pressure).
  r = recblock(x0, ws1_ref[...], bias1_ref[...])
  r = recblock(r, ws2_ref[...], bias2_ref[...], last=True)

  out_ref[0] = (x0 + r).astype(out_ref.dtype)


# ---------------------------------------------------------------------------
# Wrapper: layout plumbing + pallas_call
# ---------------------------------------------------------------------------
def rrcnn_block(x, fused, *, mxu_dtype=jnp.bfloat16, images_per_step=None):
  """x: (N, Cin, H, W) float32 (NCHW, like PyTorch). Returns (N, Cout, H, W).

  mxu_dtype: matmul-operand dtype (bf16 recommended on v5e/v6e/v7x; f32
  accumulation is always kept via preferred_element_type).
  images_per_step: images folded into one grid step (lane-concatenated);
  default keeps >=2 grid steps so v7x's two TensorCores both get work while
  still amortizing per-step overhead on single-TC v5e/v6e.
  """
  N, Cin, H, W = x.shape
  Cout = fused["w1"].shape[0]
  Hp, Wp = H + 2, W + 2
  Lpp = Hp * Wp

  itemsize = int(jnp.dtype(mxu_dtype).itemsize)
  packing = 4 // itemsize                       # rows packed per sublane
  sublane_tile = 8 * packing                    # 8 (f32) / 16 (bf16)
  # Staging buffers in mxu dtype only when the per-tap row blocks stay
  # sublane-tile aligned; otherwise keep them f32 (cast once at the dot).
  stage_dtype = mxu_dtype if (packing == 1 or Cout % sublane_tile == 0) \
      else jnp.float32
  s_isz = int(jnp.dtype(stage_dtype).itemsize)

  # ---- images per grid step -------------------------------------------------
  per_img_bytes = Lpp * (2 * Cin * itemsize        # double-buffered input block
                         + 2 * Cout * 4            # double-buffered output block
                         + 10 * Cout * s_isz)      # ybuf centre + stage
  cap = max(1, (16 * 1024 * 1024) // max(1, per_img_bytes))
  if images_per_step is None:
    g = min(cap, max(1, -(-N // 2)))               # >=2 steps when N >= 2
  else:
    g = images_per_step
  g = max(1, min(g, N))
  n_steps = -(-N // g)
  N_pad = n_steps * g
  Lg = g * Lpp

  halo = max(128, ((Wp + 1 + 127) // 128) * 128)   # >= max tap offset, aligned
  assert halo >= Wp + 1

  # ---- wrapper-side layout plumbing (free, XLA) -----------------------------
  # Zero pad ring around every image, flatten (Hp*Wp) onto the lane axis and
  # concatenate g images per grid step along that axis.
  xp = jnp.pad(x, ((0, N_pad - N), (0, 0), (1, 1), (1, 1)))
  xp = xp.reshape(N_pad, Cin, Lpp).astype(mxu_dtype)
  xp = xp.reshape(n_steps, g, Cin, Lpp).transpose(0, 2, 1, 3)
  xp = xp.reshape(n_steps, Cin, Lg)

  # Real-pixel mask: one (1, Lg) row, zero on every image's pad ring.
  idx = jnp.arange(Lpp, dtype=jnp.int32)
  rr, cc = idx // Wp, idx % Wp
  m1 = ((rr > 0) & (rr < Hp - 1) & (cc > 0) & (cc < Wp - 1)).astype(jnp.float32)
  mask = jnp.tile(m1, (g,)).reshape(1, Lg)

  w1 = fused["w1"].astype(mxu_dtype)
  ws1 = fused["wstack1"].astype(mxu_dtype)
  ws2 = fused["wstack2"].astype(mxu_dtype)
  b1, bias1, bias2 = fused["b1"], fused["bias1"], fused["bias2"]

  kernel = functools.partial(rrcnn_kernel, Wp=Wp, Cout=Cout, Lg=Lg, halo=halo)

  def const_spec(a):
    r = a.ndim
    return pl.BlockSpec(a.shape, lambda s, _r=r: (0,) * _r)

  args = (xp, mask, w1, b1, ws1, bias1, ws2, bias2)
  in_specs = [pl.BlockSpec((1, Cin, Lg), lambda s: (s, 0, 0))]
  in_specs += [const_spec(a) for a in args[1:]]

  out = pl.pallas_call(
      kernel,
      out_shape=jax.ShapeDtypeStruct((n_steps, Cout, Lg), x.dtype),
      grid_spec=pltpu.PrefetchScalarGridSpec(
          num_scalar_prefetch=0,
          grid=(n_steps,),
          in_specs=in_specs,
          out_specs=pl.BlockSpec((1, Cout, Lg), lambda s: (s, 0, 0)),
          scratch_shapes=[
              pltpu.VMEM((Cout, halo + Lg + halo), stage_dtype),   # halo buffer
              pltpu.VMEM((9 * Cout, Lg), stage_dtype),             # stacked K
          ],
      ),
      compiler_params=pltpu.CompilerParams(
          dimension_semantics=("parallel",),       # v7x: steps split over 2 TCs
          vmem_limit_bytes=32 * 1024 * 1024,       # v7x-safe scoped budget
      ),
  )(*args)

  # Undo the layout: (n_steps, Cout, g, Lpp) -> (N, Cout, H, W).
  out = out.reshape(n_steps, Cout, g, Lpp).transpose(0, 2, 1, 3)
  out = out.reshape(N_pad, Cout, Hp, Wp)[:N, :, 1:-1, 1:-1]
  return out.astype(x.dtype)


# ---------------------------------------------------------------------------
# Wrapper-side weight fusion: depthwise3x3 * pointwise1x1 * BN(eval)
#   -> one (Cout, 9*Cout) stacked tap matrix + one (Cout, 1) bias per recblock.
# ---------------------------------------------------------------------------
def fuse_params(p, eps=1e-5):
  Cout = p["conv1x1_w"].shape[0]
  fused = {
      "w1": p["conv1x1_w"],                       # (Cout, Cin)
      "b1": p["conv1x1_b"].reshape(Cout, 1),
  }
  for i in (1, 2):
    s = p[f"bn_gamma{i}"] / jnp.sqrt(p[f"bn_var{i}"] + eps)        # (Cout,)
    sh = p[f"bn_beta{i}"] - p[f"bn_mean{i}"] * s
    # wstack[o, (kh*3+kw)*Cout + c] = s[o] * pw[o, c] * dw[c, kh, kw]
    wst = jnp.einsum("o,oc,chw->ohwc", s, p[f"pw_w{i}"], p[f"dw_w{i}"])
    fused[f"wstack{i}"] = wst.reshape(Cout, 9 * Cout)
    fused[f"bias{i}"] = (
        s * (p[f"pw_w{i}"] @ p[f"dw_b{i}"] + p[f"pw_b{i}"]) + sh
    ).reshape(Cout, 1)
  return fused


# ---------------------------------------------------------------------------
# Pure-JAX reference (unfused, NCHW) for correctness checking
# ---------------------------------------------------------------------------
def _conv_one_ref(y, dw_w, dw_b, pw_w, pw_b, gamma, beta, mean, var, eps=1e-5):
  C = y.shape[1]
  z = lax.conv_general_dilated(
      y, dw_w[:, None, :, :], window_strides=(1, 1),
      padding=((1, 1), (1, 1)),
      dimension_numbers=("NCHW", "OIHW", "NCHW"),
      feature_group_count=C)
  z = z + dw_b[None, :, None, None]
  z = jnp.einsum("nchw,oc->nohw", z, pw_w) + pw_b[None, :, None, None]
  s = gamma / jnp.sqrt(var + eps)
  z = z * s[None, :, None, None] + (beta - mean * s)[None, :, None, None]
  return jnp.maximum(z, 0.0)


def _recblock_ref(y, p, i):
  args = (p[f"dw_w{i}"], p[f"dw_b{i}"], p[f"pw_w{i}"], p[f"pw_b{i}"],
          p[f"bn_gamma{i}"], p[f"bn_beta{i}"], p[f"bn_mean{i}"], p[f"bn_var{i}"])
  y1 = _conv_one_ref(y, *args)
  y1 = _conv_one_ref(y + y1, *args)
  y1 = _conv_one_ref(y + y1, *args)
  return y1


def rrcnn_ref(x, p):
  x0 = jnp.einsum("nchw,oc->nohw", x, p["conv1x1_w"]) \
      + p["conv1x1_b"][None, :, None, None]
  r = _recblock_ref(x0, p, 1)
  r = _recblock_ref(r, p, 2)
  return x0 + r


# ---------------------------------------------------------------------------
# Deterministic parameters (PyTorch-equivalent layout, eval-mode BN stats)
# ---------------------------------------------------------------------------
def make_params(key, Cin, Cout):
  ks = iter(jax.random.split(key, 24))

  def rnd(shape, scale=0.3):
    return jax.random.normal(next(ks), shape, jnp.float32) * scale

  p = {"conv1x1_w": rnd((Cout, Cin)), "conv1x1_b": rnd((Cout,))}
  for i in (1, 2):
    p[f"dw_w{i}"] = rnd((Cout, 3, 3))         # depthwise (groups=C) 3x3
    p[f"dw_b{i}"] = rnd((Cout,))
    p[f"pw_w{i}"] = rnd((Cout, Cout))         # pointwise 1x1
    p[f"pw_b{i}"] = rnd((Cout,))
    p[f"bn_gamma{i}"] = 1.0 + rnd((Cout,), 0.1)
    p[f"bn_beta{i}"] = rnd((Cout,), 0.1)
    p[f"bn_mean{i}"] = rnd((Cout,), 0.1)
    p[f"bn_var{i}"] = jnp.abs(rnd((Cout,), 0.1)) + 0.5
  return p


if __name__ == "__main__":
  key = jax.random.PRNGKey(0)
  N, Cin, Cout, H, W = 2, 4, 8, 16, 16

  kx, kp = jax.random.split(key)
  x = jax.random.normal(kx, (N, Cin, H, W), jnp.float32)   # NCHW like PyTorch
  params = make_params(kp, Cin, Cout)
  fused = fuse_params(params)
  ref = rrcnn_ref(x, params)

  # Exact-path validation: f32 MXU operands, whole batch in one grid step
  # (single-TC v5e/v6e configuration).
  out_f32 = rrcnn_block(x, fused, mxu_dtype=jnp.float32, images_per_step=2)
  out_f32 = jax.block_until_ready(out_f32)
  assert out_f32.shape == (N, Cout, H, W), out_f32.shape
  err32 = float(jnp.max(jnp.abs(out_f32 - ref)))
  assert jnp.allclose(out_f32, ref, rtol=1e-3, atol=1e-3), f"f32 |err|={err32}"

  # Default path: bf16 MXU operands (f32 accumulation), >=2 grid steps (v7x).
  out_bf = jax.block_until_ready(rrcnn_block(x, fused))
  rel = float(jnp.max(jnp.abs(out_bf - ref)) /
              jnp.maximum(1.0, jnp.max(jnp.abs(ref))))
  assert out_bf.shape == (N, Cout, H, W), out_bf.shape
  assert rel < 0.1, f"bf16 normalized err = {rel}"

  print("KERNEL_OK")
</pallas_src>

<mosaic_0001>
module attributes {stable_mosaic.version = 11 : i64} {
  func.func @rrcnn_kernel(%arg0: i32, %arg1: memref<1x4x648xf32, #tpu.memory_space<vmem>>, %arg2: memref<1x648xf32, #tpu.memory_space<vmem>>, %arg3: memref<8x4xf32, #tpu.memory_space<vmem>>, %arg4: memref<8x1xf32, #tpu.memory_space<vmem>>, %arg5: memref<8x72xf32, #tpu.memory_space<vmem>>, %arg6: memref<8x1xf32, #tpu.memory_space<vmem>>, %arg7: memref<8x72xf32, #tpu.memory_space<vmem>>, %arg8: memref<8x1xf32, #tpu.memory_space<vmem>>, %arg9: memref<1x8x648xf32, #tpu.memory_space<vmem>>, %arg10: memref<8x904xf32, #tpu.memory_space<vmem>>, %arg11: memref<72x648xf32, #tpu.memory_space<vmem>>) attributes {dimension_semantics = [#tpu.dimension_semantics<parallel>], iteration_bounds = array<i64: 1>, scalar_prefetch = 0 : i64, scratch_operands = 2 : i64, tpu.core_type = #tpu.core_type<tc>, window_params = [{transform_indices = @transform_0, window_bounds = array<i64: 1, 4, 648>}, {pipeline_mode = #tpu.pipeline_mode<synchronous>, transform_indices = @transform_1, window_bounds = array<i64: 1, 648>}, {pipeline_mode = #tpu.pipeline_mode<synchronous>, transform_indices = @transform_2, window_bounds = array<i64: 8, 4>}, {pipeline_mode = #tpu.pipeline_mode<synchronous>, transform_indices = @transform_3, window_bounds = array<i64: 8, 1>}, {pipeline_mode = #tpu.pipeline_mode<synchronous>, transform_indices = @transform_4, window_bounds = array<i64: 8, 72>}, {pipeline_mode = #tpu.pipeline_mode<synchronous>, transform_indices = @transform_5, window_bounds = array<i64: 8, 1>}, {pipeline_mode = #tpu.pipeline_mode<synchronous>, transform_indices = @transform_6, window_bounds = array<i64: 8, 72>}, {pipeline_mode = #tpu.pipeline_mode<synchronous>, transform_indices = @transform_7, window_bounds = array<i64: 8, 1>}, {transform_indices = @transform_8, window_bounds = array<i64: 1, 8, 648>}]} {
    %cst = arith.constant 0.000000e+00 : f32
    %0 = vector.broadcast %cst : f32 to vector<8x128xf32>
    %c0 = arith.constant 0 : index
    %c0_0 = arith.constant 0 : index
    %1 = vector.load %arg10[%c0, %c0_0] : memref<8x904xf32, #tpu.memory_space<vmem>>, vector<8x128xf32>
    tpu.vector_store %arg10[%c0, %c0_0], %0 {strides = array<i32>} : memref<8x904xf32, #tpu.memory_space<vmem>>, vector<8x128xf32>,
    %cst_1 = arith.constant 0.000000e+00 : f32
    %2 = vector.broadcast %cst_1 : f32 to vector<8x128xf32>
    %c0_2 = arith.constant 0 : index
    %c776 = arith.constant 776 : index
    %3 = vector.load %arg10[%c0_2, %c776] : memref<8x904xf32, #tpu.memory_space<vmem>>, vector<8x128xf32>
    tpu.vector_store %arg10[%c0_2, %c776], %2 {strides = array<i32>} : memref<8x904xf32, #tpu.memory_space<vmem>>, vector<8x128xf32>,
    %c0_3 = arith.constant 0 : index
    %c0_4 = arith.constant 0 : index
    %4 = vector.load %arg2[%c0_3, %c0_4] : memref<1x648xf32, #tpu.memory_space<vmem>>, vector<1x648xf32>
    %c0_5 = arith.constant 0 : index
    %c0_6 = arith.constant 0 : index
    %5 = vector.load %arg3[%c0_5, %c0_6] : memref<8x4xf32, #tpu.memory_space<vmem>>, vector<8x4xf32>
    %c0_7 = arith.constant 0 : index
    %c0_8 = arith.constant 0 : index
    %c0_9 = arith.constant 0 : index
    %6 = vector.load %arg1[%c0_7, %c0_8, %c0_9] : memref<1x4x648xf32, #tpu.memory_space<vmem>>, vector<1x4x648xf32>
    %7 = vector.shape_cast %6 : vector<1x4x648xf32> to vector<4x648xf32>
    %cst_10 = arith.constant dense<0.000000e+00> : vector<8x648xf32>
    %8 = tpu.matmul %5, %7, %cst_10 {dimension_numbers = #tpu.dot_dimension_numbers<[1], [0], [0], [1], [0, 0, 1, 1], [], []>} : vector<8x4xf32>, vector<4x648xf32>, vector<8x648xf32> -> vector<8x648xf32>
    %c0_11 = arith.constant 0 : index
    %c0_12 = arith.constant 0 : index
    %9 = vector.load %arg4[%c0_11, %c0_12] : memref<8x1xf32, #tpu.memory_space<vmem>>, vector<8x1xf32>
    %10 = vector.broadcast %9 : vector<8x1xf32> to vector<8x648xf32>
    %11 = arith.addf %8, %10 : vector<8x648xf32>
    %12 = vector.broadcast %4 : vector<1x648xf32> to vector<8x648xf32>
    %13 = arith.mulf %11, %12 : vector<8x648xf32>
    %c0_13 = arith.constant 0 : index
    %c0_14 = arith.constant 0 : index
    %14 = vector.load %arg5[%c0_13, %c0_14] : memref<8x72xf32, #tpu.memory_space<vmem>>, vector<8x72xf32>
    %c0_15 = arith.constant 0 : index
    %c0_16 = arith.constant 0 : index
    %15 = vector.load %arg6[%c0_15, %c0_16] : memref<8x1xf32, #tpu.memory_space<vmem>>, vector<8x1xf32>
    %c0_17 = arith.constant 0 : index
    %c128 = arith.constant 128 : index
    %16 = vector.load %arg10[%c0_17, %c128] : memref<8x904xf32, #tpu.memory_space<vmem>>, vector<8x648xf32>
    tpu.vector_store %arg10[%c0_17, %c128], %13 {strides = array<i32>} : memref<8x904xf32, #tpu.memory_space<vmem>>, vector<8x648xf32>,
    %c0_18 = arith.constant 0 : index
    %c109 = arith.constant 109 : index
    %17 = vector.load %arg10[%c0_18, %c109] : memref<8x904xf32, #tpu.memory_space<vmem>>, vector<8x648xf32>
    %c0_19 = arith.constant 0 : index
    %c0_20 = arith.constant 0 : index
    %18 = vector.load %arg11[%c0_19, %c0_20] : memref<72x648xf32, #tpu.memory_space<vmem>>, vector<8x648xf32>
    tpu.vector_store %arg11[%c0_19, %c0_20], %17 {strides = array<i32>} : memref<72x648xf32, #tpu.memory_space<vmem>>, vector<8x648xf32>,
    %c0_21 = arith.constant 0 : index
    %c110 = arith.constant 110 : index
    %19 = vector.load %arg10[%c0_21, %c110] : memref<8x904xf32, #tpu.memory_space<vmem>>, vector<8x648xf32>
    %c8 = arith.constant 8 : index
    %c0_22 = arith.constant 0 : index
    %20 = vector.load %arg11[%c8, %c0_22] : memref<72x648xf32, #tpu.memory_space<vmem>>, vector<8x648xf32>
    tpu.vector_store %arg11[%c8, %c0_22], %19 {strides = array<i32>} : memref<72x648xf32, #tpu.memory_space<vmem>>, vector<8x648xf32>,
    %c0_23 = arith.constant 0 : index
    %c111 = arith.constant 111 : index
    %21 = vector.load %arg10[%c0_23, %c111] : memref<8x904xf32, #tpu.memory_space<vmem>>, vector<8x648xf32>
    %c16 = arith.constant 16 : index
    %c0_24 = arith.constant 0 : index
    %22 = vector.load %arg11[%c16, %c0_24] : memref<72x648xf32, #tpu.memory_space<vmem>>, vector<8x648xf32>
    tpu.vector_store %arg11[%c16, %c0_24], %21 {strides = array<i32>} : memref<72x648xf32, #tpu.memory_space<vmem>>, vector<8x648xf32>,
    %c0_25 = arith.constant 0 : index
    %c127 = arith.constant 127 : index
    %23 = vector.load %arg10[%c0_25, %c127] : memref<8x904xf32, #tpu.memory_space<vmem>>, vector<8x648xf32>
    %c24 = arith.constant 24 : index
    %c0_26 = arith.constant 0 : index
    %24 = vector.load %arg11[%c24, %c0_26] : memref<72x648xf32, #tpu.memory_space<vmem>>, vector<8x648xf32>
    tpu.vector_store %arg11[%c24, %c0_26], %23 {strides = array<i32>} : memref<72x648xf32, #tpu.memory_space<vmem>>, vector<8x648xf32>,
    %c32 = arith.constant 32 : index
    %c0_27 = arith.constant 0 : index
    %25 = vector.load %arg11[%c32, %c0_27] : memref<72x648xf32, #tpu.memory_space<vmem>>, vector<8x648xf32>
    tpu.vector_store %arg11[%c32, %c0_27], %13 {strides = array<i32>} : memref<72x648xf32, #tpu.memory_space<vmem>>, vector<8x648xf32>,
    %c0_28 = arith.constant 0 : index
    %c129 = arith.constant 129 : index
    %26 = vector.load %arg10[%c0_28, %c129] : memref<8x904xf32, #tpu.memory_space<vmem>>, vector<8x648xf32>
    %c40 = arith.constant 40 : index
    %c0_29 = arith.constant 0 : index
    %27 = vector.load %arg11[%c40, %c0_29] : memref<72x648xf32, #tpu.memory_space<vmem>>, vector<8x648xf32>
    tpu.vector_store %arg11[%c40, %c0_29], %26 {strides = array<i32>} : memref<72x648xf32, #tpu.memory_space<vmem>>, vector<8x648xf32>,
    %c0_30 = arith.constant 0 : index
    %c145 = arith.constant 145 : index
    %28 = vector.load %arg10[%c0_30, %c145] : memref<8x904xf32, #tpu.memory_space<vmem>>, vector<8x648xf32>
    %c48 = arith.constant 48 : index
    %c0_31 = arith.constant 0 : index
    %29 = vector.load %arg11[%c48, %c0_31] : memref<72x648xf32, #tpu.memory_space<vmem>>, vector<8x648xf32>
    tpu.vector_store %arg11[%c48, %c0_31], %28 {strides = array<i32>} : memref<72x648xf32, #tpu.memory_space<vmem>>, vector<8x648xf32>,
    %c0_32 = arith.constant 0 : index
    %c146 = arith.constant 146 : index
    %30 = vector.load %arg10[%c0_32, %c146] : memref<8x904xf32, #tpu.memory_space<vmem>>, vector<8x648xf32>
    %c56 = arith.constant 56 : index
    %c0_33 = arith.constant 0 : index
    %31 = vector.load %arg11[%c56, %c0_33] : memref<72x648xf32, #tpu.memory_space<vmem>>, vector<8x648xf32>
    tpu.vector_store %arg11[%c56, %c0_33], %30 {strides = array<i32>} : memref<72x648xf32, #tpu.memory_space<vmem>>, vector<8x648xf32>,
    %c0_34 = arith.constant 0 : index
    %c147 = arith.constant 147 : index
    %32 = vector.load %arg10[%c0_34, %c147] : memref<8x904xf32, #tpu.memory_space<vmem>>, vector<8x648xf32>
    %c64 = arith.constant 64 : index
    %c0_35 = arith.constant 0 : index
    %33 = vector.load %arg11[%c64, %c0_35] : memref<72x648xf32, #tpu.memory_space<vmem>>, vector<8x648xf32>
    tpu.vector_store %arg11[%c64, %c0_35], %32 {strides = array<i32>} : memref<72x648xf32, #tpu.memory_space<vmem>>, vector<8x648xf32>,
    %c0_36 = arith.constant 0 : index
    %c0_37 = arith.constant 0 : index
    %34 = vector.load %arg11[%c0_36, %c0_37] : memref<72x648xf32, #tpu.memory_space<vmem>>, vector<72x648xf32>
    %cst_38 = arith.constant dense<0.000000e+00> : vector<8x648xf32>
    %35 = tpu.matmul %14, %34, %cst_38 {dimension_numbers = #tpu.dot_dimension_numbers<[1], [0], [0], [1], [0, 0, 1, 1], [], []>} : vector<8x72xf32>, vector<72x648xf32>, vector<8x648xf32> -> vector<8x648xf32>
    %36 = vector.broadcast %15 : vector<8x1xf32> to vector<8x648xf32>
    %37 = arith.addf %35, %36 : vector<8x648xf32>
    %cst_39 = arith.constant 0.000000e+00 : f32
    %38 = vector.broadcast %cst_39 : f32 to vector<8x648xf32>
    %39 = arith.maximumf %37, %38 : vector<8x648xf32>
    %40 = vector.broadcast %4 : vector<1x648xf32> to vector<8x648xf32>
    %41 = arith.mulf %39, %40 : vector<8x648xf32>
    %42 = arith.addf %13, %41 : vector<8x648xf32>
    %c0_40 = arith.constant 0 : index
    %c128_41 = arith.constant 128 : index
    %43 = vector.load %arg10[%c0_40, %c128_41] : memref<8x904xf32, #tpu.memory_space<vmem>>, vector<8x648xf32>
    tpu.vector_store %arg10[%c0_40, %c128_41], %42 {strides = array<i32>} : memref<8x904xf32, #tpu.memory_space<vmem>>, vector<8x648xf32>,
    %c0_42 = arith.constant 0 : index
    %c109_43 = arith.constant 109 : index
    %44 = vector.load %arg10[%c0_42, %c109_43] : memref<8x904xf32, #tpu.memory_space<vmem>>, vector<8x648xf32>
    %c0_44 = arith.constant 0 : index
    %c0_45 = arith.constant 0 : index
    %45 = vector.load %arg11[%c0_44, %c0_45] : memref<72x648xf32, #tpu.memory_space<vmem>>, vector<8x648xf32>
    tpu.vector_store %arg11[%c0_44, %c0_45], %44 {strides = array<i32>} : memref<72x648xf32, #tpu.memory_space<vmem>>, vector<8x648xf32>,
    %c0_46 = arith.constant 0 : index
    %c110_47 = arith.constant 110 : index
    %46 = vector.load %arg10[%c0_46, %c110_47] : memref<8x904xf32, #tpu.memory_space<vmem>>, vector<8x648xf32>
    %c8_48 = arith.constant 8 : index
    %c0_49 = arith.constant 0 : index
    %47 = vector.load %arg11[%c8_48, %c0_49] : memref<72x648xf32, #tpu.memory_space<vmem>>, vector<8x648xf32>
    tpu.vector_store %arg11[%c8_48, %c0_49], %46 {strides = array<i32>} : memref<72x648xf32, #tpu.memory_space<vmem>>, vector<8x648xf32>,
    %c0_50 = arith.constant 0 : index
    %c111_51 = arith.constant 111 : index
    %48 = vector.load %arg10[%c0_50, %c111_51] : memref<8x904xf32, #tpu.memory_space<vmem>>, vector<8x648xf32>
    %c16_52 = arith.constant 16 : index
    %c0_53 = arith.constant 0 : index
    %49 = vector.load %arg11[%c16_52, %c0_53] : memref<72x648xf32, #tpu.memory_space<vmem>>, vector<8x648xf32>
    tpu.vector_store %arg11[%c16_52, %c0_53], %48 {strides = array<i32>} : memref<72x648xf32, #tpu.memory_space<vmem>>, vector<8x648xf32>,
    %c0_54 = arith.constant 0 : index
    %c127_55 = arith.constant 127 : index
    %50 = vector.load %arg10[%c0_54, %c127_55] : memref<8x904xf32, #tpu.memory_space<vmem>>, vector<8x648xf32>
    %c24_56 = arith.constant 24 : index
    %c0_57 = arith.constant 0 : index
    %51 = vector.load %arg11[%c24_56, %c0_57] : memref<72x648xf32, #tpu.memory_space<vmem>>, vector<8x648xf32>
    tpu.vector_store %arg11[%c24_56, %c0_57], %50 {strides = array<i32>} : memref<72x648xf32, #tpu.memory_space<vmem>>, vector<8x648xf32>,
    %c32_58 = arith.constant 32 : index
    %c0_59 = arith.constant 0 : index
    %52 = vector.load %arg11[%c32_58, %c0_59] : memref<72x648xf32, #tpu.memory_space<vmem>>, vector<8x648xf32>
    tpu.vector_store %arg11[%c32_58, %c0_59], %42 {strides = array<i32>} : memref<72x648xf32, #tpu.memory_space<vmem>>, vector<8x648xf32>,
    %c0_60 = arith.constant 0 : index
    %c129_61 = arith.constant 129 : index
    %53 = vector.load %arg10[%c0_60, %c129_61] : memref<8x904xf32, #tpu.memory_space<vmem>>, vector<8x648xf32>
    %c40_62 = arith.constant 40 : index
    %c0_63 = arith.constant 0 : index
    %54 = vector.load %arg11[%c40_62, %c0_63] : memref<72x648xf32, #tpu.memory_space<vmem>>, vector<8x648xf32>
    tpu.vector_store %arg11[%c40_62, %c0_63], %53 {strides = array<i32>} : memref<72x648xf32, #tpu.memory_space<vmem>>, vector<8x648xf32>,
    %c0_64 = arith.constant 0 : index
    %c145_65 = arith.constant 145 : index
    %55 = vector.load %arg10[%c0_64, %c145_65] : memref<8x904xf32, #tpu.memory_space<vmem>>, vector<8x648xf32>
    %c48_66 = arith.constant 48 : index
    %c0_67 = arith.constant 0 : index
    %56 = vector.load %arg11[%c48_66, %c0_67] : memref<72x648xf32, #tpu.memory_space<vmem>>, vector<8x648xf32>
    tpu.vector_store %arg11[%c48_66, %c0_67], %55 {strides = array<i32>} : memref<72x648xf32, #tpu.memory_space<vmem>>, vector<8x648xf32>,
    %c0_68 = arith.constant 0 : index
    %c146_69 = arith.constant 146 : index
    %57 = vector.load %arg10[%c0_68, %c146_69] : memref<8x904xf32, #tpu.memory_space<vmem>>, vector<8x648xf32>
    %c56_70 = arith.constant 56 : index
    %c0_71 = arith.constant 0 : index
    %58 = vector.load %arg11[%c56_70, %c0_71] : memref<72x648xf32, #tpu.memory_space<vmem>>, vector<8x648xf32>
    tpu.vector_store %arg11[%c56_70, %c0_71], %57 {strides = array<i32>} : memref<72x648xf32, #tpu.memory_space<vmem>>, vector<8x648xf32>,
    %c0_72 = arith.constant 0 : index
    %c147_73 = arith.constant 147 : index
    %59 = vector.load %arg10[%c0_72, %c147_73] : memref<8x904xf32, #tpu.memory_space<vmem>>, vector<8x648xf32>
    %c64_74 = arith.constant 64 : index
    %c0_75 = arith.constant 0 : index
    %60 = vector.load %arg11[%c64_74, %c0_75] : memref<72x648xf32, #tpu.memory_space<vmem>>, vector<8x648xf32>
    tpu.vector_store %arg11[%c64_74, %c0_75], %59 {strides = array<i32>} : memref<72x648xf32, #tpu.memory_space<vmem>>, vector<8x648xf32>,
    %c0_76 = arith.constant 0 : index
    %c0_77 = arith.constant 0 : index
    %61 = vector.load %arg11[%c0_76, %c0_77] : memref<72x648xf32, #tpu.memory_space<vmem>>, vector<72x648xf32>
    %cst_78 = arith.constant dense<0.000000e+00> : vector<8x648xf32>
    %62 = tpu.matmul %14, %61, %cst_78 {dimension_numbers = #tpu.dot_dimension_numbers<[1], [0], [0], [1], [0, 0, 1, 1], [], []>} : vector<8x72xf32>, vector<72x648xf32>, vector<8x648xf32> -> vector<8x648xf32>
    %63 = vector.broadcast %15 : vector<8x1xf32> to vector<8x648xf32>
    %64 = arith.addf %62, %63 : vector<8x648xf32>
    %cst_79 = arith.constant 0.000000e+00 : f32
    %65 = vector.broadcast %cst_79 : f32 to vector<8x648xf32>
    %66 = arith.maximumf %64, %65 : vector<8x648xf32>
    %67 = vector.broadcast %4 : vector<1x648xf32> to vector<8x648xf32>
    %68 = arith.mulf %66, %67 : vector<8x648xf32>
    %69 = arith.addf %13, %68 : vector<8x648xf32>
    %c0_80 = arith.constant 0 : index
    %c128_81 = arith.constant 128 : index
    %70 = vector.load %arg10[%c0_80, %c128_81] : memref<8x904xf32, #tpu.memory_space<vmem>>, vector<8x648xf32>
    tpu.vector_store %arg10[%c0_80, %c128_81], %69 {strides = array<i32>} : memref<8x904xf32, #tpu.memory_space<vmem>>, vector<8x648xf32>,
    %c0_82 = arith.constant 0 : index
    %c109_83 = arith.constant 109 : index
    %71 = vector.load %arg10[%c0_82, %c109_83] : memref<8x904xf32, #tpu.memory_space<vmem>>, vector<8x648xf32>
    %c0_84 = arith.constant 0 : index
    %c0_85 = arith.constant 0 : index
    %72 = vector.load %arg11[%c0_84, %c0_85] : memref<72x648xf32, #tpu.memory_space<vmem>>, vector<8x648xf32>
    tpu.vector_store %arg11[%c0_84, %c0_85], %71 {strides = array<i32>} : memref<72x648xf32, #tpu.memory_space<vmem>>, vector<8x648xf32>,
    %c0_86 = arith.constant 0 : index
    %c110_87 = arith.constant 110 : index
    %73 = vector.load %arg10[%c0_86, %c110_87] : memref<8x904xf32, #tpu.memory_space<vmem>>, vector<8x648xf32>
    %c8_88 = arith.constant 8 : index
    %c0_89 = arith.constant 0 : index
    %74 = vector.load %arg11[%c8_88, %c0_89] : memref<72x648xf32, #tpu.memory_space<vmem>>, vector<8x648xf32>
    tpu.vector_store %arg11[%c8_88, %c0_89], %73 {strides = array<i32>} : memref<72x648xf32, #tpu.memory_space<vmem>>, vector<8x648xf32>,
    %c0_90 = arith.constant 0 : index
    %c111_91 = arith.constant 111 : index
    %75 = vector.load %arg10[%c0_90, %c111_91] : memref<8x904xf32, #tpu.memory_space<vmem>>, vector<8x648xf32>
    %c16_92 = arith.constant 16 : index
    %c0_93 = arith.constant 0 : index
    %76 = vector.load %arg11[%c16_92, %c0_93] : memref<72x648xf32, #tpu.memory_space<vmem>>, vector<8x648xf32>
    tpu.vector_store %arg11[%c16_92, %c0_93], %75 {strides = array<i32>} : memref<72x648xf32, #tpu.memory_space<vmem>>, vector<8x648xf32>,
    %c0_94 = arith.constant 0 : index
    %c127_95 = arith.constant 127 : index
    %77 = vector.load %arg10[%c0_94, %c127_95] : memref<8x904xf32, #tpu.memory_space<vmem>>, vector<8x648xf32>
    %c24_96 = arith.constant 24 : index
    %c0_97 = arith.constant 0 : index
    %78 = vector.load %arg11[%c24_96, %c0_97] : memref<72x648xf32, #tpu.memory_space<vmem>>, vector<8x648xf32>
    tpu.vector_store %arg11[%c24_96, %c0_97], %77 {strides = array<i32>} : memref<72x648xf32, #tpu.memory_space<vmem>>, vector<8x648xf32>,
    %c32_98 = arith.constant 32 : index
    %c0_99 = arith.constant 0 : index
    %79 = vector.load %arg11[%c32_98, %c0_99] : memref<72x648xf32, #tpu.memory_space<vmem>>, vector<8x648xf32>
    tpu.vector_store %arg11[%c32_98, %c0_99], %69 {strides = array<i32>} : memref<72x648xf32, #tpu.memory_space<vmem>>, vector<8x648xf32>,
    %c0_100 = arith.constant 0 : index
    %c129_101 = arith.constant 129 : index
    %80 = vector.load %arg10[%c0_100, %c129_101] : memref<8x904xf32, #tpu.memory_space<vmem>>, vector<8x648xf32>
    %c40_102 = arith.constant 40 : index
    %c0_103 = arith.constant 0 : index
    %81 = vector.load %arg11[%c40_102, %c0_103] : memref<72x648xf32, #tpu.memory_space<vmem>>, vector<8x648xf32>
    tpu.vector_store %arg11[%c40_102, %c0_103], %80 {strides = array<i32>} : memref<72x648xf32, #tpu.memory_space<vmem>>, vector<8x648xf32>,
    %c0_104 = arith.constant 0 : index
    %c145_105 = arith.constant 145 : index
    %82 = vector.load %arg10[%c0_104, %c145_105] : memref<8x904xf32, #tpu.memory_space<vmem>>, vector<8x648xf32>
    %c48_106 = arith.constant 48 : index
    %c0_107 = arith.constant 0 : index
    %83 = vector.load %arg11[%c48_106, %c0_107] : memref<72x648xf32, #tpu.memory_space<vmem>>, vector<8x648xf32>
    tpu.vector_store %arg11[%c48_106, %c0_107], %82 {strides = array<i32>} : memref<72x648xf32, #tpu.memory_space<vmem>>, vector<8x648xf32>,
    %c0_108 = arith.constant 0 : index
    %c146_109 = arith.constant 146 : index
    %84 = vector.load %arg10[%c0_108, %c146_109] : memref<8x904xf32, #tpu.memory_space<vmem>>, vector<8x648xf32>
    %c56_110 = arith.constant 56 : index
    %c0_111 = arith.constant 0 : index
    %85 = vector.load %arg11[%c56_110, %c0_111] : memref<72x648xf32, #tpu.memory_space<vmem>>, vector<8x648xf32>
    tpu.vector_store %arg11[%c56_110, %c0_111], %84 {strides = array<i32>} : memref<72x648xf32, #tpu.memory_space<vmem>>, vector<8x648xf32>,
    %c0_112 = arith.constant 0 : index
    %c147_113 = arith.constant 147 : index
    %86 = vector.load %arg10[%c0_112, %c147_113] : memref<8x904xf32, #tpu.memory_space<vmem>>, vector<8x648xf32>
    %c64_114 = arith.constant 64 : index
    %c0_115 = arith.constant 0 : index
    %87 = vector.load %arg11[%c64_114, %c0_115] : memref<72x648xf32, #tpu.memory_space<vmem>>, vector<8x648xf32>
    tpu.vector_store %arg11[%c64_114, %c0_115], %86 {strides = array<i32>} : memref<72x648xf32, #tpu.memory_space<vmem>>, vector<8x648xf32>,
    %c0_116 = arith.constant 0 : index
    %c0_117 = arith.constant 0 : index
    %88 = vector.load %arg11[%c0_116, %c0_117] : memref<72x648xf32, #tpu.memory_space<vmem>>, vector<72x648xf32>
    %cst_118 = arith.constant dense<0.000000e+00> : vector<8x648xf32>
    %89 = tpu.matmul %14, %88, %cst_118 {dimension_numbers = #tpu.dot_dimension_numbers<[1], [0], [0], [1], [0, 0, 1, 1], [], []>} : vector<8x72xf32>, vector<72x648xf32>, vector<8x648xf32> -> vector<8x648xf32>
    %90 = vector.broadcast %15 : vector<8x1xf32> to vector<8x648xf32>
    %91 = arith.addf %89, %90 : vector<8x648xf32>
    %cst_119 = arith.constant 0.000000e+00 : f32
    %92 = vector.broadcast %cst_119 : f32 to vector<8x648xf32>
    %93 = arith.maximumf %91, %92 : vector<8x648xf32>
    %94 = vector.broadcast %4 : vector<1x648xf32> to vector<8x648xf32>
    %95 = arith.mulf %93, %94 : vector<8x648xf32>
    %c0_120 = arith.constant 0 : index
    %c0_121 = arith.constant 0 : index
    %96 = vector.load %arg7[%c0_120, %c0_121] : memref<8x72xf32, #tpu.memory_space<vmem>>, vector<8x72xf32>
    %c0_122 = arith.constant 0 : index
    %c0_123 = arith.constant 0 : index
    %97 = vector.load %arg8[%c0_122, %c0_123] : memref<8x1xf32, #tpu.memory_space<vmem>>, vector<8x1xf32>
    %c0_124 = arith.constant 0 : index
    %c128_125 = arith.constant 128 : index
    %98 = vector.load %arg10[%c0_124, %c128_125] : memref<8x904xf32, #tpu.memory_space<vmem>>, vector<8x648xf32>
    tpu.vector_store %arg10[%c0_124, %c128_125], %95 {strides = array<i32>} : memref<8x904xf32, #tpu.memory_space<vmem>>, vector<8x648xf32>,
    %c0_126 = arith.constant 0 : index
    %c109_127 = arith.constant 109 : index
    %99 = vector.load %arg10[%c0_126, %c109_127] : memref<8x904xf32, #tpu.memory_space<vmem>>, vector<8x648xf32>
    %c0_128 = arith.constant 0 : index
    %c0_129 = arith.constant 0 : index
    %100 = vector.load %arg11[%c0_128, %c0_129] : memref<72x648xf32, #tpu.memory_space<vmem>>, vector<8x648xf32>
    tpu.vector_store %arg11[%c0_128, %c0_129], %99 {strides = array<i32>} : memref<72x648xf32, #tpu.memory_space<vmem>>, vector<8x648xf32>,
    %c0_130 = arith.constant 0 : index
    %c110_131 = arith.constant 110 : index
    %101 = vector.load %arg10[%c0_130, %c110_131] : memref<8x904xf32, #tpu.memory_space<vmem>>, vector<8x648xf32>
    %c8_132 = arith.constant 8 : index
    %c0_133 = arith.constant 0 : index
    %102 = vector.load %arg11[%c8_132, %c0_133] : memref<72x648xf32, #tpu.memory_space<vmem>>, vector<8x648xf32>
    tpu.vector_store %arg11[%c8_132, %c0_133], %101 {strides = array<i32>} : memref<72x648xf32, #tpu.memory_space<vmem>>, vector<8x648xf32>,
    %c0_134 = arith.constant 0 : index
    %c111_135 = arith.constant 111 : index
    %103 = vector.load %arg10[%c0_134, %c111_135] : memref<8x904xf32, #tpu.memory_space<vmem>>, vector<8x648xf32>
    %c16_136 = arith.constant 16 : index
    %c0_137 = arith.constant 0 : index
    %104 = vector.load %arg11[%c16_136, %c0_137] : memref<72x648xf32, #tpu.memory_space<vmem>>, vector<8x648xf32>
    tpu.vector_store %arg11[%c16_136, %c0_137], %103 {strides = array<i32>} : memref<72x648xf32, #tpu.memory_space<vmem>>, vector<8x648xf32>,
    %c0_138 = arith.constant 0 : index
    %c127_139 = arith.constant 127 : index
    %105 = vector.load %arg10[%c0_138, %c127_139] : memref<8x904xf32, #tpu.memory_space<vmem>>, vector<8x648xf32>
    %c24_140 = arith.constant 24 : index
    %c0_141 = arith.constant 0 : index
    %106 = vector.load %arg11[%c24_140, %c0_141] : memref<72x648xf32, #tpu.memory_space<vmem>>, vector<8x648xf32>
    tpu.vector_store %arg11[%c24_140, %c0_141], %105 {strides = array<i32>} : memref<72x648xf32, #tpu.memory_space<vmem>>, vector<8x648xf32>,
    %c32_142 = arith.constant 32 : index
    %c0_143 = arith.constant 0 : index
    %107 = vector.load %arg11[%c32_142, %c0_143] : memref<72x648xf32, #tpu.memory_space<vmem>>, vector<8x648xf32>
    tpu.vector_store %arg11[%c32_142, %c0_143], %95 {strides = array<i32>} : memref<72x648xf32, #tpu.memory_space<vmem>>, vector<8x648xf32>,
    %c0_144 = arith.constant 0 : index
    %c129_145 = arith.constant 129 : index
    %108 = vector.load %arg10[%c0_144, %c129_145] : memref<8x904xf32, #tpu.memory_space<vmem>>, vector<8x648xf32>
    %c40_146 = arith.constant 40 : index
    %c0_147 = arith.constant 0 : index
    %109 = vector.load %arg11[%c40_146, %c0_147] : memref<72x648xf32, #tpu.memory_space<vmem>>, vector<8x648xf32>
    tpu.vector_store %arg11[%c40_146, %c0_147], %108 {strides = array<i32>} : memref<72x648xf32, #tpu.memory_space<vmem>>, vector<8x648xf32>,
    %c0_148 = arith.constant 0 : index
    %c145_149 = arith.constant 145 : index
    %110 = vector.load %arg10[%c0_148, %c145_149] : memref<8x904xf32, #tpu.memory_space<vmem>>, vector<8x648xf32>
    %c48_150 = arith.constant 48 : index
    %c0_151 = arith.constant 0 : index
    %111 = vector.load %arg11[%c48_150, %c0_151] : memref<72x648xf32, #tpu.memory_space<vmem>>, vector<8x648xf32>
    tpu.vector_store %arg11[%c48_150, %c0_151], %110 {strides = array<i32>} : memref<72x648xf32, #tpu.memory_space<vmem>>, vector<8x648xf32>,
    %c0_152 = arith.constant 0 : index
    %c146_153 = arith.constant 146 : index
    %112 = vector.load %arg10[%c0_152, %c146_153] : memref<8x904xf32, #tpu.memory_space<vmem>>, vector<8x648xf32>
    %c56_154 = arith.constant 56 : index
    %c0_155 = arith.constant 0 : index
    %113 = vector.load %arg11[%c56_154, %c0_155] : memref<72x648xf32, #tpu.memory_space<vmem>>, vector<8x648xf32>
    tpu.vector_store %arg11[%c56_154, %c0_155], %112 {strides = array<i32>} : memref<72x648xf32, #tpu.memory_space<vmem>>, vector<8x648xf32>,
    %c0_156 = arith.constant 0 : index
    %c147_157 = arith.constant 147 : index
    %114 = vector.load %arg10[%c0_156, %c147_157] : memref<8x904xf32, #tpu.memory_space<vmem>>, vector<8x648xf32>
    %c64_158 = arith.constant 64 : index
    %c0_159 = arith.constant 0 : index
    %115 = vector.load %arg11[%c64_158, %c0_159] : memref<72x648xf32, #tpu.memory_space<vmem>>, vector<8x648xf32>
    tpu.vector_store %arg11[%c64_158, %c0_159], %114 {strides = array<i32>} : memref<72x648xf32, #tpu.memory_space<vmem>>, vector<8x648xf32>,
    %c0_160 = arith.constant 0 : index
    %c0_161 = arith.constant 0 : index
    %116 = vector.load %arg11[%c0_160, %c0_161] : memref<72x648xf32, #tpu.memory_space<vmem>>, vector<72x648xf32>
    %cst_162 = arith.constant dense<0.000000e+00> : vector<8x648xf32>
    %117 = tpu.matmul %96, %116, %cst_162 {dimension_numbers = #tpu.dot_dimension_numbers<[1], [0], [0], [1], [0, 0, 1, 1], [], []>} : vector<8x72xf32>, vector<72x648xf32>, vector<8x648xf32> -> vector<8x648xf32>
    %118 = vector.broadcast %97 : vector<8x1xf32> to vector<8x648xf32>
    %119 = arith.addf %117, %118 : vector<8x648xf32>
    %cst_163 = arith.constant 0.000000e+00 : f32
    %120 = vector.broadcast %cst_163 : f32 to vector<8x648xf32>
    %121 = arith.maximumf %119, %120 : vector<8x648xf32>
    %122 = vector.broadcast %4 : vector<1x648xf32> to vector<8x648xf32>
    %123 = arith.mulf %121, %122 : vector<8x648xf32>
    %124 = arith.addf %95, %123 : vector<8x648xf32>
    %c0_164 = arith.constant 0 : index
    %c128_165 = arith.constant 128 : index
    %125 = vector.load %arg10[%c0_164, %c128_165] : memref<8x904xf32, #tpu.memory_space<vmem>>, vector<8x648xf32>
    tpu.vector_store %arg10[%c0_164, %c128_165], %124 {strides = array<i32>} : memref<8x904xf32, #tpu.memory_space<vmem>>, vector<8x648xf32>,
    %c0_166 = arith.constant 0 : index
    %c109_167 = arith.constant 109 : index
    %126 = vector.load %arg10[%c0_166, %c109_167] : memref<8x904xf32, #tpu.memory_space<vmem>>, vector<8x648xf32>
    %c0_168 = arith.constant 0 : index
    %c0_169 = arith.constant 0 : index
    %127 = vector.load %arg11[%c0_168, %c0_169] : memref<72x648xf32, #tpu.memory_space<vmem>>, vector<8x648xf32>
    tpu.vector_store %arg11[%c0_168, %c0_169], %126 {strides = array<i32>} : memref<72x648xf32, #tpu.memory_space<vmem>>, vector<8x648xf32>,
    %c0_170 = arith.constant 0 : index
    %c110_171 = arith.constant 110 : index
    %128 = vector.load %arg10[%c0_170, %c110_171] : memref<8x904xf32, #tpu.memory_space<vmem>>, vector<8x648xf32>
    %c8_172 = arith.constant 8 : index
    %c0_173 = arith.constant 0 : index
    %129 = vector.load %arg11[%c8_172, %c0_173] : memref<72x648xf32, #tpu.memory_space<vmem>>, vector<8x648xf32>
    tpu.vector_store %arg11[%c8_172, %c0_173], %128 {strides = array<i32>} : memref<72x648xf32, #tpu.memory_space<vmem>>, vector<8x648xf32>,
    %c0_174 = arith.constant 0 : index
    %c111_175 = arith.constant 111 : index
    %130 = vector.load %arg10[%c0_174, %c111_175] : memref<8x904xf32, #tpu.memory_space<vmem>>, vector<8x648xf32>
    %c16_176 = arith.constant 16 : index
    %c0_177 = arith.constant 0 : index
    %131 = vector.load %arg11[%c16_176, %c0_177] : memref<72x648xf32, #tpu.memory_space<vmem>>, vector<8x648xf32>
    tpu.vector_store %arg11[%c16_176, %c0_177], %130 {strides = array<i32>} : memref<72x648xf32, #tpu.memory_space<vmem>>, vector<8x648xf32>,
    %c0_178 = arith.constant 0 : index
    %c127_179 = arith.constant 127 : index
    %132 = vector.load %arg10[%c0_178, %c127_179] : memref<8x904xf32, #tpu.memory_space<vmem>>, vector<8x648xf32>
    %c24_180 = arith.constant 24 : index
    %c0_181 = arith.constant 0 : index
    %133 = vector.load %arg11[%c24_180, %c0_181] : memref<72x648xf32, #tpu.memory_space<vmem>>, vector<8x648xf32>
    tpu.vector_store %arg11[%c24_180, %c0_181], %132 {strides = array<i32>} : memref<72x648xf32, #tpu.memory_space<vmem>>, vector<8x648xf32>,
    %c32_182 = arith.constant 32 : index
    %c0_183 = arith.constant 0 : index
    %134 = vector.load %arg11[%c32_182, %c0_183] : memref<72x648xf32, #tpu.memory_space<vmem>>, vector<8x648xf32>
    tpu.vector_store %arg11[%c32_182, %c0_183], %124 {strides = array<i32>} : memref<72x648xf32, #tpu.memory_space<vmem>>, vector<8x648xf32>,
    %c0_184 = arith.constant 0 : index
    %c129_185 = arith.constant 129 : index
    %135 = vector.load %arg10[%c0_184, %c129_185] : memref<8x904xf32, #tpu.memory_space<vmem>>, vector<8x648xf32>
    %c40_186 = arith.constant 40 : index
    %c0_187 = arith.constant 0 : index
    %136 = vector.load %arg11[%c40_186, %c0_187] : memref<72x648xf32, #tpu.memory_space<vmem>>, vector<8x648xf32>
    tpu.vector_store %arg11[%c40_186, %c0_187], %135 {strides = array<i32>} : memref<72x648xf32, #tpu.memory_space<vmem>>, vector<8x648xf32>,
    %c0_188 = arith.constant 0 : index
    %c145_189 = arith.constant 145 : index
    %137 = vector.load %arg10[%c0_188, %c145_189] : memref<8x904xf32, #tpu.memory_space<vmem>>, vector<8x648xf32>
    %c48_190 = arith.constant 48 : index
    %c0_191 = arith.constant 0 : index
    %138 = vector.load %arg11[%c48_190, %c0_191] : memref<72x648xf32, #tpu.memory_space<vmem>>, vector<8x648xf32>
    tpu.vector_store %arg11[%c48_190, %c0_191], %137 {strides = array<i32>} : memref<72x648xf32, #tpu.memory_space<vmem>>, vector<8x648xf32>,
    %c0_192 = arith.constant 0 : index
    %c146_193 = arith.constant 146 : index
    %139 = vector.load %arg10[%c0_192, %c146_193] : memref<8x904xf32, #tpu.memory_space<vmem>>, vector<8x648xf32>
    %c56_194 = arith.constant 56 : index
    %c0_195 = arith.constant 0 : index
    %140 = vector.load %arg11[%c56_194, %c0_195] : memref<72x648xf32, #tpu.memory_space<vmem>>, vector<8x648xf32>
    tpu.vector_store %arg11[%c56_194, %c0_195], %139 {strides = array<i32>} : memref<72x648xf32, #tpu.memory_space<vmem>>, vector<8x648xf32>,
    %c0_196 = arith.constant 0 : index
    %c147_197 = arith.constant 147 : index
    %141 = vector.load %arg10[%c0_196, %c147_197] : memref<8x904xf32, #tpu.memory_space<vmem>>, vector<8x648xf32>
    %c64_198 = arith.constant 64 : index
    %c0_199 = arith.constant 0 : index
    %142 = vector.load %arg11[%c64_198, %c0_199] : memref<72x648xf32, #tpu.memory_space<vmem>>, vector<8x648xf32>
    tpu.vector_store %arg11[%c64_198, %c0_199], %141 {strides = array<i32>} : memref<72x648xf32, #tpu.memory_space<vmem>>, vector<8x648xf32>,
    %c0_200 = arith.constant 0 : index
    %c0_201 = arith.constant 0 : index
    %143 = vector.load %arg11[%c0_200, %c0_201] : memref<72x648xf32, #tpu.memory_space<vmem>>, vector<72x648xf32>
    %cst_202 = arith.constant dense<0.000000e+00> : vector<8x648xf32>
    %144 = tpu.matmul %96, %143, %cst_202 {dimension_numbers = #tpu.dot_dimension_numbers<[1], [0], [0], [1], [0, 0, 1, 1], [], []>} : vector<8x72xf32>, vector<72x648xf32>, vector<8x648xf32> -> vector<8x648xf32>
    %145 = vector.broadcast %97 : vector<8x1xf32> to vector<8x648xf32>
    %146 = arith.addf %144, %145 : vector<8x648xf32>
    %cst_203 = arith.constant 0.000000e+00 : f32
    %147 = vector.broadcast %cst_203 : f32 to vector<8x648xf32>
    %148 = arith.maximumf %146, %147 : vector<8x648xf32>
    %149 = vector.broadcast %4 : vector<1x648xf32> to vector<8x648xf32>
    %150 = arith.mulf %148, %149 : vector<8x648xf32>
    %151 = arith.addf %95, %150 : vector<8x648xf32>
    %c0_204 = arith.constant 0 : index
    %c128_205 = arith.constant 128 : index
    %152 = vector.load %arg10[%c0_204, %c128_205] : memref<8x904xf32, #tpu.memory_space<vmem>>, vector<8x648xf32>
    tpu.vector_store %arg10[%c0_204, %c128_205], %151 {strides = array<i32>} : memref<8x904xf32, #tpu.memory_space<vmem>>, vector<8x648xf32>,
    %c0_206 = arith.constant 0 : index
    %c109_207 = arith.constant 109 : index
    %153 = vector.load %arg10[%c0_206, %c109_207] : memref<8x904xf32, #tpu.memory_space<vmem>>, vector<8x648xf32>
    %c0_208 = arith.constant 0 : index
    %c0_209 = arith.constant 0 : index
    %154 = vector.load %arg11[%c0_208, %c0_209] : memref<72x648xf32, #tpu.memory_space<vmem>>, vector<8x648xf32>
    tpu.vector_store %arg11[%c0_208, %c0_209], %153 {strides = array<i32>} : memref<72x648xf32, #tpu.memory_space<vmem>>, vector<8x648xf32>,
    %c0_210 = arith.constant 0 : index
    %c110_211 = arith.constant 110 : index
    %155 = vector.load %arg10[%c0_210, %c110_211] : memref<8x904xf32, #tpu.memory_space<vmem>>, vector<8x648xf32>
    %c8_212 = arith.constant 8 : index
    %c0_213 = arith.constant 0 : index
    %156 = vector.load %arg11[%c8_212, %c0_213] : memref<72x648xf32, #tpu.memory_space<vmem>>, vector<8x648xf32>
    tpu.vector_store %arg11[%c8_212, %c0_213], %155 {strides = array<i32>} : memref<72x648xf32, #tpu.memory_space<vmem>>, vector<8x648xf32>,
    %c0_214 = arith.constant 0 : index
    %c111_215 = arith.constant 111 : index
    %157 = vector.load %arg10[%c0_214, %c111_215] : memref<8x904xf32, #tpu.memory_space<vmem>>, vector<8x648xf32>
    %c16_216 = arith.constant 16 : index
    %c0_217 = arith.constant 0 : index
    %158 = vector.load %arg11[%c16_216, %c0_217] : memref<72x648xf32, #tpu.memory_space<vmem>>, vector<8x648xf32>
    tpu.vector_store %arg11[%c16_216, %c0_217], %157 {strides = array<i32>} : memref<72x648xf32, #tpu.memory_space<vmem>>, vector<8x648xf32>,
    %c0_218 = arith.constant 0 : index
    %c127_219 = arith.constant 127 : index
    %159 = vector.load %arg10[%c0_218, %c127_219] : memref<8x904xf32, #tpu.memory_space<vmem>>, vector<8x648xf32>
    %c24_220 = arith.constant 24 : index
    %c0_221 = arith.constant 0 : index
    %160 = vector.load %arg11[%c24_220, %c0_221] : memref<72x648xf32, #tpu.memory_space<vmem>>, vector<8x648xf32>
    tpu.vector_store %arg11[%c24_220, %c0_221], %159 {strides = array<i32>} : memref<72x648xf32, #tpu.memory_space<vmem>>, vector<8x648xf32>,
    %c32_222 = arith.constant 32 : index
    %c0_223 = arith.constant 0 : index
    %161 = vector.load %arg11[%c32_222, %c0_223] : memref<72x648xf32, #tpu.memory_space<vmem>>, vector<8x648xf32>
    tpu.vector_store %arg11[%c32_222, %c0_223], %151 {strides = array<i32>} : memref<72x648xf32, #tpu.memory_space<vmem>>, vector<8x648xf32>,
    %c0_224 = arith.constant 0 : index
    %c129_225 = arith.constant 129 : index
    %162 = vector.load %arg10[%c0_224, %c129_225] : memref<8x904xf32, #tpu.memory_space<vmem>>, vector<8x648xf32>
    %c40_226 = arith.constant 40 : index
    %c0_227 = arith.constant 0 : index
    %163 = vector.load %arg11[%c40_226, %c0_227] : memref<72x648xf32, #tpu.memory_space<vmem>>, vector<8x648xf32>
    tpu.vector_store %arg11[%c40_226, %c0_227], %162 {strides = array<i32>} : memref<72x648xf32, #tpu.memory_space<vmem>>, vector<8x648xf32>,
    %c0_228 = arith.constant 0 : index
    %c145_229 = arith.constant 145 : index
    %164 = vector.load %arg10[%c0_228, %c145_229] : memref<8x904xf32, #tpu.memory_space<vmem>>, vector<8x648xf32>
    %c48_230 = arith.constant 48 : index
    %c0_231 = arith.constant 0 : index
    %165 = vector.load %arg11[%c48_230, %c0_231] : memref<72x648xf32, #tpu.memory_space<vmem>>, vector<8x648xf32>
    tpu.vector_store %arg11[%c48_230, %c0_231], %164 {strides = array<i32>} : memref<72x648xf32, #tpu.memory_space<vmem>>, vector<8x648xf32>,
    %c0_232 = arith.constant 0 : index
    %c146_233 = arith.constant 146 : index
    %166 = vector.load %arg10[%c0_232, %c146_233] : memref<8x904xf32, #tpu.memory_space<vmem>>, vector<8x648xf32>
    %c56_234 = arith.constant 56 : index
    %c0_235 = arith.constant 0 : index
    %167 = vector.load %arg11[%c56_234, %c0_235] : memref<72x648xf32, #tpu.memory_space<vmem>>, vector<8x648xf32>
    tpu.vector_store %arg11[%c56_234, %c0_235], %166 {strides = array<i32>} : memref<72x648xf32, #tpu.memory_space<vmem>>, vector<8x648xf32>,
    %c0_236 = arith.constant 0 : index
    %c147_237 = arith.constant 147 : index
    %168 = vector.load %arg10[%c0_236, %c147_237] : memref<8x904xf32, #tpu.memory_space<vmem>>, vector<8x648xf32>
    %c64_238 = arith.constant 64 : index
    %c0_239 = arith.constant 0 : index
    %169 = vector.load %arg11[%c64_238, %c0_239] : memref<72x648xf32, #tpu.memory_space<vmem>>, vector<8x648xf32>
    tpu.vector_store %arg11[%c64_238, %c0_239], %168 {strides = array<i32>} : memref<72x648xf32, #tpu.memory_space<vmem>>, vector<8x648xf32>,
    %c0_240 = arith.constant 0 : index
    %c0_241 = arith.constant 0 : index
    %170 = vector.load %arg11[%c0_240, %c0_241] : memref<72x648xf32, #tpu.memory_space<vmem>>, vector<72x648xf32>
    %cst_242 = arith.constant dense<0.000000e+00> : vector<8x648xf32>
    %171 = tpu.matmul %96, %170, %cst_242 {dimension_numbers = #tpu.dot_dimension_numbers<[1], [0], [0], [1], [0, 0, 1, 1], [], []>} : vector<8x72xf32>, vector<72x648xf32>, vector<8x648xf32> -> vector<8x648xf32>
    %172 = vector.broadcast %97 : vector<8x1xf32> to vector<8x648xf32>
    %173 = arith.addf %171, %172 : vector<8x648xf32>
    %cst_243 = arith.constant 0.000000e+00 : f32
    %174 = vector.broadcast %cst_243 : f32 to vector<8x648xf32>
    %175 = arith.maximumf %173, %174 : vector<8x648xf32>
    %176 = arith.addf %13, %175 : vector<8x648xf32>
    %c0_244 = arith.constant 0 : index
    %c0_245 = arith.constant 0 : index
    %c0_246 = arith.constant 0 : index
    %177 = vector.load %arg9[%c0_244, %c0_245, %c0_246] : memref<1x8x648xf32, #tpu.memory_space<vmem>>, vector<1x8x648xf32>
    %178 = vector.shape_cast %177 : vector<1x8x648xf32> to vector<8x648xf32>
    %179 = vector.shape_cast %176 : vector<8x648xf32> to vector<1x8x648xf32>
    tpu.vector_store %arg9[%c0_244, %c0_245, %c0_246], %179 {strides = array<i32>} : memref<1x8x648xf32, #tpu.memory_space<vmem>>, vector<1x8x648xf32>,
    return
  }
  func.func @transform_0(%arg0: i32) -> (i32, i32, i32) {
    %c0_i32 = arith.constant 0 : i32
    %c0_i32_0 = arith.constant 0 : i32
    %c0_i32_1 = arith.constant 0 : i32
    return %arg0, %c0_i32, %c0_i32_0 : i32, i32, i32
  }
  func.func @transform_1(%arg0: i32) -> (i32, i32) {
    %c0_i32 = arith.constant 0 : i32
    %c0_i32_0 = arith.constant 0 : i32
    %c0_i32_1 = arith.constant 0 : i32
    return %c0_i32, %c0_i32_0 : i32, i32
  }
  func.func @transform_2(%arg0: i32) -> (i32, i32) {
    %c0_i32 = arith.constant 0 : i32
    %c0_i32_0 = arith.constant 0 : i32
    %c0_i32_1 = arith.constant 0 : i32
    return %c0_i32, %c0_i32_0 : i32, i32
  }
  func.func @transform_3(%arg0: i32) -> (i32, i32) {
    %c0_i32 = arith.constant 0 : i32
    %c0_i32_0 = arith.constant 0 : i32
    %c0_i32_1 = arith.constant 0 : i32
    return %c0_i32, %c0_i32_0 : i32, i32
  }
  func.func @transform_4(%arg0: i32) -> (i32, i32) {
    %c0_i32 = arith.constant 0 : i32
    %c0_i32_0 = arith.constant 0 : i32
    %c0_i32_1 = arith.constant 0 : i32
    return %c0_i32, %c0_i32_0 : i32, i32
  }
  func.func @transform_5(%arg0: i32) -> (i32, i32) {
    %c0_i32 = arith.constant 0 : i32
    %c0_i32_0 = arith.constant 0 : i32
    %c0_i32_1 = arith.constant 0 : i32
    return %c0_i32, %c0_i32_0 : i32, i32
  }
  func.func @transform_6(%arg0: i32) -> (i32, i32) {
    %c0_i32 = arith.constant 0 : i32
    %c0_i32_0 = arith.constant 0 : i32
    %c0_i32_1 = arith.constant 0 : i32
    return %c0_i32, %c0_i32_0 : i32, i32
  }
  func.func @transform_7(%arg0: i32) -> (i32, i32) {
    %c0_i32 = arith.constant 0 : i32
    %c0_i32_0 = arith.constant 0 : i32
    %c0_i32_1 = arith.constant 0 : i32
    return %c0_i32, %c0_i32_0 : i32, i32
  }
  func.func @transform_8(%arg0: i32) -> (i32, i32, i32) {
    %c0_i32 = arith.constant 0 : i32
    %c0_i32_0 = arith.constant 0 : i32
    %c0_i32_1 = arith.constant 0 : i32
    return %arg0, %c0_i32, %c0_i32_0 : i32, i32, i32
  }
}

</mosaic_0001>

<llo_original>
// kernel: tpu_custom_call.1
$region0: #{tpu_custom_call.1}
  #allocation0 [shape = 'u32[]', space=smem, size = 0x4, offset = 0x4, fixed_abs, tag = 'smem constant byte address 0x4 - core index']
  #allocation1 [shape = 'u32[72,128]{1,0:T(1,128)}', space=vmem, size = 0x9000, scoped, tag = 'internal scratch']
  #allocation2 [shape = 'f32[8,904]{1,0:T(8,128)}', space=vmem, size = 0x8000, scoped, tag = 'scratch operand']
  #allocation3 [shape = 'f32[72,648]{1,0:T(8,128)}', space=vmem, size = 0x36000, scoped, tag = 'scratch operand']
  %s0 = inlined_call_operand.hbm [shape: f32[1,4,648], index: 0, kind: input, shape index: {}]
  %s1 = inlined_call_operand.vmem [shape: f32[1,648], index: 1, kind: input, shape index: {}]
  %s2 = inlined_call_operand.vmem [shape: f32[8,4], index: 2, kind: input, shape index: {}]
  %s3 = inlined_call_operand.vmem [shape: f32[8,1], index: 3, kind: input, shape index: {}]
  %s4 = inlined_call_operand.vmem [shape: f32[8,72], index: 4, kind: input, shape index: {}]
  %s5 = inlined_call_operand.vmem [shape: f32[8,1], index: 5, kind: input, shape index: {}]
  %s6 = inlined_call_operand.vmem [shape: f32[8,72], index: 6, kind: input, shape index: {}]
  %s7 = inlined_call_operand.vmem [shape: f32[8,1], index: 7, kind: input, shape index: {}]
  %s8 = inlined_call_operand.hbm [shape: f32[1,8,648], index: 8, kind: output, shape index: {}]
  %s9 = sld [smem:[#allocation0]]
  $region46: #{tpu_custom_call.1} parent=0
    _
  %s11 = ssub.s32 1, %s9
  %s12 = scalar_select 0, %s11, %s9
  $region1: #{tpu_custom_call.1} parent=0
    #allocation4 [shape = 'u8[12288]{0}', space=vmem, size = 0x3000, scoped, tag = 'input window, operand 0, single buffered']
    #allocation5 [shape = 's32[1]{0}', space=sflag, size = 0x4, scoped, tag = 'scoped memory for tpu_custom_call.1']
    #allocation6 [shape = 's32[1]{0}', space=sflag, size = 0x4, scoped, tag = 'scoped memory for tpu_custom_call.1']
    #allocation7 [shape = 'u8[24576]{0}', space=vmem, size = 0x6000, scoped, tag = 'output window, operand 0, single buffered']
    %13 = vsyncpa [#allocation5], 0
    %14 = vsyncpa [#allocation6], 0
    // Predicated region
    $region2: #{tpu_custom_call.1} parent=1 // pred_check
      _
    $region3: #{tpu_custom_call.1} parent=1 // pred_check_branch
      %16 = sbr.rel (0) target = $region5
    $region4: #{tpu_custom_call.1} parent=1 // pred_region
      %18 = vsyncadd [#allocation5], 0
      %s20 = sshll.u32 %s0, 4
      %s21 = int_to_ptr.hbm [resolvable:$true] %s20
      %s22 = sshll.u32 [#allocation4], 4
      %s23 = int_to_ptr.vmem [resolvable:$true] %s22
      %25 = dma.hbm_to_vmem [thread:$0]  %s21, 384, %s23, [#allocation5]
    $region5: #{tpu_custom_call.1} parent=1 // pred_fallthru
      _
    // Predicated region
    $region6: #{tpu_custom_call.1} parent=1 // pred_check
      _
    $region7: #{tpu_custom_call.1} parent=1 // pred_check_branch
      %27 = sbr.rel (0) target = $region9
    $region8: #{tpu_custom_call.1} parent=1 // pred_region
      _
    $region9: #{tpu_custom_call.1} parent=1 // pred_fallthru
      _
    // Predicated region
    $region10: #{tpu_custom_call.1} parent=1 // pred_check
      _
    $region11: #{tpu_custom_call.1} parent=1 // pred_check_branch
      %29 = sbr.rel (0) target = $region13
    $region12: #{tpu_custom_call.1} parent=1 // pred_region
      _
    $region13: #{tpu_custom_call.1} parent=1 // pred_fallthru
      _
    // Predicated region
    $region14: #{tpu_custom_call.1} parent=1 // pred_check
      _
    $region15: #{tpu_custom_call.1} parent=1 // pred_check_branch
      %31 = sbr.rel (0) target = $region17
    $region16: #{tpu_custom_call.1} parent=1 // pred_region
      _
    $region17: #{tpu_custom_call.1} parent=1 // pred_fallthru
      _
    // Predicated region
    $region18: #{tpu_custom_call.1} parent=1 // pred_check
      _
    $region19: #{tpu_custom_call.1} parent=1 // pred_check_branch
      %33 = sbr.rel (0) target = $region21
    $region20: #{tpu_custom_call.1} parent=1 // pred_region
      _
    $region21: #{tpu_custom_call.1} parent=1 // pred_fallthru
      _
    // Predicated region
    $region22: #{tpu_custom_call.1} parent=1 // pred_check
      _
    $region23: #{tpu_custom_call.1} parent=1 // pred_check_branch
      %35 = sbr.rel (0) target = $region25
    $region24: #{tpu_custom_call.1} parent=1 // pred_region
      _
    $region25: #{tpu_custom_call.1} parent=1 // pred_fallthru
      _
    // Predicated region
    $region26: #{tpu_custom_call.1} parent=1 // pred_check
      _
    $region27: #{tpu_custom_call.1} parent=1 // pred_check_branch
      %37 = sbr.rel (0) target = $region29
    $region28: #{tpu_custom_call.1} parent=1 // pred_region
      _
    $region29: #{tpu_custom_call.1} parent=1 // pred_fallthru
      _
    // Predicated region
    $region30: #{tpu_custom_call.1} parent=1 // pred_check
      _
    $region31: #{tpu_custom_call.1} parent=1 // pred_check_branch
      %39 = sbr.rel (0) target = $region33
    $region32: #{tpu_custom_call.1} parent=1 // pred_region
      _
    $region33: #{tpu_custom_call.1} parent=1 // pred_fallthru
      _
    // Predicated region
    $region34: #{tpu_custom_call.1} parent=1 // pred_check
      _
    $region35: #{tpu_custom_call.1} parent=1 // pred_check_branch
      %41 = sbr.rel (0) target = $region37
    $region36: #{tpu_custom_call.1} parent=1 // pred_region
      %43 = dma.done [#allocation5], 384
    $region37: #{tpu_custom_call.1} parent=1 // pred_fallthru
      _
    %44 = vst [vmem:[#allocation2] sm:$0xff] 0.0
    %vm45 = vcmask 1047616
    %46 = vst.msk [vmem:[#allocation2 + $0x30] sm:$0xff] %vm45, 0.0
    %vm47 = vcmask 64512
    %48 = vst.msk [vmem:[#allocation2 + $0x38] sm:$0xff] %vm47, 0.0
    %v49 = vld [vmem:[%s1] sm:$0x3f]
    %v50 = vld [vmem:[%s2] sm:$0xff]
    %v51 = vld [vmem:[#allocation4] sm:$0xff]
    %v52 = vld [vmem:[#allocation4 + $0x8] sm:$0xff]
    %v53 = vld [vmem:[#allocation4 + $0x10] sm:$0xff]
    %v54 = vld [vmem:[%s3] sm:$0xff]
    %56 = vset.pattern.permute.xlu0 0
    %57 = vperm.xlu0 %56, %v54
    %v58 = vpop.permute.xlu0 %57
    %63 = vst [vmem:[#allocation1] ss:$2 sm:$0xff] %v51
    %s64 = scalar_lea.vmem [#allocation1], 16
    %65 = vst [vmem:[%s64] ss:$2 sm:$0xff] %v52
    %s66 = scalar_lea.vmem [#allocation1], 32
    %67 = vst [vmem:[%s66] ss:$2 sm:$0xff] %v53
    %v68 = vld.sshfl [vmem:[#allocation1] sm:$0xff pattern:$0x75316420]
    %v69 = vld.sshfl [vmem:[#allocation1 + $0x8] sm:$0xff pattern:$0x75316420]
    %v70 = vld.sshfl [vmem:[#allocation1 + $0x10] sm:$0xff pattern:$0x75316420]
    %v71 = vld.sshfl [vmem:[#allocation1 + $0x18] sm:$0xff pattern:$0x75316420]
    %v72 = vld.sshfl [vmem:[#allocation1 + $0x20] sm:$0xff pattern:$0x75316420]
    %v73 = vld.sshfl [vmem:[#allocation1 + $0x28] sm:$0xff pattern:$0x75316420]
    %vm74 = vcmask 31744
    %v76 = vsel %vm74, %v50, 0
    %vm78 = vcmask 1043456
    %v79 = vsel %vm78, %v68, 0
    %v81 = vsel %vm78, %v69, 0
    %v83 = vsel %vm78, %v70, 0
    %v85 = vsel %vm78, %v71, 0
    %v87 = vsel %vm78, %v72, 0
    %v89 = vsel %vm78, %v73, 0
    %91 = vmatpush.msra.mxu0 0.0
    %92 = vmatpush.msra.mxu0 0.0
    %93 = vmatpush.msra.mxu0 0.0
    %94 = vmatpush.msra.mxu0 0.0
    %95 = vmatpush.msra.mxu0 0.0
    %96 = vmatpush.msra.mxu0 0.0
    %97 = vmatpush.msra.mxu0 0.0
    %98 = vmatpush.msra.mxu0 0.0
    %99 = vmatpush.msra.mxu0 0.0
    %100 = vmatpush.msra.mxu0 0.0
    %101 = vmatpush.msra.mxu0 0.0
    %102 = vmatpush.msra.mxu0 0.0
    %103 = vmatpush.msra.mxu0 0.0
    %104 = vmatpush.msra.mxu0 0.0
    %105 = vmatpush.msra.mxu0 0.0
    %106 = vmatpush.msra.mxu0 %v79
    %107 = vmatmul.f32.gmra.mxu0 %v76
    %v108 = vpop.f32.mrf.mxu0
    %v109 = vadd.f32 %v58, %v108
    %110 = vdwg.mxu0
    %111 = vmatpush.msra.mxu0 0.0
    %112 = vmatpush.msra.mxu0 0.0
    %113 = vmatpush.msra.mxu0 0.0
    %114 = vmatpush.msra.mxu0 0.0
    %115 = vmatpush.msra.mxu0 0.0
    %116 = vmatpush.msra.mxu0 0.0
    %117 = vmatpush.msra.mxu0 0.0
    %118 = vmatpush.msra.mxu0 0.0
    %119 = vmatpush.msra.mxu0 0.0
    %120 = vmatpush.msra.mxu0 0.0
    %121 = vmatpush.msra.mxu0 0.0
    %122 = vmatpush.msra.mxu0 0.0
    %123 = vmatpush.msra.mxu0 0.0
    %124 = vmatpush.msra.mxu0 0.0
    %125 = vmatpush.msra.mxu0 0.0
    %126 = vmatpush.msra.mxu0 %v81
    %127 = vmatmul.f32.gmra.mxu0 %v76
    %v128 = vpop.f32.mrf.mxu0
    %v129 = vadd.f32 %v58, %v128
    %130 = vdwg.mxu0
    %131 = vmatpush.msra.mxu0 0.0
    %132 = vmatpush.msra.mxu0 0.0
    %133 = vmatpush.msra.mxu0 0.0
    %134 = vmatpush.msra.mxu0 0.0
    %135 = vmatpush.msra.mxu0 0.0
    %136 = vmatpush.msra.mxu0 0.0
    %137 = vmatpush.msra.mxu0 0.0
    %138 = vmatpush.msra.mxu0 0.0
    %139 = vmatpush.msra.mxu0 0.0
    %140 = vmatpush.msra.mxu0 0.0
    %141 = vmatpush.msra.mxu0 0.0
    %142 = vmatpush.msra.mxu0 0.0
    %143 = vmatpush.msra.mxu0 0.0
    %144 = vmatpush.msra.mxu0 0.0
    %145 = vmatpush.msra.mxu0 0.0
    %146 = vmatpush.msra.mxu0 %v83
    %147 = vmatmul.f32.gmra.mxu0 %v76
    %v148 = vpop.f32.mrf.mxu0
    %v149 = vadd.f32 %v58, %v148
    %150 = vdwg.mxu0
    %151 = vmatpush.msra.mxu0 0.0
    %152 = vmatpush.msra.mxu0 0.0
    %153 = vmatpush.msra.mxu0 0.0
    %154 = vmatpush.msra.mxu0 0.0
    %155 = vmatpush.msra.mxu0 0.0
    %156 = vmatpush.msra.mxu0 0.0
    %157 = vmatpush.msra.mxu0 0.0
    %158 = vmatpush.msra.mxu0 0.0
    %159 = vmatpush.msra.mxu0 0.0
    %160 = vmatpush.msra.mxu0 0.0
    %161 = vmatpush.msra.mxu0 0.0
    %162 = vmatpush.msra.mxu0 0.0
    %163 = vmatpush.msra.mxu0 0.0
    %164 = vmatpush.msra.mxu0 0.0
    %165 = vmatpush.msra.mxu0 0.0
    %166 = vmatpush.msra.mxu0 %v85
    %167 = vmatmul.f32.gmra.mxu0 %v76
    %v168 = vpop.f32.mrf.mxu0
    %v169 = vadd.f32 %v58, %v168
    %170 = vdwg.mxu0
    %171 = vmatpush.msra.mxu0 0.0
    %172 = vmatpush.msra.mxu0 0.0
    %173 = vmatpush.msra.mxu0 0.0
    %174 = vmatpush.msra.mxu0 0.0
    %175 = vmatpush.msra.mxu0 0.0
    %176 = vmatpush.msra.mxu0 0.0
    %177 = vmatpush.msra.mxu0 0.0
    %178 = vmatpush.msra.mxu0 0.0
    %179 = vmatpush.msra.mxu0 0.0
    %180 = vmatpush.msra.mxu0 0.0
    %181 = vmatpush.msra.mxu0 0.0
    %182 = vmatpush.msra.mxu0 0.0
    %183 = vmatpush.msra.mxu0 0.0
    %184 = vmatpush.msra.mxu0 0.0
    %185 = vmatpush.msra.mxu0 0.0
    %186 = vmatpush.msra.mxu0 %v87
    %187 = vmatmul.f32.gmra.mxu0 %v76
    %v188 = vpop.f32.mrf.mxu0
    %v189 = vadd.f32 %v58, %v188
    %190 = vdwg.mxu0
    %191 = vmatpush.msra.mxu0 0.0
    %192 = vmatpush.msra.mxu0 0.0
    %193 = vmatpush.msra.mxu0 0.0
    %194 = vmatpush.msra.mxu0 0.0
    %195 = vmatpush.msra.mxu0 0.0
    %196 = vmatpush.msra.mxu0 0.0
    %197 = vmatpush.msra.mxu0 0.0
    %198 = vmatpush.msra.mxu0 0.0
    %199 = vmatpush.msra.mxu0 0.0
    %200 = vmatpush.msra.mxu0 0.0
    %201 = vmatpush.msra.mxu0 0.0
    %202 = vmatpush.msra.mxu0 0.0
    %203 = vmatpush.msra.mxu0 0.0
    %204 = vmatpush.msra.mxu0 0.0
    %205 = vmatpush.msra.mxu0 0.0
    %206 = vmatpush.msra.mxu0 %v89
    %207 = vmatmul.f32.gmra.mxu0 %v76
    %v208 = vpop.f32.mrf.mxu0
    %v209 = vadd.f32 %v58, %v208
    %210 = vdwg.mxu0
    %v212 = vperm.slane %v49, 0
    %v213 = vperm.slane %v49, 1
    %v214 = vperm.slane %v49, 2
    %v215 = vperm.slane %v49, 3
    %v216 = vperm.slane %v49, 4
    %v217 = vperm.slane %v49, 5
    %v224 = vmul.f32 %v109, %v212
    %v225 = vmul.f32 %v129, %v213
    %v226 = vmul.f32 %v149, %v214
    %v227 = vmul.f32 %v169, %v215
    %v228 = vmul.f32 %v189, %v216
    %v229 = vmul.f32 %v209, %v217
    %v230 = vld [vmem:[%s4] sm:$0xff]
    %v231 = vld [vmem:[%s5] sm:$0xff]
    %232 = vst [vmem:[#allocation2 + $0x8] sm:$0xff] %v224
    %233 = vst [vmem:[#allocation2 + $0x10] sm:$0xff] %v225
    %234 = vst [vmem:[#allocation2 + $0x18] sm:$0xff] %v226
    %235 = vst [vmem:[#allocation2 + $0x20] sm:$0xff] %v227
    %236 = vst [vmem:[#allocation2 + $0x28] sm:$0xff] %v228
    %237 = vst.msk [vmem:[#allocation2 + $0x30] sm:$0xff] %vm47, %v229
    %v238 = vld [vmem:[#allocation2] sm:$0xff]
    %v239 = vld [vmem:[#allocation2 + $0x8] sm:$0xff]
    %v240 = vld [vmem:[#allocation2 + $0x10] sm:$0xff]
    %v241 = vld [vmem:[#allocation2 + $0x18] sm:$0xff]
    %v242 = vld [vmem:[#allocation2 + $0x20] sm:$0xff]
    %v243 = vld [vmem:[#allocation2 + $0x28] sm:$0xff]
    %250 = vrot.lane.b32.xlu0 %v238, 19
    %v251 = vpop.permute.xlu0 %250
    %252 = vrot.lane.b32.xlu0 %v239, 19
    %v253 = vpop.permute.xlu0 %252
    %254 = vrot.lane.b32.xlu0 %v240, 19
    %v255 = vpop.permute.xlu0 %254
    %256 = vrot.lane.b32.xlu0 %v241, 19
    %v257 = vpop.permute.xlu0 %256
    %258 = vrot.lane.b32.xlu0 %v242, 19
    %v259 = vpop.permute.xlu0 %258
    %260 = vrot.lane.b32.xlu0 %v243, 19
    %v261 = vpop.permute.xlu0 %260
    %vm262 = vcmask 154624
    %v263 = vsel %vm262, %v251, %v253
    %v264 = vsel %vm262, %v253, %v255
    %v265 = vsel %vm262, %v255, %v257
    %v266 = vsel %vm262, %v257, %v259
    %v267 = vsel %vm262, %v259, %v261
    %274 = vst [vmem:[#allocation3] sm:$0xff] %v263
    %275 = vst [vmem:[#allocation3 + $0x8] sm:$0xff] %v264
    %276 = vst [vmem:[#allocation3 + $0x10] sm:$0xff] %v265
    %277 = vst [vmem:[#allocation3 + $0x18] sm:$0xff] %v266
    %278 = vst [vmem:[#allocation3 + $0x20] sm:$0xff] %v267
    %279 = vst.msk [vmem:[#allocation3 + $0x28] sm:$0xff] %vm47, %v261
    %v280 = vld [vmem:[#allocation2] sm:$0xff]
    %v281 = vld [vmem:[#allocation2 + $0x8] sm:$0xff]
    %v282 = vld [vmem:[#allocation2 + $0x10] sm:$0xff]
    %v283 = vld [vmem:[#allocation2 + $0x18] sm:$0xff]
    %v284 = vld [vmem:[#allocation2 + $0x20] sm:$0xff]
    %v285 = vld [vmem:[#allocation2 + $0x28] sm:$0xff]
    %292 = vrot.lane.b32.xlu0 %v280, 18
    %v293 = vpop.permute.xlu0 %292
    %294 = vrot.lane.b32.xlu0 %v281, 18
    %v295 = vpop.permute.xlu0 %294
    %296 = vrot.lane.b32.xlu0 %v282, 18
    %v297 = vpop.permute.xlu0 %296
    %298 = vrot.lane.b32.xlu0 %v283, 18
    %v299 = vpop.permute.xlu0 %298
    %300 = vrot.lane.b32.xlu0 %v284, 18
    %v301 = vpop.permute.xlu0 %300
    %302 = vrot.lane.b32.xlu0 %v285, 18
    %v303 = vpop.permute.xlu0 %302
    %vm304 = vcmask 146432
    %v305 = vsel %vm304, %v293, %v295
    %v306 = vsel %vm304, %v295, %v297
    %v307 = vsel %vm304, %v297, %v299
    %v308 = vsel %vm304, %v299, %v301
    %v309 = vsel %vm304, %v301, %v303
    %316 = vst [vmem:[#allocation3 + $0x30] sm:$0xff] %v305
    %317 = vst [vmem:[#allocation3 + $0x38] sm:$0xff] %v306
    %318 = vst [vmem:[#allocation3 + $0x40] sm:$0xff] %v307
    %319 = vst [vmem:[#allocation3 + $0x48] sm:$0xff] %v308
    %320 = vst [vmem:[#allocation3 + $0x50] sm:$0xff] %v309
    %321 = vst.msk [vmem:[#allocation3 + $0x58] sm:$0xff] %vm47, %v303
    %v322 = vld [vmem:[#allocation2] sm:$0xff]
    %v323 = vld [vmem:[#allocation2 + $0x8] sm:$0xff]
    %v324 = vld [vmem:[#allocation2 + $0x10] sm:$0xff]
    %v325 = vld [vmem:[#allocation2 + $0x18] sm:$0xff]
    %v326 = vld [vmem:[#allocation2 + $0x20] sm:$0xff]
    %v327 = vld [vmem:[#allocation2 + $0x28] sm:$0xff]
    %334 = vrot.lane.b32.xlu0 %v322, 17
    %v335 = vpop.permute.xlu0 %334
    %336 = vrot.lane.b32.xlu0 %v323, 17
    %v337 = vpop.permute.xlu0 %336
    %338 = vrot.lane.b32.xlu0 %v324, 17
    %v339 = vpop.permute.xlu0 %338
    %340 = vrot.lane.b32.xlu0 %v325, 17
    %v341 = vpop.permute.xlu0 %340
    %342 = vrot.lane.b32.xlu0 %v326, 17
    %v343 = vpop.permute.xlu0 %342
    %344 = vrot.lane.b32.xlu0 %v327, 17
    %v345 = vpop.permute.xlu0 %344
    %vm346 = vcmask 138240
    %v347 = vsel %vm346, %v335, %v337
    %v348 = vsel %vm346, %v337, %v339
    %v349 = vsel %vm346, %v339, %v341
    %v350 = vsel %vm346, %v341, %v343
    %v351 = vsel %vm346, %v343, %v345
    %358 = vst [vmem:[#allocation3 + $0x60] sm:$0xff] %v347
    %359 = vst [vmem:[#allocation3 + $0x68] sm:$0xff] %v348
    %360 = vst [vmem:[#allocation3 + $0x70] sm:$0xff] %v349
    %361 = vst [vmem:[#allocation3 + $0x78] sm:$0xff] %v350
    %362 = vst [vmem:[#allocation3 + $0x80] sm:$0xff] %v351
    %363 = vst.msk [vmem:[#allocation3 + $0x88] sm:$0xff] %vm47, %v345
    %v364 = vld [vmem:[#allocation2] sm:$0xff]
    %v365 = vld [vmem:[#allocation2 + $0x8] sm:$0xff]
    %v366 = vld [vmem:[#allocation2 + $0x10] sm:$0xff]
    %v367 = vld [vmem:[#allocation2 + $0x18] sm:$0xff]
    %v368 = vld [vmem:[#allocation2 + $0x20] sm:$0xff]
    %v369 = vld [vmem:[#allocation2 + $0x28] sm:$0xff]
    %v370 = vld [vmem:[#allocation2 + $0x30] sm:$0xff]
    %378 = vrot.lane.b32.xlu0 %v364, 1
    %v379 = vpop.permute.xlu0 %378
    %380 = vrot.lane.b32.xlu0 %v365, 1
    %v381 = vpop.permute.xlu0 %380
    %382 = vrot.lane.b32.xlu0 %v366, 1
    %v383 = vpop.permute.xlu0 %382
    %384 = vrot.lane.b32.xlu0 %v367, 1
    %v385 = vpop.permute.xlu0 %384
    %386 = vrot.lane.b32.xlu0 %v368, 1
    %v387 = vpop.permute.xlu0 %386
    %388 = vrot.lane.b32.xlu0 %v369, 1
    %v389 = vpop.permute.xlu0 %388
    %390 = vrot.lane.b32.xlu0 %v370, 1
    %v391 = vpop.permute.xlu0 %390
    %vm392 = vcmask 7168
    %v393 = vsel %vm392, %v379, %v381
    %v394 = vsel %vm392, %v381, %v383
    %v395 = vsel %vm392, %v383, %v385
    %v396 = vsel %vm392, %v385, %v387
    %v397 = vsel %vm392, %v387, %v389
    %v398 = vsel %vm392, %v389, %v391
    %405 = vst [vmem:[#allocation3 + $0x90] sm:$0xff] %v393
    %406 = vst [vmem:[#allocation3 + $0x98] sm:$0xff] %v394
    %407 = vst [vmem:[#allocation3 + $0xa0] sm:$0xff] %v395
    %408 = vst [vmem:[#allocation3 + $0xa8] sm:$0xff] %v396
    %409 = vst [vmem:[#allocation3 + $0xb0] sm:$0xff] %v397
    %410 = vst.msk [vmem:[#allocation3 + $0xb8] sm:$0xff] %vm47, %v398
    %411 = vst [vmem:[#allocation3 + $0xc0] sm:$0xff] %v224
    %412 = vst [vmem:[#allocation3 + $0xc8] sm:$0xff] %v225
    %413 = vst [vmem:[#allocation3 + $0xd0] sm:$0xff] %v226
    %414 = vst [vmem:[#allocation3 + $0xd8] sm:$0xff] %v227
    %415 = vst [vmem:[#allocation3 + $0xe0] sm:$0xff] %v228
    %416 = vst.msk [vmem:[#allocation3 + $0xe8] sm:$0xff] %vm47, %v229
    %v417 = vld [vmem:[#allocation2 + $0x8] sm:$0xff]
    %v418 = vld [vmem:[#allocation2 + $0x10] sm:$0xff]
    %v419 = vld [vmem:[#allocation2 + $0x18] sm:$0xff]
    %v420 = vld [vmem:[#allocation2 + $0x20] sm:$0xff]
    %v421 = vld [vmem:[#allocation2 + $0x28] sm:$0xff]
    %v422 = vld [vmem:[#allocation2 + $0x30] sm:$0xff]
    %429 = vrot.lane.b32.xlu0 %v417, 127
    %v430 = vpop.permute.xlu0 %429
    %431 = vrot.lane.b32.xlu0 %v418, 127
    %v432 = vpop.permute.xlu0 %431
    %433 = vrot.lane.b32.xlu0 %v419, 127
    %v434 = vpop.permute.xlu0 %433
    %435 = vrot.lane.b32.xlu0 %v420, 127
    %v436 = vpop.permute.xlu0 %435
    %437 = vrot.lane.b32.xlu0 %v421, 127
    %v438 = vpop.permute.xlu0 %437
    %439 = vrot.lane.b32.xlu0 %v422, 127
    %v440 = vpop.permute.xlu0 %439
    %vm441 = vcmask 1039360
    %v442 = vsel %vm441, %v430, %v432
    %v443 = vsel %vm441, %v432, %v434
    %v444 = vsel %vm441, %v434, %v436
    %v445 = vsel %vm441, %v436, %v438
    %v446 = vsel %vm441, %v438, %v440
    %453 = vst [vmem:[#allocation3 + $0xf0] sm:$0xff] %v442
    %454 = vst [vmem:[#allocation3 + $0xf8] sm:$0xff] %v443
    %455 = vst [vmem:[#allocation3 + $0x100] sm:$0xff] %v444
    %456 = vst [vmem:[#allocation3 + $0x108] sm:$0xff] %v445
    %457 = vst [vmem:[#allocation3 + $0x110] sm:$0xff] %v446
    %458 = vst.msk [vmem:[#allocation3 + $0x118] sm:$0xff] %vm47, %v440
    %v459 = vld [vmem:[#allocation2 + $0x8] sm:$0xff]
    %v460 = vld [vmem:[#allocation2 + $0x10] sm:$0xff]
    %v461 = vld [vmem:[#allocation2 + $0x18] sm:$0xff]
    %v462 = vld [vmem:[#allocation2 + $0x20] sm:$0xff]
    %v463 = vld [vmem:[#allocation2 + $0x28] sm:$0xff]
    %v464 = vld [vmem:[#allocation2 + $0x30] sm:$0xff]
    %471 = vrot.lane.b32.xlu0 %v459, 111
    %v472 = vpop.permute.xlu0 %471
    %473 = vrot.lane.b32.xlu0 %v460, 111
    %v474 = vpop.permute.xlu0 %473
    %475 = vrot.lane.b32.xlu0 %v461, 111
    %v476 = vpop.permute.xlu0 %475
    %477 = vrot.lane.b32.xlu0 %v462, 111
    %v478 = vpop.permute.xlu0 %477
    %479 = vrot.lane.b32.xlu0 %v463, 111
    %v480 = vpop.permute.xlu0 %479
    %481 = vrot.lane.b32.xlu0 %v464, 111
    %v482 = vpop.permute.xlu0 %481
    %vm483 = vcmask 908288
    %v484 = vsel %vm483, %v472, %v474
    %v485 = vsel %vm483, %v474, %v476
    %v486 = vsel %vm483, %v476, %v478
    %v487 = vsel %vm483, %v478, %v480
    %v488 = vsel %vm483, %v480, %v482
    %495 = vst [vmem:[#allocation3 + $0x120] sm:$0xff] %v484
    %496 = vst [vmem:[#allocation3 + $0x128] sm:$0xff] %v485
    %497 = vst [vmem:[#allocation3 + $0x130] sm:$0xff] %v486
    %498 = vst [vmem:[#allocation3 + $0x138] sm:$0xff] %v487
    %499 = vst [vmem:[#allocation3 + $0x140] sm:$0xff] %v488
    %500 = vst.msk [vmem:[#allocation3 + $0x148] sm:$0xff] %vm47, %v482
    %v501 = vld [vmem:[#allocation2 + $0x8] sm:$0xff]
    %v502 = vld [vmem:[#allocation2 + $0x10] sm:$0xff]
    %v503 = vld [vmem:[#allocation2 + $0x18] sm:$0xff]
    %v504 = vld [vmem:[#allocation2 + $0x20] sm:$0xff]
    %v505 = vld [vmem:[#allocation2 + $0x28] sm:$0xff]
    %v506 = vld [vmem:[#allocation2 + $0x30] sm:$0xff]
    %513 = vrot.lane.b32.xlu0 %v501, 110
    %v514 = vpop.permute.xlu0 %513
    %515 = vrot.lane.b32.xlu0 %v502, 110
    %v516 = vpop.permute.xlu0 %515
    %517 = vrot.lane.b32.xlu0 %v503, 110
    %v518 = vpop.permute.xlu0 %517
    %519 = vrot.lane.b32.xlu0 %v504, 110
    %v520 = vpop.permute.xlu0 %519
    %521 = vrot.lane.b32.xlu0 %v505, 110
    %v522 = vpop.permute.xlu0 %521
    %523 = vrot.lane.b32.xlu0 %v506, 110
    %v524 = vpop.permute.xlu0 %523
    %vm525 = vcmask 900096
    %v526 = vsel %vm525, %v514, %v516
    %v527 = vsel %vm525, %v516, %v518
    %v528 = vsel %vm525, %v518, %v520
    %v529 = vsel %vm525, %v520, %v522
    %v530 = vsel %vm525, %v522, %v524
    %537 = vst [vmem:[#allocation3 + $0x150] sm:$0xff] %v526
    %538 = vst [vmem:[#allocation3 + $0x158] sm:$0xff] %v527
    %539 = vst [vmem:[#allocation3 + $0x160] sm:$0xff] %v528
    %540 = vst [vmem:[#allocation3 + $0x168] sm:$0xff] %v529
    %541 = vst [vmem:[#allocation3 + $0x170] sm:$0xff] %v530
    %542 = vst.msk [vmem:[#allocation3 + $0x178] sm:$0xff] %vm47, %v524
    %v543 = vld [vmem:[#allocation2 + $0x8] sm:$0xff]
    %v544 = vld [vmem:[#allocation2 + $0x10] sm:$0xff]
    %v545 = vld [vmem:[#allocation2 + $0x18] sm:$0xff]
    %v546 = vld [vmem:[#allocation2 + $0x20] sm:$0xff]
    %v547 = vld [vmem:[#allocation2 + $0x28] sm:$0xff]
    %v548 = vld [vmem:[#allocation2 + $0x30] sm:$0xff]
    %555 = vrot.lane.b32.xlu0 %v543, 109
    %v556 = vpop.permute.xlu0 %555
    %557 = vrot.lane.b32.xlu0 %v544, 109
    %v558 = vpop.permute.xlu0 %557
    %559 = vrot.lane.b32.xlu0 %v545, 109
    %v560 = vpop.permute.xlu0 %559
    %561 = vrot.lane.b32.xlu0 %v546, 109
    %v562 = vpop.permute.xlu0 %561
    %563 = vrot.lane.b32.xlu0 %v547, 109
    %v564 = vpop.permute.xlu0 %563
    %565 = vrot.lane.b32.xlu0 %v548, 109
    %v566 = vpop.permute.xlu0 %565
    %vm567 = vcmask 891904
    %v568 = vsel %vm567, %v556, %v558
    %v569 = vsel %vm567, %v558, %v560
    %v570 = vsel %vm567, %v560, %v562
    %v571 = vsel %vm567, %v562, %v564
    %v572 = vsel %vm567, %v564, %v566
    %579 = vst [vmem:[#allocation3 + $0x180] sm:$0xff] %v568
    %580 = vst [vmem:[#allocation3 + $0x188] sm:$0xff] %v569
    %581 = vst [vmem:[#allocation3 + $0x190] sm:$0xff] %v570
    %582 = vst [vmem:[#allocation3 + $0x198] sm:$0xff] %v571
    %583 = vst [vmem:[#allocation3 + $0x1a0] sm:$0xff] %v572
    %584 = vst.msk [vmem:[#allocation3 + $0x1a8] sm:$0xff] %vm47, %v566
    %v585 = vld [vmem:[#allocation3] sm:$0xff]
    %v586 = vld [vmem:[#allocation3 + $0x8] sm:$0xff]
    %v587 = vld [vmem:[#allocation3 + $0x10] sm:$0xff]
    %v588 = vld [vmem:[#allocation3 + $0x18] sm:$0xff]
    %v589 = vld [vmem:[#allocation3 + $0x20] sm:$0xff]
    %v590 = vld [vmem:[#allocation3 + $0x28] sm:$0xff]
    %v591 = vld [vmem:[#allocation3 + $0x30] sm:$0xff]
    %v592 = vld [vmem:[#allocation3 + $0x38] sm:$0xff]
    %v593 = vld [vmem:[#allocation3 + $0x40] sm:$0xff]
    %v594 = vld [vmem:[#allocation3 + $0x48] sm:$0xff]
    %v595 = vld [vmem:[#allocation3 + $0x50] sm:$0xff]
    %v596 = vld [vmem:[#allocation3 + $0x58] sm:$0xff]
    %v597 = vld [vmem:[#allocation3 + $0x60] sm:$0xff]
    %v598 = vld [vmem:[#allocation3 + $0x68] sm:$0xff]
    %v599 = vld [vmem:[#allocation3 + $0x70] sm:$0xff]
    %v600 = vld [vmem:[#allocation3 + $0x78] sm:$0xff]
    %v601 = vld [vmem:[#allocation3 + $0x80] sm:$0xff]
    %v602 = vld [vmem:[#allocation3 + $0x88] sm:$0xff]
    %v603 = vld [vmem:[#allocation3 + $0x90] sm:$0xff]
    %v604 = vld [vmem:[#allocation3 + $0x98] sm:$0xff]
    %v605 = vld [vmem:[#allocation3 + $0xa0] sm:$0xff]
    %v606 = vld [vmem:[#allocation3 + $0xa8] sm:$0xff]
    %v607 = vld [vmem:[#allocation3 + $0xb0] sm:$0xff]
    %v608 = vld [vmem:[#allocation3 + $0xb8] sm:$0xff]
    %v609 = vld [vmem:[#allocation3 + $0xc0] sm:$0xff]
    %v610 = vld [vmem:[#allocation3 + $0xc8] sm:$0xff]
    %v611 = vld [vmem:[#allocation3 + $0xd0] sm:$0xff]
    %v612 = vld [vmem:[#allocation3 + $0xd8] sm:$0xff]
    %v613 = vld [vmem:[#allocation3 + $0xe0] sm:$0xff]
    %v614 = vld [vmem:[#allocation3 + $0xe8] sm:$0xff]
    %v615 = vld [vmem:[#allocation3 + $0xf0] sm:$0xff]
    %v616 = vld [vmem:[#allocation3 + $0xf8] sm:$0xff]
    %v617 = vld [vmem:[#allocation3 + $0x100] sm:$0xff]
    %v618 = vld [vmem:[#allocation3 + $0x108] sm:$0xff]
    %v619 = vld [vmem:[#allocation3 + $0x110] sm:$0xff]
    %v620 = vld [vmem:[#allocation3 + $0x118] sm:$0xff]
    %v621 = vld [vmem:[#allocation3 + $0x120] sm:$0xff]
    %v622 = vld [vmem:[#allocation3 + $0x128] sm:$0xff]
    %v623 = vld [vmem:[#allocation3 + $0x130] sm:$0xff]
    %v624 = vld [vmem:[#allocation3 + $0x138] sm:$0xff]
    %v625 = vld [vmem:[#allocation3 + $0x140] sm:$0xff]
    %v626 = vld [vmem:[#allocation3 + $0x148] sm:$0xff]
    %v627 = vld [vmem:[#allocation3 + $0x150] sm:$0xff]
    %v628 = vld [vmem:[#allocation3 + $0x158] sm:$0xff]
    %v629 = vld [vmem:[#allocation3 + $0x160] sm:$0xff]
    %v630 = vld [vmem:[#allocation3 + $0x168] sm:$0xff]
    %v631 = vld [vmem:[#allocation3 + $0x170] sm:$0xff]
    %v632 = vld [vmem:[#allocation3 + $0x178] sm:$0xff]
    %v633 = vld [vmem:[#allocation3 + $0x180] sm:$0xff]
    %v634 = vld [vmem:[#allocation3 + $0x188] sm:$0xff]
    %v635 = vld [vmem:[#allocation3 + $0x190] sm:$0xff]
    %v636 = vld [vmem:[#allocation3 + $0x198] sm:$0xff]
    %v637 = vld [vmem:[#allocation3 + $0x1a0] sm:$0xff]
    %v638 = vld [vmem:[#allocation3 + $0x1a8] sm:$0xff]
    %640 = vset.pattern.permute.xlu0 0
    %641 = vperm.xlu0 %640, %v231
    %v642 = vpop.permute.xlu0 %641
    %vm644 = vcmask 588800
    %v646 = vsel %vm644, %v230, 0
    %648 = vmatpush.msra.mxu0 0.0
    %649 = vmatpush.msra.mxu0 0.0
    %650 = vmatpush.msra.mxu0 0.0
    %651 = vmatpush.msra.mxu0 0.0
    %652 = vmatpush.msra.mxu0 0.0
    %653 = vmatpush.msra.mxu0 0.0
    %654 = vmatpush.msra.mxu0 0.0
    %655 = vmatpush.msra.mxu0 %v633
    %656 = vmatpush.msra.mxu0 %v627
    %657 = vmatpush.msra.mxu0 %v621
    %658 = vmatpush.msra.mxu0 %v615
    %659 = vmatpush.msra.mxu0 %v609
    %660 = vmatpush.msra.mxu0 %v603
    %661 = vmatpush.msra.mxu0 %v597
    %662 = vmatpush.msra.mxu0 %v591
    %663 = vmatpush.msra.mxu0 %v585
    %664 = vmatmul.f32.gmra.mxu0 %v646
    %v665 = vpop.f32.mrf.mxu0
    %v666 = vadd.f32 %v642, %v665
    %667 = vdwg.mxu0
    %668 = vmatpush.msra.mxu0 0.0
    %669 = vmatpush.msra.mxu0 0.0
    %670 = vmatpush.msra.mxu0 0.0
    %671 = vmatpush.msra.mxu0 0.0
    %672 = vmatpush.msra.mxu0 0.0
    %673 = vmatpush.msra.mxu0 0.0
    %674 = vmatpush.msra.mxu0 0.0
    %675 = vmatpush.msra.mxu0 %v634
    %676 = vmatpush.msra.mxu0 %v628
    %677 = vmatpush.msra.mxu0 %v622
    %678 = vmatpush.msra.mxu0 %v616
    %679 = vmatpush.msra.mxu0 %v610
    %680 = vmatpush.msra.mxu0 %v604
    %681 = vmatpush.msra.mxu0 %v598
    %682 = vmatpush.msra.mxu0 %v592
    %683 = vmatpush.msra.mxu0 %v586
    %684 = vmatmul.f32.gmra.mxu0 %v646
    %v685 = vpop.f32.mrf.mxu0
    %v686 = vadd.f32 %v642, %v685
    %687 = vdwg.mxu0
    %688 = vmatpush.msra.mxu0 0.0
    %689 = vmatpush.msra.mxu0 0.0
    %690 = vmatpush.msra.mxu0 0.0
    %691 = vmatpush.msra.mxu0 0.0
    %692 = vmatpush.msra.mxu0 0.0
    %693 = vmatpush.msra.mxu0 0.0
    %694 = vmatpush.msra.mxu0 0.0
    %695 = vmatpush.msra.mxu0 %v635
    %696 = vmatpush.msra.mxu0 %v629
    %697 = vmatpush.msra.mxu0 %v623
    %698 = vmatpush.msra.mxu0 %v617
    %699 = vmatpush.msra.mxu0 %v611
    %700 = vmatpush.msra.mxu0 %v605
    %701 = vmatpush.msra.mxu0 %v599
    %702 = vmatpush.msra.mxu0 %v593
    %703 = vmatpush.msra.mxu0 %v587
    %704 = vmatmul.f32.gmra.mxu0 %v646
    %v705 = vpop.f32.mrf.mxu0
    %v706 = vadd.f32 %v642, %v705
    %707 = vdwg.mxu0
    %708 = vmatpush.msra.mxu0 0.0
    %709 = vmatpush.msra.mxu0 0.0
    %710 = vmatpush.msra.mxu0 0.0
    %711 = vmatpush.msra.mxu0 0.0
    %712 = vmatpush.msra.mxu0 0.0
    %713 = vmatpush.msra.mxu0 0.0
    %714 = vmatpush.msra.mxu0 0.0
    %715 = vmatpush.msra.mxu0 %v636
    %716 = vmatpush.msra.mxu0 %v630
    %717 = vmatpush.msra.mxu0 %v624
    %718 = vmatpush.msra.mxu0 %v618
    %719 = vmatpush.msra.mxu0 %v612
    %720 = vmatpush.msra.mxu0 %v606
    %721 = vmatpush.msra.mxu0 %v600
    %722 = vmatpush.msra.mxu0 %v594
    %723 = vmatpush.msra.mxu0 %v588
    %724 = vmatmul.f32.gmra.mxu0 %v646
    %v725 = vpop.f32.mrf.mxu0
    %v726 = vadd.f32 %v642, %v725
    %727 = vdwg.mxu0
    %728 = vmatpush.msra.mxu0 0.0
    %729 = vmatpush.msra.mxu0 0.0
    %730 = vmatpush.msra.mxu0 0.0
    %731 = vmatpush.msra.mxu0 0.0
    %732 = vmatpush.msra.mxu0 0.0
    %733 = vmatpush.msra.mxu0 0.0
    %734 = vmatpush.msra.mxu0 0.0
    %735 = vmatpush.msra.mxu0 %v637
    %736 = vmatpush.msra.mxu0 %v631
    %737 = vmatpush.msra.mxu0 %v625
    %738 = vmatpush.msra.mxu0 %v619
    %739 = vmatpush.msra.mxu0 %v613
    %740 = vmatpush.msra.mxu0 %v607
    %741 = vmatpush.msra.mxu0 %v601
    %742 = vmatpush.msra.mxu0 %v595
    %743 = vmatpush.msra.mxu0 %v589
    %744 = vmatmul.f32.gmra.mxu0 %v646
    %v745 = vpop.f32.mrf.mxu0
    %v746 = vadd.f32 %v642, %v745
    %747 = vdwg.mxu0
    %748 = vmatpush.msra.mxu0 0.0
    %749 = vmatpush.msra.mxu0 0.0
    %750 = vmatpush.msra.mxu0 0.0
    %751 = vmatpush.msra.mxu0 0.0
    %752 = vmatpush.msra.mxu0 0.0
    %753 = vmatpush.msra.mxu0 0.0
    %754 = vmatpush.msra.mxu0 0.0
    %755 = vmatpush.msra.mxu0 %v638
    %756 = vmatpush.msra.mxu0 %v632
    %757 = vmatpush.msra.mxu0 %v626
    %758 = vmatpush.msra.mxu0 %v620
    %759 = vmatpush.msra.mxu0 %v614
    %760 = vmatpush.msra.mxu0 %v608
    %761 = vmatpush.msra.mxu0 %v602
    %762 = vmatpush.msra.mxu0 %v596
    %763 = vmatpush.msra.mxu0 %v590
    %764 = vmatmul.f32.gmra.mxu0 %v646
    %v765 = vpop.f32.mrf.mxu0
    %v766 = vadd.f32 %v642, %v765
    %767 = vdwg.mxu0
    %v768 = vmax.f32 %v666, 0.0
    %v769 = vmax.f32 %v686, 0.0
    %v770 = vmax.f32 %v706, 0.0
    %v771 = vmax.f32 %v726, 0.0
    %v772 = vmax.f32 %v746, 0.0
    %v773 = vmax.f32 %v766, 0.0
    %v774 = vmul.f32 %v768, %v212
    %v775 = vmul.f32 %v769, %v213
    %v776 = vmul.f32 %v770, %v214
    %v777 = vmul.f32 %v771, %v215
    %v778 = vmul.f32 %v772, %v216
    %v779 = vmul.f32 %v773, %v217
    %v780 = vadd.f32 %v224, %v774
    %v781 = vadd.f32 %v225, %v775
    %v782 = vadd.f32 %v226, %v776
    %v783 = vadd.f32 %v227, %v777
    %v784 = vadd.f32 %v228, %v778
    %v785 = vadd.f32 %v229, %v779
    %786 = vst [vmem:[#allocation2 + $0x8] sm:$0xff] %v780
    %787 = vst [vmem:[#allocation2 + $0x10] sm:$0xff] %v781
    %788 = vst [vmem:[#allocation2 + $0x18] sm:$0xff] %v782
    %789 = vst [vmem:[#allocation2 + $0x20] sm:$0xff] %v783
    %790 = vst [vmem:[#allocation2 + $0x28] sm:$0xff] %v784
    %791 = vst.msk [vmem:[#allocation2 + $0x30] sm:$0xff] %vm47, %v785
    %v792 = vld [vmem:[#allocation2] sm:$0xff]
    %v793 = vld [vmem:[#allocation2 + $0x8] sm:$0xff]
    %v794 = vld [vmem:[#allocation2 + $0x10] sm:$0xff]
    %v795 = vld [vmem:[#allocation2 + $0x18] sm:$0xff]
    %v796 = vld [vmem:[#allocation2 + $0x20] sm:$0xff]
    %v797 = vld [vmem:[#allocation2 + $0x28] sm:$0xff]
    %804 = vrot.lane.b32.xlu0 %v792, 19
    %v805 = vpop.permute.xlu0 %804
    %806 = vrot.lane.b32.xlu0 %v793, 19
    %v807 = vpop.permute.xlu0 %806
    %808 = vrot.lane.b32.xlu0 %v794, 19
    %v809 = vpop.permute.xlu0 %808
    %810 = vrot.lane.b32.xlu0 %v795, 19
    %v811 = vpop.permute.xlu0 %810
    %812 = vrot.lane.b32.xlu0 %v796, 19
    %v813 = vpop.permute.xlu0 %812
    %814 = vrot.lane.b32.xlu0 %v797, 19
    %v815 = vpop.permute.xlu0 %814
    %v816 = vsel %vm262, %v805, %v807
    %v817 = vsel %vm262, %v807, %v809
    %v818 = vsel %vm262, %v809, %v811
    %v819 = vsel %vm262, %v811, %v813
    %v820 = vsel %vm262, %v813, %v815
    %827 = vst [vmem:[#allocation3] sm:$0xff] %v816
    %828 = vst [vmem:[#allocation3 + $0x8] sm:$0xff] %v817
    %829 = vst [vmem:[#allocation3 + $0x10] sm:$0xff] %v818
    %830 = vst [vmem:[#allocation3 + $0x18] sm:$0xff] %v819
    %831 = vst [vmem:[#allocation3 + $0x20] sm:$0xff] %v820
    %832 = vst.msk [vmem:[#allocation3 + $0x28] sm:$0xff] %vm47, %v815
    %v833 = vld [vmem:[#allocation2] sm:$0xff]
    %v834 = vld [vmem:[#allocation2 + $0x8] sm:$0xff]
    %v835 = vld [vmem:[#allocation2 + $0x10] sm:$0xff]
    %v836 = vld [vmem:[#allocation2 + $0x18] sm:$0xff]
    %v837 = vld [vmem:[#allocation2 + $0x20] sm:$0xff]
    %v838 = vld [vmem:[#allocation2 + $0x28] sm:$0xff]
    %845 = vrot.lane.b32.xlu0 %v833, 18
    %v846 = vpop.permute.xlu0 %845
    %847 = vrot.lane.b32.xlu0 %v834, 18
    %v848 = vpop.permute.xlu0 %847
    %849 = vrot.lane.b32.xlu0 %v835, 18
    %v850 = vpop.permute.xlu0 %849
    %851 = vrot.lane.b32.xlu0 %v836, 18
    %v852 = vpop.permute.xlu0 %851
    %853 = vrot.lane.b32.xlu0 %v837, 18
    %v854 = vpop.permute.xlu0 %853
    %855 = vrot.lane.b32.xlu0 %v838, 18
    %v856 = vpop.permute.xlu0 %855
    %v857 = vsel %vm304, %v846, %v848
    %v858 = vsel %vm304, %v848, %v850
    %v859 = vsel %vm304, %v850, %v852
    %v860 = vsel %vm304, %v852, %v854
    %v861 = vsel %vm304, %v854, %v856
    %868 = vst [vmem:[#allocation3 + $0x30] sm:$0xff] %v857
    %869 = vst [vmem:[#allocation3 + $0x38] sm:$0xff] %v858
    %870 = vst [vmem:[#allocation3 + $0x40] sm:$0xff] %v859
    %871 = vst [vmem:[#allocation3 + $0x48] sm:$0xff] %v860
    %872 = vst [vmem:[#allocation3 + $0x50] sm:$0xff] %v861
    %873 = vst.msk [vmem:[#allocation3 + $0x58] sm:$0xff] %vm47, %v856
    %v874 = vld [vmem:[#allocation2] sm:$0xff]
    %v875 = vld [vmem:[#allocation2 + $0x8] sm:$0xff]
    %v876 = vld [vmem:[#allocation2 + $0x10] sm:$0xff]
    %v877 = vld [vmem:[#allocation2 + $0x18] sm:$0xff]
    %v878 = vld [vmem:[#allocation2 + $0x20] sm:$0xff]
    %v879 = vld [vmem:[#allocation2 + $0x28] sm:$0xff]
    %886 = vrot.lane.b32.xlu0 %v874, 17
    %v887 = vpop.permute.xlu0 %886
    %888 = vrot.lane.b32.xlu0 %v875, 17
    %v889 = vpop.permute.xlu0 %888
    %890 = vrot.lane.b32.xlu0 %v876, 17
    %v891 = vpop.permute.xlu0 %890
    %892 = vrot.lane.b32.xlu0 %v877, 17
    %v893 = vpop.permute.xlu0 %892
    %894 = vrot.lane.b32.xlu0 %v878, 17
    %v895 = vpop.permute.xlu0 %894
    %896 = vrot.lane.b32.xlu0 %v879, 17
    %v897 = vpop.permute.xlu0 %896
    %v898 = vsel %vm346, %v887, %v889
    %v899 = vsel %vm346, %v889, %v891
    %v900 = vsel %vm346, %v891, %v893
    %v901 = vsel %vm346, %v893, %v895
    %v902 = vsel %vm346, %v895, %v897
    %909 = vst [vmem:[#allocation3 + $0x60] sm:$0xff] %v898
    %910 = vst [vmem:[#allocation3 + $0x68] sm:$0xff] %v899
    %911 = vst [vmem:[#allocation3 + $0x70] sm:$0xff] %v900
    %912 = vst [vmem:[#allocation3 + $0x78] sm:$0xff] %v901
    %913 = vst [vmem:[#allocation3 + $0x80] sm:$0xff] %v902
    %914 = vst.msk [vmem:[#allocation3 + $0x88] sm:$0xff] %vm47, %v897
    %v915 = vld [vmem:[#allocation2] sm:$0xff]
    %v916 = vld [vmem:[#allocation2 + $0x8] sm:$0xff]
    %v917 = vld [vmem:[#allocation2 + $0x10] sm:$0xff]
    %v918 = vld [vmem:[#allocation2 + $0x18] sm:$0xff]
    %v919 = vld [vmem:[#allocation2 + $0x20] sm:$0xff]
    %v920 = vld [vmem:[#allocation2 + $0x28] sm:$0xff]
    %v921 = vld [vmem:[#allocation2 + $0x30] sm:$0xff]
    %929 = vrot.lane.b32.xlu0 %v915, 1
    %v930 = vpop.permute.xlu0 %929
    %931 = vrot.lane.b32.xlu0 %v916, 1
    %v932 = vpop.permute.xlu0 %931
    %933 = vrot.lane.b32.xlu0 %v917, 1
    %v934 = vpop.permute.xlu0 %933
    %935 = vrot.lane.b32.xlu0 %v918, 1
    %v936 = vpop.permute.xlu0 %935
    %937 = vrot.lane.b32.xlu0 %v919, 1
    %v938 = vpop.permute.xlu0 %937
    %939 = vrot.lane.b32.xlu0 %v920, 1
    %v940 = vpop.permute.xlu0 %939
    %941 = vrot.lane.b32.xlu0 %v921, 1
    %v942 = vpop.permute.xlu0 %941
    %v943 = vsel %vm392, %v930, %v932
    %v944 = vsel %vm392, %v932, %v934
    %v945 = vsel %vm392, %v934, %v936
    %v946 = vsel %vm392, %v936, %v938
    %v947 = vsel %vm392, %v938, %v940
    %v948 = vsel %vm392, %v940, %v942
    %955 = vst [vmem:[#allocation3 + $0x90] sm:$0xff] %v943
    %956 = vst [vmem:[#allocation3 + $0x98] sm:$0xff] %v944
    %957 = vst [vmem:[#allocation3 + $0xa0] sm:$0xff] %v945
    %958 = vst [vmem:[#allocation3 + $0xa8] sm:$0xff] %v946
    %959 = vst [vmem:[#allocation3 + $0xb0] sm:$0xff] %v947
    %960 = vst.msk [vmem:[#allocation3 + $0xb8] sm:$0xff] %vm47, %v948
    %961 = vst [vmem:[#allocation3 + $0xc0] sm:$0xff] %v780
    %962 = vst [vmem:[#allocation3 + $0xc8] sm:$0xff] %v781
    %963 = vst [vmem:[#allocation3 + $0xd0] sm:$0xff] %v782
    %964 = vst [vmem:[#allocation3 + $0xd8] sm:$0xff] %v783
    %965 = vst [vmem:[#allocation3 + $0xe0] sm:$0xff] %v784
    %966 = vst.msk [vmem:[#allocation3 + $0xe8] sm:$0xff] %vm47, %v785
    %v967 = vld [vmem:[#allocation2 + $0x8] sm:$0xff]
    %v968 = vld [vmem:[#allocation2 + $0x10] sm:$0xff]
    %v969 = vld [vmem:[#allocation2 + $0x18] sm:$0xff]
    %v970 = vld [vmem:[#allocation2 + $0x20] sm:$0xff]
    %v971 = vld [vmem:[#allocation2 + $0x28] sm:$0xff]
    %v972 = vld [vmem:[#allocation2 + $0x30] sm:$0xff]
    %979 = vrot.lane.b32.xlu0 %v967, 127
    %v980 = vpop.permute.xlu0 %979
    %981 = vrot.lane.b32.xlu0 %v968, 127
    %v982 = vpop.permute.xlu0 %981
    %983 = vrot.lane.b32.xlu0 %v969, 127
    %v984 = vpop.permute.xlu0 %983
    %985 = vrot.lane.b32.xlu0 %v970, 127
    %v986 = vpop.permute.xlu0 %985
    %987 = vrot.lane.b32.xlu0 %v971, 127
    %v988 = vpop.permute.xlu0 %987
    %989 = vrot.lane.b32.xlu0 %v972, 127
    %v990 = vpop.permute.xlu0 %989
    %v991 = vsel %vm441, %v980, %v982
    %v992 = vsel %vm441, %v982, %v984
    %v993 = vsel %vm441, %v984, %v986
    %v994 = vsel %vm441, %v986, %v988
    %v995 = vsel %vm441, %v988, %v990
    %1002 = vst [vmem:[#allocation3 + $0xf0] sm:$0xff] %v991
    %1003 = vst [vmem:[#allocation3 + $0xf8] sm:$0xff] %v992
    %1004 = vst [vmem:[#allocation3 + $0x100] sm:$0xff] %v993
    %1005 = vst [vmem:[#allocation3 + $0x108] sm:$0xff] %v994
    %1006 = vst [vmem:[#allocation3 + $0x110] sm:$0xff] %v995
    %1007 = vst.msk [vmem:[#allocation3 + $0x118] sm:$0xff] %vm47, %v990
    %v1008 = vld [vmem:[#allocation2 + $0x8] sm:$0xff]
    %v1009 = vld [vmem:[#allocation2 + $0x10] sm:$0xff]
    %v1010 = vld [vmem:[#allocation2 + $0x18] sm:$0xff]
    %v1011 = vld [vmem:[#allocation2 + $0x20] sm:$0xff]
    %v1012 = vld [vmem:[#allocation2 + $0x28] sm:$0xff]
    %v1013 = vld [vmem:[#allocation2 + $0x30] sm:$0xff]
    %1020 = vrot.lane.b32.xlu0 %v1008, 111
    %v1021 = vpop.permute.xlu0 %1020
    %1022 = vrot.lane.b32.xlu0 %v1009, 111
    %v1023 = vpop.permute.xlu0 %1022
    %1024 = vrot.lane.b32.xlu0 %v1010, 111
    %v1025 = vpop.permute.xlu0 %1024
    %1026 = vrot.lane.b32.xlu0 %v1011, 111
    %v1027 = vpop.permute.xlu0 %1026
    %1028 = vrot.lane.b32.xlu0 %v1012, 111
    %v1029 = vpop.permute.xlu0 %1028
    %1030 = vrot.lane.b32.xlu0 %v1013, 111
    %v1031 = vpop.permute.xlu0 %1030
    %v1032 = vsel %vm483, %v1021, %v1023
    %v1033 = vsel %vm483, %v1023, %v1025
    %v1034 = vsel %vm483, %v1025, %v1027
    %v1035 = vsel %vm483, %v1027, %v1029
    %v1036 = vsel %vm483, %v1029, %v1031
    %1043 = vst [vmem:[#allocation3 + $0x120] sm:$0xff] %v1032
    %1044 = vst [vmem:[#allocation3 + $0x128] sm:$0xff] %v1033
    %1045 = vst [vmem:[#allocation3 + $0x130] sm:$0xff] %v1034
    %1046 = vst [vmem:[#allocation3 + $0x138] sm:$0xff] %v1035
    %1047 = vst [vmem:[#allocation3 + $0x140] sm:$0xff] %v1036
    %1048 = vst.msk [vmem:[#allocation3 + $0x148] sm:$0xff] %vm47, %v1031
    %v1049 = vld [vmem:[#allocation2 + $0x8] sm:$0xff]
    %v1050 = vld [vmem:[#allocation2 + $0x10] sm:$0xff]
    %v1051 = vld [vmem:[#allocation2 + $0x18] sm:$0xff]
    %v1052 = vld [vmem:[#allocation2 + $0x20] sm:$0xff]
    %v1053 = vld [vmem:[#allocation2 + $0x28] sm:$0xff]
    %v1054 = vld [vmem:[#allocation2 + $0x30] sm:$0xff]
    %1061 = vrot.lane.b32.xlu0 %v1049, 110
    %v1062 = vpop.permute.xlu0 %1061
    %1063 = vrot.lane.b32.xlu0 %v1050, 110
    %v1064 = vpop.permute.xlu0 %1063
    %1065 = vrot.lane.b32.xlu0 %v1051, 110
    %v1066 = vpop.permute.xlu0 %1065
    %1067 = vrot.lane.b32.xlu0 %v1052, 110
    %v1068 = vpop.permute.xlu0 %1067
    %1069 = vrot.lane.b32.xlu0 %v1053, 110
    %v1070 = vpop.permute.xlu0 %1069
    %1071 = vrot.lane.b32.xlu0 %v1054, 110
    %v1072 = vpop.permute.xlu0 %1071
    %v1073 = vsel %vm525, %v1062, %v1064
    %v1074 = vsel %vm525, %v1064, %v1066
    %v1075 = vsel %vm525, %v1066, %v1068
    %v1076 = vsel %vm525, %v1068, %v1070
    %v1077 = vsel %vm525, %v1070, %v1072
    %1084 = vst [vmem:[#allocation3 + $0x150] sm:$0xff] %v1073
    %1085 = vst [vmem:[#allocation3 + $0x158] sm:$0xff] %v1074
    %1086 = vst [vmem:[#allocation3 + $0x160] sm:$0xff] %v1075
    %1087 = vst [vmem:[#allocation3 + $0x168] sm:$0xff] %v1076
    %1088 = vst [vmem:[#allocation3 + $0x170] sm:$0xff] %v1077
    %1089 = vst.msk [vmem:[#allocation3 + $0x178] sm:$0xff] %vm47, %v1072
    %v1090 = vld [vmem:[#allocation2 + $0x8] sm:$0xff]
    %v1091 = vld [vmem:[#allocation2 + $0x10] sm:$0xff]
    %v1092 = vld [vmem:[#allocation2 + $0x18] sm:$0xff]
    %v1093 = vld [vmem:[#allocation2 + $0x20] sm:$0xff]
    %v1094 = vld [vmem:[#allocation2 + $0x28] sm:$0xff]
    %v1095 = vld [vmem:[#allocation2 + $0x30] sm:$0xff]
    %1102 = vrot.lane.b32.xlu0 %v1090, 109
    %v1103 = vpop.permute.xlu0 %1102
    %1104 = vrot.lane.b32.xlu0 %v1091, 109
    %v1105 = vpop.permute.xlu0 %1104
    %1106 = vrot.lane.b32.xlu0 %v1092, 109
    %v1107 = vpop.permute.xlu0 %1106
    %1108 = vrot.lane.b32.xlu0 %v1093, 109
    %v1109 = vpop.permute.xlu0 %1108
    %1110 = vrot.lane.b32.xlu0 %v1094, 109
    %v1111 = vpop.permute.xlu0 %1110
    %1112 = vrot.lane.b32.xlu0 %v1095, 109
    %v1113 = vpop.permute.xlu0 %1112
    %v1114 = vsel %vm567, %v1103, %v1105
    %v1115 = vsel %vm567, %v1105, %v1107
    %v1116 = vsel %vm567, %v1107, %v1109
    %v1117 = vsel %vm567, %v1109, %v1111
    %v1118 = vsel %vm567, %v1111, %v1113
    %1125 = vst [vmem:[#allocation3 + $0x180] sm:$0xff] %v1114
    %1126 = vst [vmem:[#allocation3 + $0x188] sm:$0xff] %v1115
    %1127 = vst [vmem:[#allocation3 + $0x190] sm:$0xff] %v1116
    %1128 = vst [vmem:[#allocation3 + $0x198] sm:$0xff] %v1117
    %1129 = vst [vmem:[#allocation3 + $0x1a0] sm:$0xff] %v1118
    %1130 = vst.msk [vmem:[#allocation3 + $0x1a8] sm:$0xff] %vm47, %v1113
    %v1131 = vld [vmem:[#allocation3] sm:$0xff]
    %v1132 = vld [vmem:[#allocation3 + $0x8] sm:$0xff]
    %v1133 = vld [vmem:[#allocation3 + $0x10] sm:$0xff]
    %v1134 = vld [vmem:[#allocation3 + $0x18] sm:$0xff]
    %v1135 = vld [vmem:[#allocation3 + $0x20] sm:$0xff]
    %v1136 = vld [vmem:[#allocation3 + $0x28] sm:$0xff]
    %v1137 = vld [vmem:[#allocation3 + $0x30] sm:$0xff]
    %v1138 = vld [vmem:[#allocation3 + $0x38] sm:$0xff]
    %v1139 = vld [vmem:[#allocation3 + $0x40] sm:$0xff]
    %v1140 = vld [vmem:[#allocation3 + $0x48] sm:$0xff]
    %v1141 = vld [vmem:[#allocation3 + $0x50] sm:$0xff]
    %v1142 = vld [vmem:[#allocation3 + $0x58] sm:$0xff]
    %v1143 = vld [vmem:[#allocation3 + $0x60] sm:$0xff]
    %v1144 = vld [vmem:[#allocation3 + $0x68] sm:$0xff]
    %v1145 = vld [vmem:[#allocation3 + $0x70] sm:$0xff]
    %v1146 = vld [vmem:[#allocation3 + $0x78] sm:$0xff]
    %v1147 = vld [vmem:[#allocation3 + $0x80] sm:$0xff]
    %v1148 = vld [vmem:[#allocation3 + $0x88] sm:$0xff]
    %v1149 = vld [vmem:[#allocation3 + $0x90] sm:$0xff]
    %v1150 = vld [vmem:[#allocation3 + $0x98] sm:$0xff]
    %v1151 = vld [vmem:[#allocation3 + $0xa0] sm:$0xff]
    %v1152 = vld [vmem:[#allocation3 + $0xa8] sm:$0xff]
    %v1153 = vld [vmem:[#allocation3 + $0xb0] sm:$0xff]
    %v1154 = vld [vmem:[#allocation3 + $0xb8] sm:$0xff]
    %v1155 = vld [vmem:[#allocation3 + $0xc0] sm:$0xff]
    %v1156 = vld [vmem:[#allocation3 + $0xc8] sm:$0xff]
    %v1157 = vld [vmem:[#allocation3 + $0xd0] sm:$0xff]
    %v1158 = vld [vmem:[#allocation3 + $0xd8] sm:$0xff]
    %v1159 = vld [vmem:[#allocation3 + $0xe0] sm:$0xff]
    %v1160 = vld [vmem:[#allocation3 + $0xe8] sm:$0xff]
    %v1161 = vld [vmem:[#allocation3 + $0xf0] sm:$0xff]
    %v1162 = vld [vmem:[#allocation3 + $0xf8] sm:$0xff]
    %v1163 = vld [vmem:[#allocation3 + $0x100] sm:$0xff]
    %v1164 = vld [vmem:[#allocation3 + $0x108] sm:$0xff]
    %v1165 = vld [vmem:[#allocation3 + $0x110] sm:$0xff]
    %v1166 = vld [vmem:[#allocation3 + $0x118] sm:$0xff]
    %v1167 = vld [vmem:[#allocation3 + $0x120] sm:$0xff]
    %v1168 = vld [vmem:[#allocation3 + $0x128] sm:$0xff]
    %v1169 = vld [vmem:[#allocation3 + $0x130] sm:$0xff]
    %v1170 = vld [vmem:[#allocation3 + $0x138] sm:$0xff]
    %v1171 = vld [vmem:[#allocation3 + $0x140] sm:$0xff]
    %v1172 = vld [vmem:[#allocation3 + $0x148] sm:$0xff]
    %v1173 = vld [vmem:[#allocation3 + $0x150] sm:$0xff]
    %v1174 = vld [vmem:[#allocation3 + $0x158] sm:$0xff]
    %v1175 = vld [vmem:[#allocation3 + $0x160] sm:$0xff]
    %v1176 = vld [vmem:[#allocation3 + $0x168] sm:$0xff]
    %v1177 = vld [vmem:[#allocation3 + $0x170] sm:$0xff]
    %v1178 = vld [vmem:[#allocation3 + $0x178] sm:$0xff]
    %v1179 = vld [vmem:[#allocation3 + $0x180] sm:$0xff]
    %v1180 = vld [vmem:[#allocation3 + $0x188] sm:$0xff]
    %v1181 = vld [vmem:[#allocation3 + $0x190] sm:$0xff]
    %v1182 = vld [vmem:[#allocation3 + $0x198] sm:$0xff]
    %v1183 = vld [vmem:[#allocation3 + $0x1a0] sm:$0xff]
    %v1184 = vld [vmem:[#allocation3 + $0x1a8] sm:$0xff]
    %1185 = vmatpush.msra.mxu0 0.0
    %1186 = vmatpush.msra.mxu0 0.0
    %1187 = vmatpush.msra.mxu0 0.0
    %1188 = vmatpush.msra.mxu0 0.0
    %1189 = vmatpush.msra.mxu0 0.0
    %1190 = vmatpush.msra.mxu0 0.0
    %1191 = vmatpush.msra.mxu0 0.0
    %1192 = vmatpush.msra.mxu0 %v1179
    %1193 = vmatpush.msra.mxu0 %v1173
    %1194 = vmatpush.msra.mxu0 %v1167
    %1195 = vmatpush.msra.mxu0 %v1161
    %1196 = vmatpush.msra.mxu0 %v1155
    %1197 = vmatpush.msra.mxu0 %v1149
    %1198 = vmatpush.msra.mxu0 %v1143
    %1199 = vmatpush.msra.mxu0 %v1137
    %1200 = vmatpush.msra.mxu0 %v1131
    %1201 = vmatmul.f32.gmra.mxu0 %v646
    %v1202 = vpop.f32.mrf.mxu0
    %v1203 = vadd.f32 %v642, %v1202
    %1204 = vdwg.mxu0
    %1205 = vmatpush.msra.mxu0 0.0
    %1206 = vmatpush.msra.mxu0 0.0
    %1207 = vmatpush.msra.mxu0 0.0
    %1208 = vmatpush.msra.mxu0 0.0
    %1209 = vmatpush.msra.mxu0 0.0
    %1210 = vmatpush.msra.mxu0 0.0
    %1211 = vmatpush.msra.mxu0 0.0
    %1212 = vmatpush.msra.mxu0 %v1180
    %1213 = vmatpush.msra.mxu0 %v1174
    %1214 = vmatpush.msra.mxu0 %v1168
    %1215 = vmatpush.msra.mxu0 %v1162
    %1216 = vmatpush.msra.mxu0 %v1156
    %1217 = vmatpush.msra.mxu0 %v1150
    %1218 = vmatpush.msra.mxu0 %v1144
    %1219 = vmatpush.msra.mxu0 %v1138
    %1220 = vmatpush.msra.mxu0 %v1132
    %1221 = vmatmul.f32.gmra.mxu0 %v646
    %v1222 = vpop.f32.mrf.mxu0
    %v1223 = vadd.f32 %v642, %v1222
    %1224 = vdwg.mxu0
    %1225 = vmatpush.msra.mxu0 0.0
    %1226 = vmatpush.msra.mxu0 0.0
    %1227 = vmatpush.msra.mxu0 0.0
    %1228 = vmatpush.msra.mxu0 0.0
    %1229 = vmatpush.msra.mxu0 0.0
    %1230 = vmatpush.msra.mxu0 0.0
    %1231 = vmatpush.msra.mxu0 0.0
    %1232 = vmatpush.msra.mxu0 %v1181
    %1233 = vmatpush.msra.mxu0 %v1175
    %1234 = vmatpush.msra.mxu0 %v1169
    %1235 = vmatpush.msra.mxu0 %v1163
    %1236 = vmatpush.msra.mxu0 %v1157
    %1237 = vmatpush.msra.mxu0 %v1151
    %1238 = vmatpush.msra.mxu0 %v1145
    %1239 = vmatpush.msra.mxu0 %v1139
    %1240 = vmatpush.msra.mxu0 %v1133
    %1241 = vmatmul.f32.gmra.mxu0 %v646
    %v1242 = vpop.f32.mrf.mxu0
    %v1243 = vadd.f32 %v642, %v1242
    %1244 = vdwg.mxu0
    %1245 = vmatpush.msra.mxu0 0.0
    %1246 = vmatpush.msra.mxu0 0.0
    %1247 = vmatpush.msra.mxu0 0.0
    %1248 = vmatpush.msra.mxu0 0.0
    %1249 = vmatpush.msra.mxu0 0.0
    %1250 = vmatpush.msra.mxu0 0.0
    %1251 = vmatpush.msra.mxu0 0.0
    %1252 = vmatpush.msra.mxu0 %v1182
    %1253 = vmatpush.msra.mxu0 %v1176
    %1254 = vmatpush.msra.mxu0 %v1170
    %1255 = vmatpush.msra.mxu0 %v1164
    %1256 = vmatpush.msra.mxu0 %v1158
    %1257 = vmatpush.msra.mxu0 %v1152
    %1258 = vmatpush.msra.mxu0 %v1146
    %1259 = vmatpush.msra.mxu0 %v1140
    %1260 = vmatpush.msra.mxu0 %v1134
    %1261 = vmatmul.f32.gmra.mxu0 %v646
    %v1262 = vpop.f32.mrf.mxu0
    %v1263 = vadd.f32 %v642, %v1262
    %1264 = vdwg.mxu0
    %1265 = vmatpush.msra.mxu0 0.0
    %1266 = vmatpush.msra.mxu0 0.0
    %1267 = vmatpush.msra.mxu0 0.0
    %1268 = vmatpush.msra.mxu0 0.0
    %1269 = vmatpush.msra.mxu0 0.0
    %1270 = vmatpush.msra.mxu0 0.0
    %1271 = vmatpush.msra.mxu0 0.0
    %1272 = vmatpush.msra.mxu0 %v1183
    %1273 = vmatpush.msra.mxu0 %v1177
    %1274 = vmatpush.msra.mxu0 %v1171
    %1275 = vmatpush.msra.mxu0 %v1165
    %1276 = vmatpush.msra.mxu0 %v1159
    %1277 = vmatpush.msra.mxu0 %v1153
    %1278 = vmatpush.msra.mxu0 %v1147
    %1279 = vmatpush.msra.mxu0 %v1141
    %1280 = vmatpush.msra.mxu0 %v1135
    %1281 = vmatmul.f32.gmra.mxu0 %v646
    %v1282 = vpop.f32.mrf.mxu0
    %v1283 = vadd.f32 %v642, %v1282
    %1284 = vdwg.mxu0
    %1285 = vmatpush.msra.mxu0 0.0
    %1286 = vmatpush.msra.mxu0 0.0
    %1287 = vmatpush.msra.mxu0 0.0
    %1288 = vmatpush.msra.mxu0 0.0
    %1289 = vmatpush.msra.mxu0 0.0
    %1290 = vmatpush.msra.mxu0 0.0
    %1291 = vmatpush.msra.mxu0 0.0
    %1292 = vmatpush.msra.mxu0 %v1184
    %1293 = vmatpush.msra.mxu0 %v1178
    %1294 = vmatpush.msra.mxu0 %v1172
    %1295 = vmatpush.msra.mxu0 %v1166
    %1296 = vmatpush.msra.mxu0 %v1160
    %1297 = vmatpush.msra.mxu0 %v1154
    %1298 = vmatpush.msra.mxu0 %v1148
    %1299 = vmatpush.msra.mxu0 %v1142
    %1300 = vmatpush.msra.mxu0 %v1136
    %1301 = vmatmul.f32.gmra.mxu0 %v646
    %v1302 = vpop.f32.mrf.mxu0
    %v1303 = vadd.f32 %v642, %v1302
    %1304 = vdwg.mxu0
    %v1305 = vmax.f32 %v1203, 0.0
    %v1306 = vmax.f32 %v1223, 0.0
    %v1307 = vmax.f32 %v1243, 0.0
    %v1308 = vmax.f32 %v1263, 0.0
    %v1309 = vmax.f32 %v1283, 0.0
    %v1310 = vmax.f32 %v1303, 0.0
    %v1311 = vmul.f32 %v1305, %v212
    %v1312 = vmul.f32 %v1306, %v213
    %v1313 = vmul.f32 %v1307, %v214
    %v1314 = vmul.f32 %v1308, %v215
    %v1315 = vmul.f32 %v1309, %v216
    %v1316 = vmul.f32 %v1310, %v217
    %v1317 = vadd.f32 %v224, %v1311
    %v1318 = vadd.f32 %v225, %v1312
    %v1319 = vadd.f32 %v226, %v1313
    %v1320 = vadd.f32 %v227, %v1314
    %v1321 = vadd.f32 %v228, %v1315
    %v1322 = vadd.f32 %v229, %v1316
    %1323 = vst [vmem:[#allocation2 + $0x8] sm:$0xff] %v1317
    %1324 = vst [vmem:[#allocation2 + $0x10] sm:$0xff] %v1318
    %1325 = vst [vmem:[#allocation2 + $0x18] sm:$0xff] %v1319
    %1326 = vst [vmem:[#allocation2 + $0x20] sm:$0xff] %v1320
    %1327 = vst [vmem:[#allocation2 + $0x28] sm:$0xff] %v1321
    %1328 = vst.msk [vmem:[#allocation2 + $0x30] sm:$0xff] %vm47, %v1322
    %v1329 = vld [vmem:[#allocation2] sm:$0xff]
    %v1330 = vld [vmem:[#allocation2 + $0x8] sm:$0xff]
    %v1331 = vld [vmem:[#allocation2 + $0x10] sm:$0xff]
    %v1332 = vld [vmem:[#allocation2 + $0x18] sm:$0xff]
    %v1333 = vld [vmem:[#allocation2 + $0x20] sm:$0xff]
    %v1334 = vld [vmem:[#allocation2 + $0x28] sm:$0xff]
    %1341 = vrot.lane.b32.xlu0 %v1329, 19
    %v1342 = vpop.permute.xlu0 %1341
    %1343 = vrot.lane.b32.xlu0 %v1330, 19
    %v1344 = vpop.permute.xlu0 %1343
    %1345 = vrot.lane.b32.xlu0 %v1331, 19
    %v1346 = vpop.permute.xlu0 %1345
    %1347 = vrot.lane.b32.xlu0 %v1332, 19
    %v1348 = vpop.permute.xlu0 %1347
    %1349 = vrot.lane.b32.xlu0 %v1333, 19
    %v1350 = vpop.permute.xlu0 %1349
    %1351 = vrot.lane.b32.xlu0 %v1334, 19
    %v1352 = vpop.permute.xlu0 %1351
    %v1353 = vsel %vm262, %v1342, %v1344
    %v1354 = vsel %vm262, %v1344, %v1346
    %v1355 = vsel %vm262, %v1346, %v1348
    %v1356 = vsel %vm262, %v1348, %v1350
    %v1357 = vsel %vm262, %v1350, %v1352
    %1364 = vst [vmem:[#allocation3] sm:$0xff] %v1353
    %1365 = vst [vmem:[#allocation3 + $0x8] sm:$0xff] %v1354
    %1366 = vst [vmem:[#allocation3 + $0x10] sm:$0xff] %v1355
    %1367 = vst [vmem:[#allocation3 + $0x18] sm:$0xff] %v1356
    %1368 = vst [vmem:[#allocation3 + $0x20] sm:$0xff] %v1357
    %1369 = vst.msk [vmem:[#allocation3 + $0x28] sm:$0xff] %vm47, %v1352
    %v1370 = vld [vmem:[#allocation2] sm:$0xff]
    %v1371 = vld [vmem:[#allocation2 + $0x8] sm:$0xff]
    %v1372 = vld [vmem:[#allocation2 + $0x10] sm:$0xff]
    %v1373 = vld [vmem:[#allocation2 + $0x18] sm:$0xff]
    %v1374 = vld [vmem:[#allocation2 + $0x20] sm:$0xff]
    %v1375 = vld [vmem:[#allocation2 + $0x28] sm:$0xff]
    %1382 = vrot.lane.b32.xlu0 %v1370, 18
    %v1383 = vpop.permute.xlu0 %1382
    %1384 = vrot.lane.b32.xlu0 %v1371, 18
    %v1385 = vpop.permute.xlu0 %1384
    %1386 = vrot.lane.b32.xlu0 %v1372, 18
    %v1387 = vpop.permute.xlu0 %1386
    %1388 = vrot.lane.b32.xlu0 %v1373, 18
    %v1389 = vpop.permute.xlu0 %1388
    %1390 = vrot.lane.b32.xlu0 %v1374, 18
    %v1391 = vpop.permute.xlu0 %1390
    %1392 = vrot.lane.b32.xlu0 %v1375, 18
    %v1393 = vpop.permute.xlu0 %1392
    %v1394 = vsel %vm304, %v1383, %v1385
    %v1395 = vsel %vm304, %v1385, %v1387
    %v1396 = vsel %vm304, %v1387, %v1389
    %v1397 = vsel %vm304, %v1389, %v1391
    %v1398 = vsel %vm304, %v1391, %v1393
    %1405 = vst [vmem:[#allocation3 + $0x30] sm:$0xff] %v1394
    %1406 = vst [vmem:[#allocation3 + $0x38] sm:$0xff] %v1395
    %1407 = vst [vmem:[#allocation3 + $0x40] sm:$0xff] %v1396
    %1408 = vst [vmem:[#allocation3 + $0x48] sm:$0xff] %v1397
    %1409 = vst [vmem:[#allocation3 + $0x50] sm:$0xff] %v1398
    %1410 = vst.msk [vmem:[#allocation3 + $0x58] sm:$0xff] %vm47, %v1393
    %v1411 = vld [vmem:[#allocation2] sm:$0xff]
    %v1412 = vld [vmem:[#allocation2 + $0x8] sm:$0xff]
    %v1413 = vld [vmem:[#allocation2 + $0x10] sm:$0xff]
    %v1414 = vld [vmem:[#allocation2 + $0x18] sm:$0xff]
    %v1415 = vld [vmem:[#allocation2 + $0x20] sm:$0xff]
    %v1416 = vld [vmem:[#allocation2 + $0x28] sm:$0xff]
    %1423 = vrot.lane.b32.xlu0 %v1411, 17
    %v1424 = vpop.permute.xlu0 %1423
    %1425 = vrot.lane.b32.xlu0 %v1412, 17
    %v1426 = vpop.permute.xlu0 %1425
    %1427 = vrot.lane.b32.xlu0 %v1413, 17
    %v1428 = vpop.permute.xlu0 %1427
    %1429 = vrot.lane.b32.xlu0 %v1414, 17
    %v1430 = vpop.permute.xlu0 %1429
    %1431 = vrot.lane.b32.xlu0 %v1415, 17
    %v1432 = vpop.permute.xlu0 %1431
    %1433 = vrot.lane.b32.xlu0 %v1416, 17
    %v1434 = vpop.permute.xlu0 %1433
    %v1435 = vsel %vm346, %v1424, %v1426
    %v1436 = vsel %vm346, %v1426, %v1428
    %v1437 = vsel %vm346, %v1428, %v1430
    %v1438 = vsel %vm346, %v1430, %v1432
    %v1439 = vsel %vm346, %v1432, %v1434
    %1446 = vst [vmem:[#allocation3 + $0x60] sm:$0xff] %v1435
    %1447 = vst [vmem:[#allocation3 + $0x68] sm:$0xff] %v1436
    %1448 = vst [vmem:[#allocation3 + $0x70] sm:$0xff] %v1437
    %1449 = vst [vmem:[#allocation3 + $0x78] sm:$0xff] %v1438
    %1450 = vst [vmem:[#allocation3 + $0x80] sm:$0xff] %v1439
    %1451 = vst.msk [vmem:[#allocation3 + $0x88] sm:$0xff] %vm47, %v1434
    %v1452 = vld [vmem:[#allocation2] sm:$0xff]
    %v1453 = vld [vmem:[#allocation2 + $0x8] sm:$0xff]
    %v1454 = vld [vmem:[#allocation2 + $0x10] sm:$0xff]
    %v1455 = vld [vmem:[#allocation2 + $0x18] sm:$0xff]
    %v1456 = vld [vmem:[#allocation2 + $0x20] sm:$0xff]
    %v1457 = vld [vmem:[#allocation2 + $0x28] sm:$0xff]
    %v1458 = vld [vmem:[#allocation2 + $0x30] sm:$0xff]
    %1466 = vrot.lane.b32.xlu0 %v1452, 1
    %v1467 = vpop.permute.xlu0 %1466
    %1468 = vrot.lane.b32.xlu0 %v1453, 1
    %v1469 = vpop.permute.xlu0 %1468
    %1470 = vrot.lane.b32.xlu0 %v1454, 1
    %v1471 = vpop.permute.xlu0 %1470
    %1472 = vrot.lane.b32.xlu0 %v1455, 1
    %v1473 = vpop.permute.xlu0 %1472
    %1474 = vrot.lane.b32.xlu0 %v1456, 1
    %v1475 = vpop.permute.xlu0 %1474
    %1476 = vrot.lane.b32.xlu0 %v1457, 1
    %v1477 = vpop.permute.xlu0 %1476
    %1478 = vrot.lane.b32.xlu0 %v1458, 1
    %v1479 = vpop.permute.xlu0 %1478
    %v1480 = vsel %vm392, %v1467, %v1469
    %v1481 = vsel %vm392, %v1469, %v1471
    %v1482 = vsel %vm392, %v1471, %v1473
    %v1483 = vsel %vm392, %v1473, %v1475
    %v1484 = vsel %vm392, %v1475, %v1477
    %v1485 = vsel %vm392, %v1477, %v1479
    %1492 = vst [vmem:[#allocation3 + $0x90] sm:$0xff] %v1480
    %1493 = vst [vmem:[#allocation3 + $0x98] sm:$0xff] %v1481
    %1494 = vst [vmem:[#allocation3 + $0xa0] sm:$0xff] %v1482
    %1495 = vst [vmem:[#allocation3 + $0xa8] sm:$0xff] %v1483
    %1496 = vst [vmem:[#allocation3 + $0xb0] sm:$0xff] %v1484
    %1497 = vst.msk [vmem:[#allocation3 + $0xb8] sm:$0xff] %vm47, %v1485
    %1498 = vst [vmem:[#allocation3 + $0xc0] sm:$0xff] %v1317
    %1499 = vst [vmem:[#allocation3 + $0xc8] sm:$0xff] %v1318
    %1500 = vst [vmem:[#allocation3 + $0xd0] sm:$0xff] %v1319
    %1501 = vst [vmem:[#allocation3 + $0xd8] sm:$0xff] %v1320
    %1502 = vst [vmem:[#allocation3 + $0xe0] sm:$0xff] %v1321
    %1503 = vst.msk [vmem:[#allocation3 + $0xe8] sm:$0xff] %vm47, %v1322
    %v1504 = vld [vmem:[#allocation2 + $0x8] sm:$0xff]
    %v1505 = vld [vmem:[#allocation2 + $0x10] sm:$0xff]
    %v1506 = vld [vmem:[#allocation2 + $0x18] sm:$0xff]
    %v1507 = vld [vmem:[#allocation2 + $0x20] sm:$0xff]
    %v1508 = vld [vmem:[#allocation2 + $0x28] sm:$0xff]
    %v1509 = vld [vmem:[#allocation2 + $0x30] sm:$0xff]
    %1516 = vrot.lane.b32.xlu0 %v1504, 127
    %v1517 = vpop.permute.xlu0 %1516
    %1518 = vrot.lane.b32.xlu0 %v1505, 127
    %v1519 = vpop.permute.xlu0 %1518
    %1520 = vrot.lane.b32.xlu0 %v1506, 127
    %v1521 = vpop.permute.xlu0 %1520
    %1522 = vrot.lane.b32.xlu0 %v1507, 127
    %v1523 = vpop.permute.xlu0 %1522
    %1524 = vrot.lane.b32.xlu0 %v1508, 127
    %v1525 = vpop.permute.xlu0 %1524
    %1526 = vrot.lane.b32.xlu0 %v1509, 127
    %v1527 = vpop.permute.xlu0 %1526
    %v1528 = vsel %vm441, %v1517, %v1519
    %v1529 = vsel %vm441, %v1519, %v1521
    %v1530 = vsel %vm441, %v1521, %v1523
    %v1531 = vsel %vm441, %v1523, %v1525
    %v1532 = vsel %vm441, %v1525, %v1527
    %1539 = vst [vmem:[#allocation3 + $0xf0] sm:$0xff] %v1528
    %1540 = vst [vmem:[#allocation3 + $0xf8] sm:$0xff] %v1529
    %1541 = vst [vmem:[#allocation3 + $0x100] sm:$0xff] %v1530
    %1542 = vst [vmem:[#allocation3 + $0x108] sm:$0xff] %v1531
    %1543 = vst [vmem:[#allocation3 + $0x110] sm:$0xff] %v1532
    %1544 = vst.msk [vmem:[#allocation3 + $0x118] sm:$0xff] %vm47, %v1527
    %v1545 = vld [vmem:[#allocation2 + $0x8] sm:$0xff]
    %v1546 = vld [vmem:[#allocation2 + $0x10] sm:$0xff]
    %v1547 = vld [vmem:[#allocation2 + $0x18] sm:$0xff]
    %v1548 = vld [vmem:[#allocation2 + $0x20] sm:$0xff]
    %v1549 = vld [vmem:[#allocation2 + $0x28] sm:$0xff]
    %v1550 = vld [vmem:[#allocation2 + $0x30] sm:$0xff]
    %1557 = vrot.lane.b32.xlu0 %v1545, 111
    %v1558 = vpop.permute.xlu0 %1557
    %1559 = vrot.lane.b32.xlu0 %v1546, 111
    %v1560 = vpop.permute.xlu0 %1559
    %1561 = vrot.lane.b32.xlu0 %v1547, 111
    %v1562 = vpop.permute.xlu0 %1561
    %1563 = vrot.lane.b32.xlu0 %v1548, 111
    %v1564 = vpop.permute.xlu0 %1563
    %1565 = vrot.lane.b32.xlu0 %v1549, 111
    %v1566 = vpop.permute.xlu0 %1565
    %1567 = vrot.lane.b32.xlu0 %v1550, 111
    %v1568 = vpop.permute.xlu0 %1567
    %v1569 = vsel %vm483, %v1558, %v1560
    %v1570 = vsel %vm483, %v1560, %v1562
    %v1571 = vsel %vm483, %v1562, %v1564
    %v1572 = vsel %vm483, %v1564, %v1566
    %v1573 = vsel %vm483, %v1566, %v1568
    %1580 = vst [vmem:[#allocation3 + $0x120] sm:$0xff] %v1569
    %1581 = vst [vmem:[#allocation3 + $0x128] sm:$0xff] %v1570
    %1582 = vst [vmem:[#allocation3 + $0x130] sm:$0xff] %v1571
    %1583 = vst [vmem:[#allocation3 + $0x138] sm:$0xff] %v1572
    %1584 = vst [vmem:[#allocation3 + $0x140] sm:$0xff] %v1573
    %1585 = vst.msk [vmem:[#allocation3 + $0x148] sm:$0xff] %vm47, %v1568
    %v1586 = vld [vmem:[#allocation2 + $0x8] sm:$0xff]
    %v1587 = vld [vmem:[#allocation2 + $0x10] sm:$0xff]
    %v1588 = vld [vmem:[#allocation2 + $0x18] sm:$0xff]
    %v1589 = vld [vmem:[#allocation2 + $0x20] sm:$0xff]
    %v1590 = vld [vmem:[#allocation2 + $0x28] sm:$0xff]
    %v1591 = vld [vmem:[#allocation2 + $0x30] sm:$0xff]
    %1598 = vrot.lane.b32.xlu0 %v1586, 110
    %v1599 = vpop.permute.xlu0 %1598
    %1600 = vrot.lane.b32.xlu0 %v1587, 110
    %v1601 = vpop.permute.xlu0 %1600
    %1602 = vrot.lane.b32.xlu0 %v1588, 110
    %v1603 = vpop.permute.xlu0 %1602
    %1604 = vrot.lane.b32.xlu0 %v1589, 110
    %v1605 = vpop.permute.xlu0 %1604
    %1606 = vrot.lane.b32.xlu0 %v1590, 110
    %v1607 = vpop.permute.xlu0 %1606
    %1608 = vrot.lane.b32.xlu0 %v1591, 110
    %v1609 = vpop.permute.xlu0 %1608
    %v1610 = vsel %vm525, %v1599, %v1601
    %v1611 = vsel %vm525, %v1601, %v1603
    %v1612 = vsel %vm525, %v1603, %v1605
    %v1613 = vsel %vm525, %v1605, %v1607
    %v1614 = vsel %vm525, %v1607, %v1609
    %1621 = vst [vmem:[#allocation3 + $0x150] sm:$0xff] %v1610
    %1622 = vst [vmem:[#allocation3 + $0x158] sm:$0xff] %v1611
    %1623 = vst [vmem:[#allocation3 + $0x160] sm:$0xff] %v1612
    %1624 = vst [vmem:[#allocation3 + $0x168] sm:$0xff] %v1613
    %1625 = vst [vmem:[#allocation3 + $0x170] sm:$0xff] %v1614
    %1626 = vst.msk [vmem:[#allocation3 + $0x178] sm:$0xff] %vm47, %v1609
    %v1627 = vld [vmem:[#allocation2 + $0x8] sm:$0xff]
    %v1628 = vld [vmem:[#allocation2 + $0x10] sm:$0xff]
    %v1629 = vld [vmem:[#allocation2 + $0x18] sm:$0xff]
    %v1630 = vld [vmem:[#allocation2 + $0x20] sm:$0xff]
    %v1631 = vld [vmem:[#allocation2 + $0x28] sm:$0xff]
    %v1632 = vld [vmem:[#allocation2 + $0x30] sm:$0xff]
    %1639 = vrot.lane.b32.xlu0 %v1627, 109
    %v1640 = vpop.permute.xlu0 %1639
    %1641 = vrot.lane.b32.xlu0 %v1628, 109
    %v1642 = vpop.permute.xlu0 %1641
    %1643 = vrot.lane.b32.xlu0 %v1629, 109
    %v1644 = vpop.permute.xlu0 %1643
    %1645 = vrot.lane.b32.xlu0 %v1630, 109
    %v1646 = vpop.permute.xlu0 %1645
    %1647 = vrot.lane.b32.xlu0 %v1631, 109
    %v1648 = vpop.permute.xlu0 %1647
    %1649 = vrot.lane.b32.xlu0 %v1632, 109
    %v1650 = vpop.permute.xlu0 %1649
    %v1651 = vsel %vm567, %v1640, %v1642
    %v1652 = vsel %vm567, %v1642, %v1644
    %v1653 = vsel %vm567, %v1644, %v1646
    %v1654 = vsel %vm567, %v1646, %v1648
    %v1655 = vsel %vm567, %v1648, %v1650
    %1662 = vst [vmem:[#allocation3 + $0x180] sm:$0xff] %v1651
    %1663 = vst [vmem:[#allocation3 + $0x188] sm:$0xff] %v1652
    %1664 = vst [vmem:[#allocation3 + $0x190] sm:$0xff] %v1653
    %1665 = vst [vmem:[#allocation3 + $0x198] sm:$0xff] %v1654
    %1666 = vst [vmem:[#allocation3 + $0x1a0] sm:$0xff] %v1655
    %1667 = vst.msk [vmem:[#allocation3 + $0x1a8] sm:$0xff] %vm47, %v1650
    %v1668 = vld [vmem:[#allocation3] sm:$0xff]
    %v1669 = vld [vmem:[#allocation3 + $0x8] sm:$0xff]
    %v1670 = vld [vmem:[#allocation3 + $0x10] sm:$0xff]
    %v1671 = vld [vmem:[#allocation3 + $0x18] sm:$0xff]
    %v1672 = vld [vmem:[#allocation3 + $0x20] sm:$0xff]
    %v1673 = vld [vmem:[#allocation3 + $0x28] sm:$0xff]
    %v1674 = vld [vmem:[#allocation3 + $0x30] sm:$0xff]
    %v1675 = vld [vmem:[#allocation3 + $0x38] sm:$0xff]
    %v1676 = vld [vmem:[#allocation3 + $0x40] sm:$0xff]
    %v1677 = vld [vmem:[#allocation3 + $0x48] sm:$0xff]
    %v1678 = vld [vmem:[#allocation3 + $0x50] sm:$0xff]
    %v1679 = vld [vmem:[#allocation3 + $0x58] sm:$0xff]
    %v1680 = vld [vmem:[#allocation3 + $0x60] sm:$0xff]
    %v1681 = vld [vmem:[#allocation3 + $0x68] sm:$0xff]
    %v1682 = vld [vmem:[#allocation3 + $0x70] sm:$0xff]
    %v1683 = vld [vmem:[#allocation3 + $0x78] sm:$0xff]
    %v1684 = vld [vmem:[#allocation3 + $0x80] sm:$0xff]
    %v1685 = vld [vmem:[#allocation3 + $0x88] sm:$0xff]
    %v1686 = vld [vmem:[#allocation3 + $0x90] sm:$0xff]
    %v1687 = vld [vmem:[#allocation3 + $0x98] sm:$0xff]
    %v1688 = vld [vmem:[#allocation3 + $0xa0] sm:$0xff]
    %v1689 = vld [vmem:[#allocation3 + $0xa8] sm:$0xff]
    %v1690 = vld [vmem:[#allocation3 + $0xb0] sm:$0xff]
    %v1691 = vld [vmem:[#allocation3 + $0xb8] sm:$0xff]
    %v1692 = vld [vmem:[#allocation3 + $0xc0] sm:$0xff]
    %v1693 = vld [vmem:[#allocation3 + $0xc8] sm:$0xff]
    %v1694 = vld [vmem:[#allocation3 + $0xd0] sm:$0xff]
    %v1695 = vld [vmem:[#allocation3 + $0xd8] sm:$0xff]
    %v1696 = vld [vmem:[#allocation3 + $0xe0] sm:$0xff]
    %v1697 = vld [vmem:[#allocation3 + $0xe8] sm:$0xff]
    %v1698 = vld [vmem:[#allocation3 + $0xf0] sm:$0xff]
    %v1699 = vld [vmem:[#allocation3 + $0xf8] sm:$0xff]
    %v1700 = vld [vmem:[#allocation3 + $0x100] sm:$0xff]
    %v1701 = vld [vmem:[#allocation3 + $0x108] sm:$0xff]
    %v1702 = vld [vmem:[#allocation3 + $0x110] sm:$0xff]
    %v1703 = vld [vmem:[#allocation3 + $0x118] sm:$0xff]
    %v1704 = vld [vmem:[#allocation3 + $0x120] sm:$0xff]
    %v1705 = vld [vmem:[#allocation3 + $0x128] sm:$0xff]
    %v1706 = vld [vmem:[#allocation3 + $0x130] sm:$0xff]
    %v1707 = vld [vmem:[#allocation3 + $0x138] sm:$0xff]
    %v1708 = vld [vmem:[#allocation3 + $0x140] sm:$0xff]
    %v1709 = vld [vmem:[#allocation3 + $0x148] sm:$0xff]
    %v1710 = vld [vmem:[#allocation3 + $0x150] sm:$0xff]
    %v1711 = vld [vmem:[#allocation3 + $0x158] sm:$0xff]
    %v1712 = vld [vmem:[#allocation3 + $0x160] sm:$0xff]
    %v1713 = vld [vmem:[#allocation3 + $0x168] sm:$0xff]
    %v1714 = vld [vmem:[#allocation3 + $0x170] sm:$0xff]
    %v1715 = vld [vmem:[#allocation3 + $0x178] sm:$0xff]
    %v1716 = vld [vmem:[#allocation3 + $0x180] sm:$0xff]
    %v1717 = vld [vmem:[#allocation3 + $0x188] sm:$0xff]
    %v1718 = vld [vmem:[#allocation3 + $0x190] sm:$0xff]
    %v1719 = vld [vmem:[#allocation3 + $0x198] sm:$0xff]
    %v1720 = vld [vmem:[#allocation3 + $0x1a0] sm:$0xff]
    %v1721 = vld [vmem:[#allocation3 + $0x1a8] sm:$0xff]
    %1722 = vmatpush.msra.mxu0 0.0
    %1723 = vmatpush.msra.mxu0 0.0
    %1724 = vmatpush.msra.mxu0 0.0
    %1725 = vmatpush.msra.mxu0 0.0
    %1726 = vmatpush.msra.mxu0 0.0
    %1727 = vmatpush.msra.mxu0 0.0
    %1728 = vmatpush.msra.mxu0 0.0
    %1729 = vmatpush.msra.mxu0 %v1716
    %1730 = vmatpush.msra.mxu0 %v1710
    %1731 = vmatpush.msra.mxu0 %v1704
    %1732 = vmatpush.msra.mxu0 %v1698
    %1733 = vmatpush.msra.mxu0 %v1692
    %1734 = vmatpush.msra.mxu0 %v1686
    %1735 = vmatpush.msra.mxu0 %v1680
    %1736 = vmatpush.msra.mxu0 %v1674
    %1737 = vmatpush.msra.mxu0 %v1668
    %1738 = vmatmul.f32.gmra.mxu0 %v646
    %v1739 = vpop.f32.mrf.mxu0
    %v1740 = vadd.f32 %v642, %v1739
    %1741 = vdwg.mxu0
    %1742 = vmatpush.msra.mxu0 0.0
    %1743 = vmatpush.msra.mxu0 0.0
    %1744 = vmatpush.msra.mxu0 0.0
    %1745 = vmatpush.msra.mxu0 0.0
    %1746 = vmatpush.msra.mxu0 0.0
    %1747 = vmatpush.msra.mxu0 0.0
    %1748 = vmatpush.msra.mxu0 0.0
    %1749 = vmatpush.msra.mxu0 %v1717
    %1750 = vmatpush.msra.mxu0 %v1711
    %1751 = vmatpush.msra.mxu0 %v1705
    %1752 = vmatpush.msra.mxu0 %v1699
    %1753 = vmatpush.msra.mxu0 %v1693
    %1754 = vmatpush.msra.mxu0 %v1687
    %1755 = vmatpush.msra.mxu0 %v1681
    %1756 = vmatpush.msra.mxu0 %v1675
    %1757 = vmatpush.msra.mxu0 %v1669
    %1758 = vmatmul.f32.gmra.mxu0 %v646
    %v1759 = vpop.f32.mrf.mxu0
    %v1760 = vadd.f32 %v642, %v1759
    %1761 = vdwg.mxu0
    %1762 = vmatpush.msra.mxu0 0.0
    %1763 = vmatpush.msra.mxu0 0.0
    %1764 = vmatpush.msra.mxu0 0.0
    %1765 = vmatpush.msra.mxu0 0.0
    %1766 = vmatpush.msra.mxu0 0.0
    %1767 = vmatpush.msra.mxu0 0.0
    %1768 = vmatpush.msra.mxu0 0.0
    %1769 = vmatpush.msra.mxu0 %v1718
    %1770 = vmatpush.msra.mxu0 %v1712
    %1771 = vmatpush.msra.mxu0 %v1706
    %1772 = vmatpush.msra.mxu0 %v1700
    %1773 = vmatpush.msra.mxu0 %v1694
    %1774 = vmatpush.msra.mxu0 %v1688
    %1775 = vmatpush.msra.mxu0 %v1682
    %1776 = vmatpush.msra.mxu0 %v1676
    %1777 = vmatpush.msra.mxu0 %v1670
    %1778 = vmatmul.f32.gmra.mxu0 %v646
    %v1779 = vpop.f32.mrf.mxu0
    %v1780 = vadd.f32 %v642, %v1779
    %1781 = vdwg.mxu0
    %1782 = vmatpush.msra.mxu0 0.0
    %1783 = vmatpush.msra.mxu0 0.0
    %1784 = vmatpush.msra.mxu0 0.0
    %1785 = vmatpush.msra.mxu0 0.0
    %1786 = vmatpush.msra.mxu0 0.0
    %1787 = vmatpush.msra.mxu0 0.0
    %1788 = vmatpush.msra.mxu0 0.0
    %1789 = vmatpush.msra.mxu0 %v1719
    %1790 = vmatpush.msra.mxu0 %v1713
    %1791 = vmatpush.msra.mxu0 %v1707
    %1792 = vmatpush.msra.mxu0 %v1701
    %1793 = vmatpush.msra.mxu0 %v1695
    %1794 = vmatpush.msra.mxu0 %v1689
    %1795 = vmatpush.msra.mxu0 %v1683
    %1796 = vmatpush.msra.mxu0 %v1677
    %1797 = vmatpush.msra.mxu0 %v1671
    %1798 = vmatmul.f32.gmra.mxu0 %v646
    %v1799 = vpop.f32.mrf.mxu0
    %v1800 = vadd.f32 %v642, %v1799
    %1801 = vdwg.mxu0
    %1802 = vmatpush.msra.mxu0 0.0
    %1803 = vmatpush.msra.mxu0 0.0
    %1804 = vmatpush.msra.mxu0 0.0
    %1805 = vmatpush.msra.mxu0 0.0
    %1806 = vmatpush.msra.mxu0 0.0
    %1807 = vmatpush.msra.mxu0 0.0
    %1808 = vmatpush.msra.mxu0 0.0
    %1809 = vmatpush.msra.mxu0 %v1720
    %1810 = vmatpush.msra.mxu0 %v1714
    %1811 = vmatpush.msra.mxu0 %v1708
    %1812 = vmatpush.msra.mxu0 %v1702
    %1813 = vmatpush.msra.mxu0 %v1696
    %1814 = vmatpush.msra.mxu0 %v1690
    %1815 = vmatpush.msra.mxu0 %v1684
    %1816 = vmatpush.msra.mxu0 %v1678
    %1817 = vmatpush.msra.mxu0 %v1672
    %1818 = vmatmul.f32.gmra.mxu0 %v646
    %v1819 = vpop.f32.mrf.mxu0
    %v1820 = vadd.f32 %v642, %v1819
    %1821 = vdwg.mxu0
    %1822 = vmatpush.msra.mxu0 0.0
    %1823 = vmatpush.msra.mxu0 0.0
    %1824 = vmatpush.msra.mxu0 0.0
    %1825 = vmatpush.msra.mxu0 0.0
    %1826 = vmatpush.msra.mxu0 0.0
    %1827 = vmatpush.msra.mxu0 0.0
    %1828 = vmatpush.msra.mxu0 0.0
    %1829 = vmatpush.msra.mxu0 %v1721
    %1830 = vmatpush.msra.mxu0 %v1715
    %1831 = vmatpush.msra.mxu0 %v1709
    %1832 = vmatpush.msra.mxu0 %v1703
    %1833 = vmatpush.msra.mxu0 %v1697
    %1834 = vmatpush.msra.mxu0 %v1691
    %1835 = vmatpush.msra.mxu0 %v1685
    %1836 = vmatpush.msra.mxu0 %v1679
    %1837 = vmatpush.msra.mxu0 %v1673
    %1838 = vmatmul.f32.gmra.mxu0 %v646
    %v1839 = vpop.f32.mrf.mxu0
    %v1840 = vadd.f32 %v642, %v1839
    %1841 = vdwg.mxu0
    %v1842 = vmax.f32 %v1740, 0.0
    %v1843 = vmax.f32 %v1760, 0.0
    %v1844 = vmax.f32 %v1780, 0.0
    %v1845 = vmax.f32 %v1800, 0.0
    %v1846 = vmax.f32 %v1820, 0.0
    %v1847 = vmax.f32 %v1840, 0.0
    %v1848 = vmul.f32 %v1842, %v212
    %v1849 = vmul.f32 %v1843, %v213
    %v1850 = vmul.f32 %v1844, %v214
    %v1851 = vmul.f32 %v1845, %v215
    %v1852 = vmul.f32 %v1846, %v216
    %v1853 = vmul.f32 %v1847, %v217
    %v1854 = vld [vmem:[%s6] sm:$0xff]
    %v1855 = vld [vmem:[%s7] sm:$0xff]
    %1856 = vst [vmem:[#allocation2 + $0x8] sm:$0xff] %v1848
    %1857 = vst [vmem:[#allocation2 + $0x10] sm:$0xff] %v1849
    %1858 = vst [vmem:[#allocation2 + $0x18] sm:$0xff] %v1850
    %1859 = vst [vmem:[#allocation2 + $0x20] sm:$0xff] %v1851
    %1860 = vst [vmem:[#allocation2 + $0x28] sm:$0xff] %v1852
    %1861 = vst.msk [vmem:[#allocation2 + $0x30] sm:$0xff] %vm47, %v1853
    %v1862 = vld [vmem:[#allocation2] sm:$0xff]
    %v1863 = vld [vmem:[#allocation2 + $0x8] sm:$0xff]
    %v1864 = vld [vmem:[#allocation2 + $0x10] sm:$0xff]
    %v1865 = vld [vmem:[#allocation2 + $0x18] sm:$0xff]
    %v1866 = vld [vmem:[#allocation2 + $0x20] sm:$0xff]
    %v1867 = vld [vmem:[#allocation2 + $0x28] sm:$0xff]
    %1874 = vrot.lane.b32.xlu0 %v1862, 19
    %v1875 = vpop.permute.xlu0 %1874
    %1876 = vrot.lane.b32.xlu0 %v1863, 19
    %v1877 = vpop.permute.xlu0 %1876
    %1878 = vrot.lane.b32.xlu0 %v1864, 19
    %v1879 = vpop.permute.xlu0 %1878
    %1880 = vrot.lane.b32.xlu0 %v1865, 19
    %v1881 = vpop.permute.xlu0 %1880
    %1882 = vrot.lane.b32.xlu0 %v1866, 19
    %v1883 = vpop.permute.xlu0 %1882
    %1884 = vrot.lane.b32.xlu0 %v1867, 19
    %v1885 = vpop.permute.xlu0 %1884
    %v1886 = vsel %vm262, %v1875, %v1877
    %v1887 = vsel %vm262, %v1877, %v1879
    %v1888 = vsel %vm262, %v1879, %v1881
    %v1889 = vsel %vm262, %v1881, %v1883
    %v1890 = vsel %vm262, %v1883, %v1885
    %1897 = vst [vmem:[#allocation3] sm:$0xff] %v1886
    %1898 = vst [vmem:[#allocation3 + $0x8] sm:$0xff] %v1887
    %1899 = vst [vmem:[#allocation3 + $0x10] sm:$0xff] %v1888
    %1900 = vst [vmem:[#allocation3 + $0x18] sm:$0xff] %v1889
    %1901 = vst [vmem:[#allocation3 + $0x20] sm:$0xff] %v1890
    %1902 = vst.msk [vmem:[#allocation3 + $0x28] sm:$0xff] %vm47, %v1885
    %v1903 = vld [vmem:[#allocation2] sm:$0xff]
    %v1904 = vld [vmem:[#allocation2 + $0x8] sm:$0xff]
    %v1905 = vld [vmem:[#allocation2 + $0x10] sm:$0xff]
    %v1906 = vld [vmem:[#allocation2 + $0x18] sm:$0xff]
    %v1907 = vld [vmem:[#allocation2 + $0x20] sm:$0xff]
    %v1908 = vld [vmem:[#allocation2 + $0x28] sm:$0xff]
    %1915 = vrot.lane.b32.xlu0 %v1903, 18
    %v1916 = vpop.permute.xlu0 %1915
    %1917 = vrot.lane.b32.xlu0 %v1904, 18
    %v1918 = vpop.permute.xlu0 %1917
    %1919 = vrot.lane.b32.xlu0 %v1905, 18
    %v1920 = vpop.permute.xlu0 %1919
    %1921 = vrot.lane.b32.xlu0 %v1906, 18
    %v1922 = vpop.permute.xlu0 %1921
    %1923 = vrot.lane.b32.xlu0 %v1907, 18
    %v1924 = vpop.permute.xlu0 %1923
    %1925 = vrot.lane.b32.xlu0 %v1908, 18
    %v1926 = vpop.permute.xlu0 %1925
    %v1927 = vsel %vm304, %v1916, %v1918
    %v1928 = vsel %vm304, %v1918, %v1920
    %v1929 = vsel %vm304, %v1920, %v1922
    %v1930 = vsel %vm304, %v1922, %v1924
    %v1931 = vsel %vm304, %v1924, %v1926
    %1938 = vst [vmem:[#allocation3 + $0x30] sm:$0xff] %v1927
    %1939 = vst [vmem:[#allocation3 + $0x38] sm:$0xff] %v1928
    %1940 = vst [vmem:[#allocation3 + $0x40] sm:$0xff] %v1929
    %1941 = vst [vmem:[#allocation3 + $0x48] sm:$0xff] %v1930
    %1942 = vst [vmem:[#allocation3 + $0x50] sm:$0xff] %v1931
    %1943 = vst.msk [vmem:[#allocation3 + $0x58] sm:$0xff] %vm47, %v1926
    %v1944 = vld [vmem:[#allocation2] sm:$0xff]
    %v1945 = vld [vmem:[#allocation2 + $0x8] sm:$0xff]
    %v1946 = vld [vmem:[#allocation2 + $0x10] sm:$0xff]
    %v1947 = vld [vmem:[#allocation2 + $0x18] sm:$0xff]
    %v1948 = vld [vmem:[#allocation2 + $0x20] sm:$0xff]
    %v1949 = vld [vmem:[#allocation2 + $0x28] sm:$0xff]
    %1956 = vrot.lane.b32.xlu0 %v1944, 17
    %v1957 = vpop.permute.xlu0 %1956
    %1958 = vrot.lane.b32.xlu0 %v1945, 17
    %v1959 = vpop.permute.xlu0 %1958
    %1960 = vrot.lane.b32.xlu0 %v1946, 17
    %v1961 = vpop.permute.xlu0 %1960
    %1962 = vrot.lane.b32.xlu0 %v1947, 17
    %v1963 = vpop.permute.xlu0 %1962
    %1964 = vrot.lane.b32.xlu0 %v1948, 17
    %v1965 = vpop.permute.xlu0 %1964
    %1966 = vrot.lane.b32.xlu0 %v1949, 17
    %v1967 = vpop.permute.xlu0 %1966
    %v1968 = vsel %vm346, %v1957, %v1959
    %v1969 = vsel %vm346, %v1959, %v1961
    %v1970 = vsel %vm346, %v1961, %v1963
    %v1971 = vsel %vm346, %v1963, %v1965
    %v1972 = vsel %vm346, %v1965, %v1967
    %1979 = vst [vmem:[#allocation3 + $0x60] sm:$0xff] %v1968
    %1980 = vst [vmem:[#allocation3 + $0x68] sm:$0xff] %v1969
    %1981 = vst [vmem:[#allocation3 + $0x70] sm:$0xff] %v1970
    %1982 = vst [vmem:[#allocation3 + $0x78] sm:$0xff] %v1971
    %1983 = vst [vmem:[#allocation3 + $0x80] sm:$0xff] %v1972
    %1984 = vst.msk [vmem:[#allocation3 + $0x88] sm:$0xff] %vm47, %v1967
    %v1985 = vld [vmem:[#allocation2] sm:$0xff]
    %v1986 = vld [vmem:[#allocation2 + $0x8] sm:$0xff]
    %v1987 = vld [vmem:[#allocation2 + $0x10] sm:$0xff]
    %v1988 = vld [vmem:[#allocation2 + $0x18] sm:$0xff]
    %v1989 = vld [vmem:[#allocation2 + $0x20] sm:$0xff]
    %v1990 = vld [vmem:[#allocation2 + $0x28] sm:$0xff]
    %v1991 = vld [vmem:[#allocation2 + $0x30] sm:$0xff]
    %1999 = vrot.lane.b32.xlu0 %v1985, 1
    %v2000 = vpop.permute.xlu0 %1999
    %2001 = vrot.lane.b32.xlu0 %v1986, 1
    %v2002 = vpop.permute.xlu0 %2001
    %2003 = vrot.lane.b32.xlu0 %v1987, 1
    %v2004 = vpop.permute.xlu0 %2003
    %2005 = vrot.lane.b32.xlu0 %v1988, 1
    %v2006 = vpop.permute.xlu0 %2005
    %2007 = vrot.lane.b32.xlu0 %v1989, 1
    %v2008 = vpop.permute.xlu0 %2007
    %2009 = vrot.lane.b32.xlu0 %v1990, 1
    %v2010 = vpop.permute.xlu0 %2009
    %2011 = vrot.lane.b32.xlu0 %v1991, 1
    %v2012 = vpop.permute.xlu0 %2011
    %v2013 = vsel %vm392, %v2000, %v2002
    %v2014 = vsel %vm392, %v2002, %v2004
    %v2015 = vsel %vm392, %v2004, %v2006
    %v2016 = vsel %vm392, %v2006, %v2008
    %v2017 = vsel %vm392, %v2008, %v2010
    %v2018 = vsel %vm392, %v2010, %v2012
    %2025 = vst [vmem:[#allocation3 + $0x90] sm:$0xff] %v2013
    %2026 = vst [vmem:[#allocation3 + $0x98] sm:$0xff] %v2014
    %2027 = vst [vmem:[#allocation3 + $0xa0] sm:$0xff] %v2015
    %2028 = vst [vmem:[#allocation3 + $0xa8] sm:$0xff] %v2016
    %2029 = vst [vmem:[#allocation3 + $0xb0] sm:$0xff] %v2017
    %2030 = vst.msk [vmem:[#allocation3 + $0xb8] sm:$0xff] %vm47, %v2018
    %2031 = vst [vmem:[#allocation3 + $0xc0] sm:$0xff] %v1848
    %2032 = vst [vmem:[#allocation3 + $0xc8] sm:$0xff] %v1849
    %2033 = vst [vmem:[#allocation3 + $0xd0] sm:$0xff] %v1850
    %2034 = vst [vmem:[#allocation3 + $0xd8] sm:$0xff] %v1851
    %2035 = vst [vmem:[#allocation3 + $0xe0] sm:$0xff] %v1852
    %2036 = vst.msk [vmem:[#allocation3 + $0xe8] sm:$0xff] %vm47, %v1853
    %v2037 = vld [vmem:[#allocation2 + $0x8] sm:$0xff]
    %v2038 = vld [vmem:[#allocation2 + $0x10] sm:$0xff]
    %v2039 = vld [vmem:[#allocation2 + $0x18] sm:$0xff]
    %v2040 = vld [vmem:[#allocation2 + $0x20] sm:$0xff]
    %v2041 = vld [vmem:[#allocation2 + $0x28] sm:$0xff]
    %v2042 = vld [vmem:[#allocation2 + $0x30] sm:$0xff]
    %2049 = vrot.lane.b32.xlu0 %v2037, 127
    %v2050 = vpop.permute.xlu0 %2049
    %2051 = vrot.lane.b32.xlu0 %v2038, 127
    %v2052 = vpop.permute.xlu0 %2051
    %2053 = vrot.lane.b32.xlu0 %v2039, 127
    %v2054 = vpop.permute.xlu0 %2053
    %2055 = vrot.lane.b32.xlu0 %v2040, 127
    %v2056 = vpop.permute.xlu0 %2055
    %2057 = vrot.lane.b32.xlu0 %v2041, 127
    %v2058 = vpop.permute.xlu0 %2057
    %2059 = vrot.lane.b32.xlu0 %v2042, 127
    %v2060 = vpop.permute.xlu0 %2059
    %v2061 = vsel %vm441, %v2050, %v2052
    %v2062 = vsel %vm441, %v2052, %v2054
    %v2063 = vsel %vm441, %v2054, %v2056
    %v2064 = vsel %vm441, %v2056, %v2058
    %v2065 = vsel %vm441, %v2058, %v2060
    %2072 = vst [vmem:[#allocation3 + $0xf0] sm:$0xff] %v2061
    %2073 = vst [vmem:[#allocation3 + $0xf8] sm:$0xff] %v2062
    %2074 = vst [vmem:[#allocation3 + $0x100] sm:$0xff] %v2063
    %2075 = vst [vmem:[#allocation3 + $0x108] sm:$0xff] %v2064
    %2076 = vst [vmem:[#allocation3 + $0x110] sm:$0xff] %v2065
    %2077 = vst.msk [vmem:[#allocation3 + $0x118] sm:$0xff] %vm47, %v2060
    %v2078 = vld [vmem:[#allocation2 + $0x8] sm:$0xff]
    %v2079 = vld [vmem:[#allocation2 + $0x10] sm:$0xff]
    %v2080 = vld [vmem:[#allocation2 + $0x18] sm:$0xff]
    %v2081 = vld [vmem:[#allocation2 + $0x20] sm:$0xff]
    %v2082 = vld [vmem:[#allocation2 + $0x28] sm:$0xff]
    %v2083 = vld [vmem:[#allocation2 + $0x30] sm:$0xff]
    %2090 = vrot.lane.b32.xlu0 %v2078, 111
    %v2091 = vpop.permute.xlu0 %2090
    %2092 = vrot.lane.b32.xlu0 %v2079, 111
    %v2093 = vpop.permute.xlu0 %2092
    %2094 = vrot.lane.b32.xlu0 %v2080, 111
    %v2095 = vpop.permute.xlu0 %2094
    %2096 = vrot.lane.b32.xlu0 %v2081, 111
    %v2097 = vpop.permute.xlu0 %2096
    %2098 = vrot.lane.b32.xlu0 %v2082, 111
    %v2099 = vpop.permute.xlu0 %2098
    %2100 = vrot.lane.b32.xlu0 %v2083, 111
    %v2101 = vpop.permute.xlu0 %2100
    %v2102 = vsel %vm483, %v2091, %v2093
    %v2103 = vsel %vm483, %v2093, %v2095
    %v2104 = vsel %vm483, %v2095, %v2097
    %v2105 = vsel %vm483, %v2097, %v2099
    %v2106 = vsel %vm483, %v2099, %v2101
    %2113 = vst [vmem:[#allocation3 + $0x120] sm:$0xff] %v2102
    %2114 = vst [vmem:[#allocation3 + $0x128] sm:$0xff] %v2103
    %2115 = vst [vmem:[#allocation3 + $0x130] sm:$0xff] %v2104
    %2116 = vst [vmem:[#allocation3 + $0x138] sm:$0xff] %v2105
    %2117 = vst [vmem:[#allocation3 + $0x140] sm:$0xff] %v2106
    %2118 = vst.msk [vmem:[#allocation3 + $0x148] sm:$0xff] %vm47, %v2101
    %v2119 = vld [vmem:[#allocation2 + $0x8] sm:$0xff]
    %v2120 = vld [vmem:[#allocation2 + $0x10] sm:$0xff]
    %v2121 = vld [vmem:[#allocation2 + $0x18] sm:$0xff]
    %v2122 = vld [vmem:[#allocation2 + $0x20] sm:$0xff]
    %v2123 = vld [vmem:[#allocation2 + $0x28] sm:$0xff]
    %v2124 = vld [vmem:[#allocation2 + $0x30] sm:$0xff]
    %2131 = vrot.lane.b32.xlu0 %v2119, 110
    %v2132 = vpop.permute.xlu0 %2131
    %2133 = vrot.lane.b32.xlu0 %v2120, 110
    %v2134 = vpop.permute.xlu0 %2133
    %2135 = vrot.lane.b32.xlu0 %v2121, 110
    %v2136 = vpop.permute.xlu0 %2135
    %2137 = vrot.lane.b32.xlu0 %v2122, 110
    %v2138 = vpop.permute.xlu0 %2137
    %2139 = vrot.lane.b32.xlu0 %v2123, 110
    %v2140 = vpop.permute.xlu0 %2139
    %2141 = vrot.lane.b32.xlu0 %v2124, 110
    %v2142 = vpop.permute.xlu0 %2141
    %v2143 = vsel %vm525, %v2132, %v2134
    %v2144 = vsel %vm525, %v2134, %v2136
    %v2145 = vsel %vm525, %v2136, %v2138
    %v2146 = vsel %vm525, %v2138, %v2140
    %v2147 = vsel %vm525, %v2140, %v2142
    %2154 = vst [vmem:[#allocation3 + $0x150] sm:$0xff] %v2143
    %2155 = vst [vmem:[#allocation3 + $0x158] sm:$0xff] %v2144
    %2156 = vst [vmem:[#allocation3 + $0x160] sm:$0xff] %v2145
    %2157 = vst [vmem:[#allocation3 + $0x168] sm:$0xff] %v2146
    %2158 = vst [vmem:[#allocation3 + $0x170] sm:$0xff] %v2147
    %2159 = vst.msk [vmem:[#allocation3 + $0x178] sm:$0xff] %vm47, %v2142
    %v2160 = vld [vmem:[#allocation2 + $0x8] sm:$0xff]
    %v2161 = vld [vmem:[#allocation2 + $0x10] sm:$0xff]
    %v2162 = vld [vmem:[#allocation2 + $0x18] sm:$0xff]
    %v2163 = vld [vmem:[#allocation2 + $0x20] sm:$0xff]
    %v2164 = vld [vmem:[#allocation2 + $0x28] sm:$0xff]
    %v2165 = vld [vmem:[#allocation2 + $0x30] sm:$0xff]
    %2172 = vrot.lane.b32.xlu0 %v2160, 109
    %v2173 = vpop.permute.xlu0 %2172
    %2174 = vrot.lane.b32.xlu0 %v2161, 109
    %v2175 = vpop.permute.xlu0 %2174
    %2176 = vrot.lane.b32.xlu0 %v2162, 109
    %v2177 = vpop.permute.xlu0 %2176
    %2178 = vrot.lane.b32.xlu0 %v2163, 109
    %v2179 = vpop.permute.xlu0 %2178
    %2180 = vrot.lane.b32.xlu0 %v2164, 109
    %v2181 = vpop.permute.xlu0 %2180
    %2182 = vrot.lane.b32.xlu0 %v2165, 109
    %v2183 = vpop.permute.xlu0 %2182
    %v2184 = vsel %vm567, %v2173, %v2175
    %v2185 = vsel %vm567, %v2175, %v2177
    %v2186 = vsel %vm567, %v2177, %v2179
    %v2187 = vsel %vm567, %v2179, %v2181
    %v2188 = vsel %vm567, %v2181, %v2183
    %2195 = vst [vmem:[#allocation3 + $0x180] sm:$0xff] %v2184
    %2196 = vst [vmem:[#allocation3 + $0x188] sm:$0xff] %v2185
    %2197 = vst [vmem:[#allocation3 + $0x190] sm:$0xff] %v2186
    %2198 = vst [vmem:[#allocation3 + $0x198] sm:$0xff] %v2187
    %2199 = vst [vmem:[#allocation3 + $0x1a0] sm:$0xff] %v2188
    %2200 = vst.msk [vmem:[#allocation3 + $0x1a8] sm:$0xff] %vm47, %v2183
    %v2201 = vld [vmem:[#allocation3] sm:$0xff]
    %v2202 = vld [vmem:[#allocation3 + $0x8] sm:$0xff]
    %v2203 = vld [vmem:[#allocation3 + $0x10] sm:$0xff]
    %v2204 = vld [vmem:[#allocation3 + $0x18] sm:$0xff]
    %v2205 = vld [vmem:[#allocation3 + $0x20] sm:$0xff]
    %v2206 = vld [vmem:[#allocation3 + $0x28] sm:$0xff]
    %v2207 = vld [vmem:[#allocation3 + $0x30] sm:$0xff]
    %v2208 = vld [vmem:[#allocation3 + $0x38] sm:$0xff]
    %v2209 = vld [vmem:[#allocation3 + $0x40] sm:$0xff]
    %v2210 = vld [vmem:[#allocation3 + $0x48] sm:$0xff]
    %v2211 = vld [vmem:[#allocation3 + $0x50] sm:$0xff]
    %v2212 = vld [vmem:[#allocation3 + $0x58] sm:$0xff]
    %v2213 = vld [vmem:[#allocation3 + $0x60] sm:$0xff]
    %v2214 = vld [vmem:[#allocation3 + $0x68] sm:$0xff]
    %v2215 = vld [vmem:[#allocation3 + $0x70] sm:$0xff]
    %v2216 = vld [vmem:[#allocation3 + $0x78] sm:$0xff]
    %v2217 = vld [vmem:[#allocation3 + $0x80] sm:$0xff]
    %v2218 = vld [vmem:[#allocation3 + $0x88] sm:$0xff]
    %v2219 = vld [vmem:[#allocation3 + $0x90] sm:$0xff]
    %v2220 = vld [vmem:[#allocation3 + $0x98] sm:$0xff]
    %v2221 = vld [vmem:[#allocation3 + $0xa0] sm:$0xff]
    %v2222 = vld [vmem:[#allocation3 + $0xa8] sm:$0xff]
    %v2223 = vld [vmem:[#allocation3 + $0xb0] sm:$0xff]
    %v2224 = vld [vmem:[#allocation3 + $0xb8] sm:$0xff]
    %v2225 = vld [vmem:[#allocation3 + $0xc0] sm:$0xff]
    %v2226 = vld [vmem:[#allocation3 + $0xc8] sm:$0xff]
    %v2227 = vld [vmem:[#allocation3 + $0xd0] sm:$0xff]
    %v2228 = vld [vmem:[#allocation3 + $0xd8] sm:$0xff]
    %v2229 = vld [vmem:[#allocation3 + $0xe0] sm:$0xff]
    %v2230 = vld [vmem:[#allocation3 + $0xe8] sm:$0xff]
    %v2231 = vld [vmem:[#allocation3 + $0xf0] sm:$0xff]
    %v2232 = vld [vmem:[#allocation3 + $0xf8] sm:$0xff]
    %v2233 = vld [vmem:[#allocation3 + $0x100] sm:$0xff]
    %v2234 = vld [vmem:[#allocation3 + $0x108] sm:$0xff]
    %v2235 = vld [vmem:[#allocation3 + $0x110] sm:$0xff]
    %v2236 = vld [vmem:[#allocation3 + $0x118] sm:$0xff]
    %v2237 = vld [vmem:[#allocation3 + $0x120] sm:$0xff]
    %v2238 = vld [vmem:[#allocation3 + $0x128] sm:$0xff]
    %v2239 = vld [vmem:[#allocation3 + $0x130] sm:$0xff]
    %v2240 = vld [vmem:[#allocation3 + $0x138] sm:$0xff]
    %v2241 = vld [vmem:[#allocation3 + $0x140] sm:$0xff]
    %v2242 = vld [vmem:[#allocation3 + $0x148] sm:$0xff]
    %v2243 = vld [vmem:[#allocation3 + $0x150] sm:$0xff]
    %v2244 = vld [vmem:[#allocation3 + $0x158] sm:$0xff]
    %v2245 = vld [vmem:[#allocation3 + $0x160] sm:$0xff]
    %v2246 = vld [vmem:[#allocation3 + $0x168] sm:$0xff]
    %v2247 = vld [vmem:[#allocation3 + $0x170] sm:$0xff]
    %v2248 = vld [vmem:[#allocation3 + $0x178] sm:$0xff]
    %v2249 = vld [vmem:[#allocation3 + $0x180] sm:$0xff]
    %v2250 = vld [vmem:[#allocation3 + $0x188] sm:$0xff]
    %v2251 = vld [vmem:[#allocation3 + $0x190] sm:$0xff]
    %v2252 = vld [vmem:[#allocation3 + $0x198] sm:$0xff]
    %v2253 = vld [vmem:[#allocation3 + $0x1a0] sm:$0xff]
    %v2254 = vld [vmem:[#allocation3 + $0x1a8] sm:$0xff]
    %2256 = vset.pattern.permute.xlu0 0
    %2257 = vperm.xlu0 %2256, %v1855
    %v2258 = vpop.permute.xlu0 %2257
    %v2261 = vsel %vm644, %v1854, 0
    %2263 = vmatpush.msra.mxu0 0.0
    %2264 = vmatpush.msra.mxu0 0.0
    %2265 = vmatpush.msra.mxu0 0.0
    %2266 = vmatpush.msra.mxu0 0.0
    %2267 = vmatpush.msra.mxu0 0.0
    %2268 = vmatpush.msra.mxu0 0.0
    %2269 = vmatpush.msra.mxu0 0.0
    %2270 = vmatpush.msra.mxu0 %v2249
    %2271 = vmatpush.msra.mxu0 %v2243
    %2272 = vmatpush.msra.mxu0 %v2237
    %2273 = vmatpush.msra.mxu0 %v2231
    %2274 = vmatpush.msra.mxu0 %v2225
    %2275 = vmatpush.msra.mxu0 %v2219
    %2276 = vmatpush.msra.mxu0 %v2213
    %2277 = vmatpush.msra.mxu0 %v2207
    %2278 = vmatpush.msra.mxu0 %v2201
    %2279 = vmatmul.f32.gmra.mxu0 %v2261
    %v2280 = vpop.f32.mrf.mxu0
    %v2281 = vadd.f32 %v2258, %v2280
    %2282 = vdwg.mxu0
    %2283 = vmatpush.msra.mxu0 0.0
    %2284 = vmatpush.msra.mxu0 0.0
    %2285 = vmatpush.msra.mxu0 0.0
    %2286 = vmatpush.msra.mxu0 0.0
    %2287 = vmatpush.msra.mxu0 0.0
    %2288 = vmatpush.msra.mxu0 0.0
    %2289 = vmatpush.msra.mxu0 0.0
    %2290 = vmatpush.msra.mxu0 %v2250
    %2291 = vmatpush.msra.mxu0 %v2244
    %2292 = vmatpush.msra.mxu0 %v2238
    %2293 = vmatpush.msra.mxu0 %v2232
    %2294 = vmatpush.msra.mxu0 %v2226
    %2295 = vmatpush.msra.mxu0 %v2220
    %2296 = vmatpush.msra.mxu0 %v2214
    %2297 = vmatpush.msra.mxu0 %v2208
    %2298 = vmatpush.msra.mxu0 %v2202
    %2299 = vmatmul.f32.gmra.mxu0 %v2261
    %v2300 = vpop.f32.mrf.mxu0
    %v2301 = vadd.f32 %v2258, %v2300
    %2302 = vdwg.mxu0
    %2303 = vmatpush.msra.mxu0 0.0
    %2304 = vmatpush.msra.mxu0 0.0
    %2305 = vmatpush.msra.mxu0 0.0
    %2306 = vmatpush.msra.mxu0 0.0
    %2307 = vmatpush.msra.mxu0 0.0
    %2308 = vmatpush.msra.mxu0 0.0
    %2309 = vmatpush.msra.mxu0 0.0
    %2310 = vmatpush.msra.mxu0 %v2251
    %2311 = vmatpush.msra.mxu0 %v2245
    %2312 = vmatpush.msra.mxu0 %v2239
    %2313 = vmatpush.msra.mxu0 %v2233
    %2314 = vmatpush.msra.mxu0 %v2227
    %2315 = vmatpush.msra.mxu0 %v2221
    %2316 = vmatpush.msra.mxu0 %v2215
    %2317 = vmatpush.msra.mxu0 %v2209
    %2318 = vmatpush.msra.mxu0 %v2203
    %2319 = vmatmul.f32.gmra.mxu0 %v2261
    %v2320 = vpop.f32.mrf.mxu0
    %v2321 = vadd.f32 %v2258, %v2320
    %2322 = vdwg.mxu0
    %2323 = vmatpush.msra.mxu0 0.0
    %2324 = vmatpush.msra.mxu0 0.0
    %2325 = vmatpush.msra.mxu0 0.0
    %2326 = vmatpush.msra.mxu0 0.0
    %2327 = vmatpush.msra.mxu0 0.0
    %2328 = vmatpush.msra.mxu0 0.0
    %2329 = vmatpush.msra.mxu0 0.0
    %2330 = vmatpush.msra.mxu0 %v2252
    %2331 = vmatpush.msra.mxu0 %v2246
    %2332 = vmatpush.msra.mxu0 %v2240
    %2333 = vmatpush.msra.mxu0 %v2234
    %2334 = vmatpush.msra.mxu0 %v2228
    %2335 = vmatpush.msra.mxu0 %v2222
    %2336 = vmatpush.msra.mxu0 %v2216
    %2337 = vmatpush.msra.mxu0 %v2210
    %2338 = vmatpush.msra.mxu0 %v2204
    %2339 = vmatmul.f32.gmra.mxu0 %v2261
    %v2340 = vpop.f32.mrf.mxu0
    %v2341 = vadd.f32 %v2258, %v2340
    %2342 = vdwg.mxu0
    %2343 = vmatpush.msra.mxu0 0.0
    %2344 = vmatpush.msra.mxu0 0.0
    %2345 = vmatpush.msra.mxu0 0.0
    %2346 = vmatpush.msra.mxu0 0.0
    %2347 = vmatpush.msra.mxu0 0.0
    %2348 = vmatpush.msra.mxu0 0.0
    %2349 = vmatpush.msra.mxu0 0.0
    %2350 = vmatpush.msra.mxu0 %v2253
    %2351 = vmatpush.msra.mxu0 %v2247
    %2352 = vmatpush.msra.mxu0 %v2241
    %2353 = vmatpush.msra.mxu0 %v2235
    %2354 = vmatpush.msra.mxu0 %v2229
    %2355 = vmatpush.msra.mxu0 %v2223
    %2356 = vmatpush.msra.mxu0 %v2217
    %2357 = vmatpush.msra.mxu0 %v2211
    %2358 = vmatpush.msra.mxu0 %v2205
    %2359 = vmatmul.f32.gmra.mxu0 %v2261
    %v2360 = vpop.f32.mrf.mxu0
    %v2361 = vadd.f32 %v2258, %v2360
    %2362 = vdwg.mxu0
    %2363 = vmatpush.msra.mxu0 0.0
    %2364 = vmatpush.msra.mxu0 0.0
    %2365 = vmatpush.msra.mxu0 0.0
    %2366 = vmatpush.msra.mxu0 0.0
    %2367 = vmatpush.msra.mxu0 0.0
    %2368 = vmatpush.msra.mxu0 0.0
    %2369 = vmatpush.msra.mxu0 0.0
    %2370 = vmatpush.msra.mxu0 %v2254
    %2371 = vmatpush.msra.mxu0 %v2248
    %2372 = vmatpush.msra.mxu0 %v2242
    %2373 = vmatpush.msra.mxu0 %v2236
    %2374 = vmatpush.msra.mxu0 %v2230
    %2375 = vmatpush.msra.mxu0 %v2224
    %2376 = vmatpush.msra.mxu0 %v2218
    %2377 = vmatpush.msra.mxu0 %v2212
    %2378 = vmatpush.msra.mxu0 %v2206
    %2379 = vmatmul.f32.gmra.mxu0 %v2261
    %v2380 = vpop.f32.mrf.mxu0
    %v2381 = vadd.f32 %v2258, %v2380
    %2382 = vdwg.mxu0
    %v2383 = vmax.f32 %v2281, 0.0
    %v2384 = vmax.f32 %v2301, 0.0
    %v2385 = vmax.f32 %v2321, 0.0
    %v2386 = vmax.f32 %v2341, 0.0
    %v2387 = vmax.f32 %v2361, 0.0
    %v2388 = vmax.f32 %v2381, 0.0
    %v2389 = vmul.f32 %v2383, %v212
    %v2390 = vmul.f32 %v2384, %v213
    %v2391 = vmul.f32 %v2385, %v214
    %v2392 = vmul.f32 %v2386, %v215
    %v2393 = vmul.f32 %v2387, %v216
    %v2394 = vmul.f32 %v2388, %v217
    %v2395 = vadd.f32 %v1848, %v2389
    %v2396 = vadd.f32 %v1849, %v2390
    %v2397 = vadd.f32 %v1850, %v2391
    %v2398 = vadd.f32 %v1851, %v2392
    %v2399 = vadd.f32 %v1852, %v2393
    %v2400 = vadd.f32 %v1853, %v2394
    %2401 = vst [vmem:[#allocation2 + $0x8] sm:$0xff] %v2395
    %2402 = vst [vmem:[#allocation2 + $0x10] sm:$0xff] %v2396
    %2403 = vst [vmem:[#allocation2 + $0x18] sm:$0xff] %v2397
    %2404 = vst [vmem:[#allocation2 + $0x20] sm:$0xff] %v2398
    %2405 = vst [vmem:[#allocation2 + $0x28] sm:$0xff] %v2399
    %2406 = vst.msk [vmem:[#allocation2 + $0x30] sm:$0xff] %vm47, %v2400
    %v2407 = vld [vmem:[#allocation2] sm:$0xff]
    %v2408 = vld [vmem:[#allocation2 + $0x8] sm:$0xff]
    %v2409 = vld [vmem:[#allocation2 + $0x10] sm:$0xff]
    %v2410 = vld [vmem:[#allocation2 + $0x18] sm:$0xff]
    %v2411 = vld [vmem:[#allocation2 + $0x20] sm:$0xff]
    %v2412 = vld [vmem:[#allocation2 + $0x28] sm:$0xff]
    %2419 = vrot.lane.b32.xlu0 %v2407, 19
    %v2420 = vpop.permute.xlu0 %2419
    %2421 = vrot.lane.b32.xlu0 %v2408, 19
    %v2422 = vpop.permute.xlu0 %2421
    %2423 = vrot.lane.b32.xlu0 %v2409, 19
    %v2424 = vpop.permute.xlu0 %2423
    %2425 = vrot.lane.b32.xlu0 %v2410, 19
    %v2426 = vpop.permute.xlu0 %2425
    %2427 = vrot.lane.b32.xlu0 %v2411, 19
    %v2428 = vpop.permute.xlu0 %2427
    %2429 = vrot.lane.b32.xlu0 %v2412, 19
    %v2430 = vpop.permute.xlu0 %2429
    %v2431 = vsel %vm262, %v2420, %v2422
    %v2432 = vsel %vm262, %v2422, %v2424
    %v2433 = vsel %vm262, %v2424, %v2426
    %v2434 = vsel %vm262, %v2426, %v2428
    %v2435 = vsel %vm262, %v2428, %v2430
    %2442 = vst [vmem:[#allocation3] sm:$0xff] %v2431
    %2443 = vst [vmem:[#allocation3 + $0x8] sm:$0xff] %v2432
    %2444 = vst [vmem:[#allocation3 + $0x10] sm:$0xff] %v2433
    %2445 = vst [vmem:[#allocation3 + $0x18] sm:$0xff] %v2434
    %2446 = vst [vmem:[#allocation3 + $0x20] sm:$0xff] %v2435
    %2447 = vst.msk [vmem:[#allocation3 + $0x28] sm:$0xff] %vm47, %v2430
    %v2448 = vld [vmem:[#allocation2] sm:$0xff]
    %v2449 = vld [vmem:[#allocation2 + $0x8] sm:$0xff]
    %v2450 = vld [vmem:[#allocation2 + $0x10] sm:$0xff]
    %v2451 = vld [vmem:[#allocation2 + $0x18] sm:$0xff]
    %v2452 = vld [vmem:[#allocation2 + $0x20] sm:$0xff]
    %v2453 = vld [vmem:[#allocation2 + $0x28] sm:$0xff]
    %2460 = vrot.lane.b32.xlu0 %v2448, 18
    %v2461 = vpop.permute.xlu0 %2460
    %2462 = vrot.lane.b32.xlu0 %v2449, 18
    %v2463 = vpop.permute.xlu0 %2462
    %2464 = vrot.lane.b32.xlu0 %v2450, 18
    %v2465 = vpop.permute.xlu0 %2464
    %2466 = vrot.lane.b32.xlu0 %v2451, 18
    %v2467 = vpop.permute.xlu0 %2466
    %2468 = vrot.lane.b32.xlu0 %v2452, 18
    %v2469 = vpop.permute.xlu0 %2468
    %2470 = vrot.lane.b32.xlu0 %v2453, 18
    %v2471 = vpop.permute.xlu0 %2470
    %v2472 = vsel %vm304, %v2461, %v2463
    %v2473 = vsel %vm304, %v2463, %v2465
    %v2474 = vsel %vm304, %v2465, %v2467
    %v2475 = vsel %vm304, %v2467, %v2469
    %v2476 = vsel %vm304, %v2469, %v2471
    %2483 = vst [vmem:[#allocation3 + $0x30] sm:$0xff] %v2472
    %2484 = vst [vmem:[#allocation3 + $0x38] sm:$0xff] %v2473
    %2485 = vst [vmem:[#allocation3 + $0x40] sm:$0xff] %v2474
    %2486 = vst [vmem:[#allocation3 + $0x48] sm:$0xff] %v2475
    %2487 = vst [vmem:[#allocation3 + $0x50] sm:$0xff] %v2476
    %2488 = vst.msk [vmem:[#allocation3 + $0x58] sm:$0xff] %vm47, %v2471
    %v2489 = vld [vmem:[#allocation2] sm:$0xff]
    %v2490 = vld [vmem:[#allocation2 + $0x8] sm:$0xff]
    %v2491 = vld [vmem:[#allocation2 + $0x10] sm:$0xff]
    %v2492 = vld [vmem:[#allocation2 + $0x18] sm:$0xff]
    %v2493 = vld [vmem:[#allocation2 + $0x20] sm:$0xff]
    %v2494 = vld [vmem:[#allocation2 + $0x28] sm:$0xff]
    %2501 = vrot.lane.b32.xlu0 %v2489, 17
    %v2502 = vpop.permute.xlu0 %2501
    %2503 = vrot.lane.b32.xlu0 %v2490, 17
    %v2504 = vpop.permute.xlu0 %2503
    %2505 = vrot.lane.b32.xlu0 %v2491, 17
    %v2506 = vpop.permute.xlu0 %2505
    %2507 = vrot.lane.b32.xlu0 %v2492, 17
    %v2508 = vpop.permute.xlu0 %2507
    %2509 = vrot.lane.b32.xlu0 %v2493, 17
    %v2510 = vpop.permute.xlu0 %2509
    %2511 = vrot.lane.b32.xlu0 %v2494, 17
    %v2512 = vpop.permute.xlu0 %2511
    %v2513 = vsel %vm346, %v2502, %v2504
    %v2514 = vsel %vm346, %v2504, %v2506
    %v2515 = vsel %vm346, %v2506, %v2508
    %v2516 = vsel %vm346, %v2508, %v2510
    %v2517 = vsel %vm346, %v2510, %v2512
    %2524 = vst [vmem:[#allocation3 + $0x60] sm:$0xff] %v2513
    %2525 = vst [vmem:[#allocation3 + $0x68] sm:$0xff] %v2514
    %2526 = vst [vmem:[#allocation3 + $0x70] sm:$0xff] %v2515
    %2527 = vst [vmem:[#allocation3 + $0x78] sm:$0xff] %v2516
    %2528 = vst [vmem:[#allocation3 + $0x80] sm:$0xff] %v2517
    %2529 = vst.msk [vmem:[#allocation3 + $0x88] sm:$0xff] %vm47, %v2512
    %v2530 = vld [vmem:[#allocation2] sm:$0xff]
    %v2531 = vld [vmem:[#allocation2 + $0x8] sm:$0xff]
    %v2532 = vld [vmem:[#allocation2 + $0x10] sm:$0xff]
    %v2533 = vld [vmem:[#allocation2 + $0x18] sm:$0xff]
    %v2534 = vld [vmem:[#allocation2 + $0x20] sm:$0xff]
    %v2535 = vld [vmem:[#allocation2 + $0x28] sm:$0xff]
    %v2536 = vld [vmem:[#allocation2 + $0x30] sm:$0xff]
    %2544 = vrot.lane.b32.xlu0 %v2530, 1
    %v2545 = vpop.permute.xlu0 %2544
    %2546 = vrot.lane.b32.xlu0 %v2531, 1
    %v2547 = vpop.permute.xlu0 %2546
    %2548 = vrot.lane.b32.xlu0 %v2532, 1
    %v2549 = vpop.permute.xlu0 %2548
    %2550 = vrot.lane.b32.xlu0 %v2533, 1
    %v2551 = vpop.permute.xlu0 %2550
    %2552 = vrot.lane.b32.xlu0 %v2534, 1
    %v2553 = vpop.permute.xlu0 %2552
    %2554 = vrot.lane.b32.xlu0 %v2535, 1
    %v2555 = vpop.permute.xlu0 %2554
    %2556 = vrot.lane.b32.xlu0 %v2536, 1
    %v2557 = vpop.permute.xlu0 %2556
    %v2558 = vsel %vm392, %v2545, %v2547
    %v2559 = vsel %vm392, %v2547, %v2549
    %v2560 = vsel %vm392, %v2549, %v2551
    %v2561 = vsel %vm392, %v2551, %v2553
    %v2562 = vsel %vm392, %v2553, %v2555
    %v2563 = vsel %vm392, %v2555, %v2557
    %2570 = vst [vmem:[#allocation3 + $0x90] sm:$0xff] %v2558
    %2571 = vst [vmem:[#allocation3 + $0x98] sm:$0xff] %v2559
    %2572 = vst [vmem:[#allocation3 + $0xa0] sm:$0xff] %v2560
    %2573 = vst [vmem:[#allocation3 + $0xa8] sm:$0xff] %v2561
    %2574 = vst [vmem:[#allocation3 + $0xb0] sm:$0xff] %v2562
    %2575 = vst.msk [vmem:[#allocation3 + $0xb8] sm:$0xff] %vm47, %v2563
    %2576 = vst [vmem:[#allocation3 + $0xc0] sm:$0xff] %v2395
    %2577 = vst [vmem:[#allocation3 + $0xc8] sm:$0xff] %v2396
    %2578 = vst [vmem:[#allocation3 + $0xd0] sm:$0xff] %v2397
    %2579 = vst [vmem:[#allocation3 + $0xd8] sm:$0xff] %v2398
    %2580 = vst [vmem:[#allocation3 + $0xe0] sm:$0xff] %v2399
    %2581 = vst.msk [vmem:[#allocation3 + $0xe8] sm:$0xff] %vm47, %v2400
    %v2582 = vld [vmem:[#allocation2 + $0x8] sm:$0xff]
    %v2583 = vld [vmem:[#allocation2 + $0x10] sm:$0xff]
    %v2584 = vld [vmem:[#allocation2 + $0x18] sm:$0xff]
    %v2585 = vld [vmem:[#allocation2 + $0x20] sm:$0xff]
    %v2586 = vld [vmem:[#allocation2 + $0x28] sm:$0xff]
    %v2587 = vld [vmem:[#allocation2 + $0x30] sm:$0xff]
    %2594 = vrot.lane.b32.xlu0 %v2582, 127
    %v2595 = vpop.permute.xlu0 %2594
    %2596 = vrot.lane.b32.xlu0 %v2583, 127
    %v2597 = vpop.permute.xlu0 %2596
    %2598 = vrot.lane.b32.xlu0 %v2584, 127
    %v2599 = vpop.permute.xlu0 %2598
    %2600 = vrot.lane.b32.xlu0 %v2585, 127
    %v2601 = vpop.permute.xlu0 %2600
    %2602 = vrot.lane.b32.xlu0 %v2586, 127
    %v2603 = vpop.permute.xlu0 %2602
    %2604 = vrot.lane.b32.xlu0 %v2587, 127
    %v2605 = vpop.permute.xlu0 %2604
    %v2606 = vsel %vm441, %v2595, %v2597
    %v2607 = vsel %vm441, %v2597, %v2599
    %v2608 = vsel %vm441, %v2599, %v2601
    %v2609 = vsel %vm441, %v2601, %v2603
    %v2610 = vsel %vm441, %v2603, %v2605
    %2617 = vst [vmem:[#allocation3 + $0xf0] sm:$0xff] %v2606
    %2618 = vst [vmem:[#allocation3 + $0xf8] sm:$0xff] %v2607
    %2619 = vst [vmem:[#allocation3 + $0x100] sm:$0xff] %v2608
    %2620 = vst [vmem:[#allocation3 + $0x108] sm:$0xff] %v2609
    %2621 = vst [vmem:[#allocation3 + $0x110] sm:$0xff] %v2610
    %2622 = vst.msk [vmem:[#allocation3 + $0x118] sm:$0xff] %vm47, %v2605
    %v2623 = vld [vmem:[#allocation2 + $0x8] sm:$0xff]
    %v2624 = vld [vmem:[#allocation2 + $0x10] sm:$0xff]
    %v2625 = vld [vmem:[#allocation2 + $0x18] sm:$0xff]
    %v2626 = vld [vmem:[#allocation2 + $0x20] sm:$0xff]
    %v2627 = vld [vmem:[#allocation2 + $0x28] sm:$0xff]
    %v2628 = vld [vmem:[#allocation2 + $0x30] sm:$0xff]
    %2635 = vrot.lane.b32.xlu0 %v2623, 111
    %v2636 = vpop.permute.xlu0 %2635
    %2637 = vrot.lane.b32.xlu0 %v2624, 111
    %v2638 = vpop.permute.xlu0 %2637
    %2639 = vrot.lane.b32.xlu0 %v2625, 111
    %v2640 = vpop.permute.xlu0 %2639
    %2641 = vrot.lane.b32.xlu0 %v2626, 111
    %v2642 = vpop.permute.xlu0 %2641
    %2643 = vrot.lane.b32.xlu0 %v2627, 111
    %v2644 = vpop.permute.xlu0 %2643
    %2645 = vrot.lane.b32.xlu0 %v2628, 111
    %v2646 = vpop.permute.xlu0 %2645
    %v2647 = vsel %vm483, %v2636, %v2638
    %v2648 = vsel %vm483, %v2638, %v2640
    %v2649 = vsel %vm483, %v2640, %v2642
    %v2650 = vsel %vm483, %v2642, %v2644
    %v2651 = vsel %vm483, %v2644, %v2646
    %2658 = vst [vmem:[#allocation3 + $0x120] sm:$0xff] %v2647
    %2659 = vst [vmem:[#allocation3 + $0x128] sm:$0xff] %v2648
    %2660 = vst [vmem:[#allocation3 + $0x130] sm:$0xff] %v2649
    %2661 = vst [vmem:[#allocation3 + $0x138] sm:$0xff] %v2650
    %2662 = vst [vmem:[#allocation3 + $0x140] sm:$0xff] %v2651
    %2663 = vst.msk [vmem:[#allocation3 + $0x148] sm:$0xff] %vm47, %v2646
    %v2664 = vld [vmem:[#allocation2 + $0x8] sm:$0xff]
    %v2665 = vld [vmem:[#allocation2 + $0x10] sm:$0xff]
    %v2666 = vld [vmem:[#allocation2 + $0x18] sm:$0xff]
    %v2667 = vld [vmem:[#allocation2 + $0x20] sm:$0xff]
    %v2668 = vld [vmem:[#allocation2 + $0x28] sm:$0xff]
    %v2669 = vld [vmem:[#allocation2 + $0x30] sm:$0xff]
    %2676 = vrot.lane.b32.xlu0 %v2664, 110
    %v2677 = vpop.permute.xlu0 %2676
    %2678 = vrot.lane.b32.xlu0 %v2665, 110
    %v2679 = vpop.permute.xlu0 %2678
    %2680 = vrot.lane.b32.xlu0 %v2666, 110
    %v2681 = vpop.permute.xlu0 %2680
    %2682 = vrot.lane.b32.xlu0 %v2667, 110
    %v2683 = vpop.permute.xlu0 %2682
    %2684 = vrot.lane.b32.xlu0 %v2668, 110
    %v2685 = vpop.permute.xlu0 %2684
    %2686 = vrot.lane.b32.xlu0 %v2669, 110
    %v2687 = vpop.permute.xlu0 %2686
    %v2688 = vsel %vm525, %v2677, %v2679
    %v2689 = vsel %vm525, %v2679, %v2681
    %v2690 = vsel %vm525, %v2681, %v2683
    %v2691 = vsel %vm525, %v2683, %v2685
    %v2692 = vsel %vm525, %v2685, %v2687
    %2699 = vst [vmem:[#allocation3 + $0x150] sm:$0xff] %v2688
    %2700 = vst [vmem:[#allocation3 + $0x158] sm:$0xff] %v2689
    %2701 = vst [vmem:[#allocation3 + $0x160] sm:$0xff] %v2690
    %2702 = vst [vmem:[#allocation3 + $0x168] sm:$0xff] %v2691
    %2703 = vst [vmem:[#allocation3 + $0x170] sm:$0xff] %v2692
    %2704 = vst.msk [vmem:[#allocation3 + $0x178] sm:$0xff] %vm47, %v2687
    %v2705 = vld [vmem:[#allocation2 + $0x8] sm:$0xff]
    %v2706 = vld [vmem:[#allocation2 + $0x10] sm:$0xff]
    %v2707 = vld [vmem:[#allocation2 + $0x18] sm:$0xff]
    %v2708 = vld [vmem:[#allocation2 + $0x20] sm:$0xff]
    %v2709 = vld [vmem:[#allocation2 + $0x28] sm:$0xff]
    %v2710 = vld [vmem:[#allocation2 + $0x30] sm:$0xff]
    %2717 = vrot.lane.b32.xlu0 %v2705, 109
    %v2718 = vpop.permute.xlu0 %2717
    %2719 = vrot.lane.b32.xlu0 %v2706, 109
    %v2720 = vpop.permute.xlu0 %2719
    %2721 = vrot.lane.b32.xlu0 %v2707, 109
    %v2722 = vpop.permute.xlu0 %2721
    %2723 = vrot.lane.b32.xlu0 %v2708, 109
    %v2724 = vpop.permute.xlu0 %2723
    %2725 = vrot.lane.b32.xlu0 %v2709, 109
    %v2726 = vpop.permute.xlu0 %2725
    %2727 = vrot.lane.b32.xlu0 %v2710, 109
    %v2728 = vpop.permute.xlu0 %2727
    %v2729 = vsel %vm567, %v2718, %v2720
    %v2730 = vsel %vm567, %v2720, %v2722
    %v2731 = vsel %vm567, %v2722, %v2724
    %v2732 = vsel %vm567, %v2724, %v2726
    %v2733 = vsel %vm567, %v2726, %v2728
    %2740 = vst [vmem:[#allocation3 + $0x180] sm:$0xff] %v2729
    %2741 = vst [vmem:[#allocation3 + $0x188] sm:$0xff] %v2730
    %2742 = vst [vmem:[#allocation3 + $0x190] sm:$0xff] %v2731
    %2743 = vst [vmem:[#allocation3 + $0x198] sm:$0xff] %v2732
    %2744 = vst [vmem:[#allocation3 + $0x1a0] sm:$0xff] %v2733
    %2745 = vst.msk [vmem:[#allocation3 + $0x1a8] sm:$0xff] %vm47, %v2728
    %v2746 = vld [vmem:[#allocation3] sm:$0xff]
    %v2747 = vld [vmem:[#allocation3 + $0x8] sm:$0xff]
    %v2748 = vld [vmem:[#allocation3 + $0x10] sm:$0xff]
    %v2749 = vld [vmem:[#allocation3 + $0x18] sm:$0xff]
    %v2750 = vld [vmem:[#allocation3 + $0x20] sm:$0xff]
    %v2751 = vld [vmem:[#allocation3 + $0x28] sm:$0xff]
    %v2752 = vld [vmem:[#allocation3 + $0x30] sm:$0xff]
    %v2753 = vld [vmem:[#allocation3 + $0x38] sm:$0xff]
    %v2754 = vld [vmem:[#allocation3 + $0x40] sm:$0xff]
    %v2755 = vld [vmem:[#allocation3 + $0x48] sm:$0xff]
    %v2756 = vld [vmem:[#allocation3 + $0x50] sm:$0xff]
    %v2757 = vld [vmem:[#allocation3 + $0x58] sm:$0xff]
    %v2758 = vld [vmem:[#allocation3 + $0x60] sm:$0xff]
    %v2759 = vld [vmem:[#allocation3 + $0x68] sm:$0xff]
    %v2760 = vld [vmem:[#allocation3 + $0x70] sm:$0xff]
    %v2761 = vld [vmem:[#allocation3 + $0x78] sm:$0xff]
    %v2762 = vld [vmem:[#allocation3 + $0x80] sm:$0xff]
    %v2763 = vld [vmem:[#allocation3 + $0x88] sm:$0xff]
    %v2764 = vld [vmem:[#allocation3 + $0x90] sm:$0xff]
    %v2765 = vld [vmem:[#allocation3 + $0x98] sm:$0xff]
    %v2766 = vld [vmem:[#allocation3 + $0xa0] sm:$0xff]
    %v2767 = vld [vmem:[#allocation3 + $0xa8] sm:$0xff]
    %v2768 = vld [vmem:[#allocation3 + $0xb0] sm:$0xff]
    %v2769 = vld [vmem:[#allocation3 + $0xb8] sm:$0xff]
    %v2770 = vld [vmem:[#allocation3 + $0xc0] sm:$0xff]
    %v2771 = vld [vmem:[#allocation3 + $0xc8] sm:$0xff]
    %v2772 = vld [vmem:[#allocation3 + $0xd0] sm:$0xff]
    %v2773 = vld [vmem:[#allocation3 + $0xd8] sm:$0xff]
    %v2774 = vld [vmem:[#allocation3 + $0xe0] sm:$0xff]
    %v2775 = vld [vmem:[#allocation3 + $0xe8] sm:$0xff]
    %v2776 = vld [vmem:[#allocation3 + $0xf0] sm:$0xff]
    %v2777 = vld [vmem:[#allocation3 + $0xf8] sm:$0xff]
    %v2778 = vld [vmem:[#allocation3 + $0x100] sm:$0xff]
    %v2779 = vld [vmem:[#allocation3 + $0x108] sm:$0xff]
    %v2780 = vld [vmem:[#allocation3 + $0x110] sm:$0xff]
    %v2781 = vld [vmem:[#allocation3 + $0x118] sm:$0xff]
    %v2782 = vld [vmem:[#allocation3 + $0x120] sm:$0xff]
    %v2783 = vld [vmem:[#allocation3 + $0x128] sm:$0xff]
    %v2784 = vld [vmem:[#allocation3 + $0x130] sm:$0xff]
    %v2785 = vld [vmem:[#allocation3 + $0x138] sm:$0xff]
    %v2786 = vld [vmem:[#allocation3 + $0x140] sm:$0xff]
    %v2787 = vld [vmem:[#allocation3 + $0x148] sm:$0xff]
    %v2788 = vld [vmem:[#allocation3 + $0x150] sm:$0xff]
    %v2789 = vld [vmem:[#allocation3 + $0x158] sm:$0xff]
    %v2790 = vld [vmem:[#allocation3 + $0x160] sm:$0xff]
    %v2791 = vld [vmem:[#allocation3 + $0x168] sm:$0xff]
    %v2792 = vld [vmem:[#allocation3 + $0x170] sm:$0xff]
    %v2793 = vld [vmem:[#allocation3 + $0x178] sm:$0xff]
    %v2794 = vld [vmem:[#allocation3 + $0x180] sm:$0xff]
    %v2795 = vld [vmem:[#allocation3 + $0x188] sm:$0xff]
    %v2796 = vld [vmem:[#allocation3 + $0x190] sm:$0xff]
    %v2797 = vld [vmem:[#allocation3 + $0x198] sm:$0xff]
    %v2798 = vld [vmem:[#allocation3 + $0x1a0] sm:$0xff]
    %v2799 = vld [vmem:[#allocation3 + $0x1a8] sm:$0xff]
    %2800 = vmatpush.msra.mxu0 0.0
    %2801 = vmatpush.msra.mxu0 0.0
    %2802 = vmatpush.msra.mxu0 0.0
    %2803 = vmatpush.msra.mxu0 0.0
    %2804 = vmatpush.msra.mxu0 0.0
    %2805 = vmatpush.msra.mxu0 0.0
    %2806 = vmatpush.msra.mxu0 0.0
    %2807 = vmatpush.msra.mxu0 %v2794
    %2808 = vmatpush.msra.mxu0 %v2788
    %2809 = vmatpush.msra.mxu0 %v2782
    %2810 = vmatpush.msra.mxu0 %v2776
    %2811 = vmatpush.msra.mxu0 %v2770
    %2812 = vmatpush.msra.mxu0 %v2764
    %2813 = vmatpush.msra.mxu0 %v2758
    %2814 = vmatpush.msra.mxu0 %v2752
    %2815 = vmatpush.msra.mxu0 %v2746
    %2816 = vmatmul.f32.gmra.mxu0 %v2261
    %v2817 = vpop.f32.mrf.mxu0
    %v2818 = vadd.f32 %v2258, %v2817
    %2819 = vdwg.mxu0
    %2820 = vmatpush.msra.mxu0 0.0
    %2821 = vmatpush.msra.mxu0 0.0
    %2822 = vmatpush.msra.mxu0 0.0
    %2823 = vmatpush.msra.mxu0 0.0
    %2824 = vmatpush.msra.mxu0 0.0
    %2825 = vmatpush.msra.mxu0 0.0
    %2826 = vmatpush.msra.mxu0 0.0
    %2827 = vmatpush.msra.mxu0 %v2795
    %2828 = vmatpush.msra.mxu0 %v2789
    %2829 = vmatpush.msra.mxu0 %v2783
    %2830 = vmatpush.msra.mxu0 %v2777
    %2831 = vmatpush.msra.mxu0 %v2771
    %2832 = vmatpush.msra.mxu0 %v2765
    %2833 = vmatpush.msra.mxu0 %v2759
    %2834 = vmatpush.msra.mxu0 %v2753
    %2835 = vmatpush.msra.mxu0 %v2747
    %2836 = vmatmul.f32.gmra.mxu0 %v2261
    %v2837 = vpop.f32.mrf.mxu0
    %v2838 = vadd.f32 %v2258, %v2837
    %2839 = vdwg.mxu0
    %2840 = vmatpush.msra.mxu0 0.0
    %2841 = vmatpush.msra.mxu0 0.0
    %2842 = vmatpush.msra.mxu0 0.0
    %2843 = vmatpush.msra.mxu0 0.0
    %2844 = vmatpush.msra.mxu0 0.0
    %2845 = vmatpush.msra.mxu0 0.0
    %2846 = vmatpush.msra.mxu0 0.0
    %2847 = vmatpush.msra.mxu0 %v2796
    %2848 = vmatpush.msra.mxu0 %v2790
    %2849 = vmatpush.msra.mxu0 %v2784
    %2850 = vmatpush.msra.mxu0 %v2778
    %2851 = vmatpush.msra.mxu0 %v2772
    %2852 = vmatpush.msra.mxu0 %v2766
    %2853 = vmatpush.msra.mxu0 %v2760
    %2854 = vmatpush.msra.mxu0 %v2754
    %2855 = vmatpush.msra.mxu0 %v2748
    %2856 = vmatmul.f32.gmra.mxu0 %v2261
    %v2857 = vpop.f32.mrf.mxu0
    %v2858 = vadd.f32 %v2258, %v2857
    %2859 = vdwg.mxu0
    %2860 = vmatpush.msra.mxu0 0.0
    %2861 = vmatpush.msra.mxu0 0.0
    %2862 = vmatpush.msra.mxu0 0.0
    %2863 = vmatpush.msra.mxu0 0.0
    %2864 = vmatpush.msra.mxu0 0.0
    %2865 = vmatpush.msra.mxu0 0.0
    %2866 = vmatpush.msra.mxu0 0.0
    %2867 = vmatpush.msra.mxu0 %v2797
    %2868 = vmatpush.msra.mxu0 %v2791
    %2869 = vmatpush.msra.mxu0 %v2785
    %2870 = vmatpush.msra.mxu0 %v2779
    %2871 = vmatpush.msra.mxu0 %v2773
    %2872 = vmatpush.msra.mxu0 %v2767
    %2873 = vmatpush.msra.mxu0 %v2761
    %2874 = vmatpush.msra.mxu0 %v2755
    %2875 = vmatpush.msra.mxu0 %v2749
    %2876 = vmatmul.f32.gmra.mxu0 %v2261
    %v2877 = vpop.f32.mrf.mxu0
    %v2878 = vadd.f32 %v2258, %v2877
    %2879 = vdwg.mxu0
    %2880 = vmatpush.msra.mxu0 0.0
    %2881 = vmatpush.msra.mxu0 0.0
    %2882 = vmatpush.msra.mxu0 0.0
    %2883 = vmatpush.msra.mxu0 0.0
    %2884 = vmatpush.msra.mxu0 0.0
    %2885 = vmatpush.msra.mxu0 0.0
    %2886 = vmatpush.msra.mxu0 0.0
    %2887 = vmatpush.msra.mxu0 %v2798
    %2888 = vmatpush.msra.mxu0 %v2792
    %2889 = vmatpush.msra.mxu0 %v2786
    %2890 = vmatpush.msra.mxu0 %v2780
    %2891 = vmatpush.msra.mxu0 %v2774
    %2892 = vmatpush.msra.mxu0 %v2768
    %2893 = vmatpush.msra.mxu0 %v2762
    %2894 = vmatpush.msra.mxu0 %v2756
    %2895 = vmatpush.msra.mxu0 %v2750
    %2896 = vmatmul.f32.gmra.mxu0 %v2261
    %v2897 = vpop.f32.mrf.mxu0
    %v2898 = vadd.f32 %v2258, %v2897
    %2899 = vdwg.mxu0
    %2900 = vmatpush.msra.mxu0 0.0
    %2901 = vmatpush.msra.mxu0 0.0
    %2902 = vmatpush.msra.mxu0 0.0
    %2903 = vmatpush.msra.mxu0 0.0
    %2904 = vmatpush.msra.mxu0 0.0
    %2905 = vmatpush.msra.mxu0 0.0
    %2906 = vmatpush.msra.mxu0 0.0
    %2907 = vmatpush.msra.mxu0 %v2799
    %2908 = vmatpush.msra.mxu0 %v2793
    %2909 = vmatpush.msra.mxu0 %v2787
    %2910 = vmatpush.msra.mxu0 %v2781
    %2911 = vmatpush.msra.mxu0 %v2775
    %2912 = vmatpush.msra.mxu0 %v2769
    %2913 = vmatpush.msra.mxu0 %v2763
    %2914 = vmatpush.msra.mxu0 %v2757
    %2915 = vmatpush.msra.mxu0 %v2751
    %2916 = vmatmul.f32.gmra.mxu0 %v2261
    %v2917 = vpop.f32.mrf.mxu0
    %v2918 = vadd.f32 %v2258, %v2917
    %2919 = vdwg.mxu0
    %v2920 = vmax.f32 %v2818, 0.0
    %v2921 = vmax.f32 %v2838, 0.0
    %v2922 = vmax.f32 %v2858, 0.0
    %v2923 = vmax.f32 %v2878, 0.0
    %v2924 = vmax.f32 %v2898, 0.0
    %v2925 = vmax.f32 %v2918, 0.0
    %v2926 = vmul.f32 %v2920, %v212
    %v2927 = vmul.f32 %v2921, %v213
    %v2928 = vmul.f32 %v2922, %v214
    %v2929 = vmul.f32 %v2923, %v215
    %v2930 = vmul.f32 %v2924, %v216
    %v2931 = vmul.f32 %v2925, %v217
    %v2932 = vadd.f32 %v1848, %v2926
    %v2933 = vadd.f32 %v1849, %v2927
    %v2934 = vadd.f32 %v1850, %v2928
    %v2935 = vadd.f32 %v1851, %v2929
    %v2936 = vadd.f32 %v1852, %v2930
    %v2937 = vadd.f32 %v1853, %v2931
    %2938 = vst [vmem:[#allocation2 + $0x8] sm:$0xff] %v2932
    %2939 = vst [vmem:[#allocation2 + $0x10] sm:$0xff] %v2933
    %2940 = vst [vmem:[#allocation2 + $0x18] sm:$0xff] %v2934
    %2941 = vst [vmem:[#allocation2 + $0x20] sm:$0xff] %v2935
    %2942 = vst [vmem:[#allocation2 + $0x28] sm:$0xff] %v2936
    %2943 = vst.msk [vmem:[#allocation2 + $0x30] sm:$0xff] %vm47, %v2937
    %v2944 = vld [vmem:[#allocation2] sm:$0xff]
    %v2945 = vld [vmem:[#allocation2 + $0x8] sm:$0xff]
    %v2946 = vld [vmem:[#allocation2 + $0x10] sm:$0xff]
    %v2947 = vld [vmem:[#allocation2 + $0x18] sm:$0xff]
    %v2948 = vld [vmem:[#allocation2 + $0x20] sm:$0xff]
    %v2949 = vld [vmem:[#allocation2 + $0x28] sm:$0xff]
    %2956 = vrot.lane.b32.xlu0 %v2944, 19
    %v2957 = vpop.permute.xlu0 %2956
    %2958 = vrot.lane.b32.xlu0 %v2945, 19
    %v2959 = vpop.permute.xlu0 %2958
    %2960 = vrot.lane.b32.xlu0 %v2946, 19
    %v2961 = vpop.permute.xlu0 %2960
    %2962 = vrot.lane.b32.xlu0 %v2947, 19
    %v2963 = vpop.permute.xlu0 %2962
    %2964 = vrot.lane.b32.xlu0 %v2948, 19
    %v2965 = vpop.permute.xlu0 %2964
    %2966 = vrot.lane.b32.xlu0 %v2949, 19
    %v2967 = vpop.permute.xlu0 %2966
    %v2968 = vsel %vm262, %v2957, %v2959
    %v2969 = vsel %vm262, %v2959, %v2961
    %v2970 = vsel %vm262, %v2961, %v2963
    %v2971 = vsel %vm262, %v2963, %v2965
    %v2972 = vsel %vm262, %v2965, %v2967
    %2979 = vst [vmem:[#allocation3] sm:$0xff] %v2968
    %2980 = vst [vmem:[#allocation3 + $0x8] sm:$0xff] %v2969
    %2981 = vst [vmem:[#allocation3 + $0x10] sm:$0xff] %v2970
    %2982 = vst [vmem:[#allocation3 + $0x18] sm:$0xff] %v2971
    %2983 = vst [vmem:[#allocation3 + $0x20] sm:$0xff] %v2972
    %2984 = vst.msk [vmem:[#allocation3 + $0x28] sm:$0xff] %vm47, %v2967
    %v2985 = vld [vmem:[#allocation2] sm:$0xff]
    %v2986 = vld [vmem:[#allocation2 + $0x8] sm:$0xff]
    %v2987 = vld [vmem:[#allocation2 + $0x10] sm:$0xff]
    %v2988 = vld [vmem:[#allocation2 + $0x18] sm:$0xff]
    %v2989 = vld [vmem:[#allocation2 + $0x20] sm:$0xff]
    %v2990 = vld [vmem:[#allocation2 + $0x28] sm:$0xff]
    %2997 = vrot.lane.b32.xlu0 %v2985, 18
    %v2998 = vpop.permute.xlu0 %2997
    %2999 = vrot.lane.b32.xlu0 %v2986, 18
    %v3000 = vpop.permute.xlu0 %2999
    %3001 = vrot.lane.b32.xlu0 %v2987, 18
    %v3002 = vpop.permute.xlu0 %3001
    %3003 = vrot.lane.b32.xlu0 %v2988, 18
    %v3004 = vpop.permute.xlu0 %3003
    %3005 = vrot.lane.b32.xlu0 %v2989, 18
    %v3006 = vpop.permute.xlu0 %3005
    %3007 = vrot.lane.b32.xlu0 %v2990, 18
    %v3008 = vpop.permute.xlu0 %3007
    %v3009 = vsel %vm304, %v2998, %v3000
    %v3010 = vsel %vm304, %v3000, %v3002
    %v3011 = vsel %vm304, %v3002, %v3004
    %v3012 = vsel %vm304, %v3004, %v3006
    %v3013 = vsel %vm304, %v3006, %v3008
    %3020 = vst [vmem:[#allocation3 + $0x30] sm:$0xff] %v3009
    %3021 = vst [vmem:[#allocation3 + $0x38] sm:$0xff] %v3010
    %3022 = vst [vmem:[#allocation3 + $0x40] sm:$0xff] %v3011
    %3023 = vst [vmem:[#allocation3 + $0x48] sm:$0xff] %v3012
    %3024 = vst [vmem:[#allocation3 + $0x50] sm:$0xff] %v3013
    %3025 = vst.msk [vmem:[#allocation3 + $0x58] sm:$0xff] %vm47, %v3008
    %v3026 = vld [vmem:[#allocation2] sm:$0xff]
    %v3027 = vld [vmem:[#allocation2 + $0x8] sm:$0xff]
    %v3028 = vld [vmem:[#allocation2 + $0x10] sm:$0xff]
    %v3029 = vld [vmem:[#allocation2 + $0x18] sm:$0xff]
    %v3030 = vld [vmem:[#allocation2 + $0x20] sm:$0xff]
    %v3031 = vld [vmem:[#allocation2 + $0x28] sm:$0xff]
    %3038 = vrot.lane.b32.xlu0 %v3026, 17
    %v3039 = vpop.permute.xlu0 %3038
    %3040 = vrot.lane.b32.xlu0 %v3027, 17
    %v3041 = vpop.permute.xlu0 %3040
    %3042 = vrot.lane.b32.xlu0 %v3028, 17
    %v3043 = vpop.permute.xlu0 %3042
    %3044 = vrot.lane.b32.xlu0 %v3029, 17
    %v3045 = vpop.permute.xlu0 %3044
    %3046 = vrot.lane.b32.xlu0 %v3030, 17
    %v3047 = vpop.permute.xlu0 %3046
    %3048 = vrot.lane.b32.xlu0 %v3031, 17
    %v3049 = vpop.permute.xlu0 %3048
    %v3050 = vsel %vm346, %v3039, %v3041
    %v3051 = vsel %vm346, %v3041, %v3043
    %v3052 = vsel %vm346, %v3043, %v3045
    %v3053 = vsel %vm346, %v3045, %v3047
    %v3054 = vsel %vm346, %v3047, %v3049
    %3061 = vst [vmem:[#allocation3 + $0x60] sm:$0xff] %v3050
    %3062 = vst [vmem:[#allocation3 + $0x68] sm:$0xff] %v3051
    %3063 = vst [vmem:[#allocation3 + $0x70] sm:$0xff] %v3052
    %3064 = vst [vmem:[#allocation3 + $0x78] sm:$0xff] %v3053
    %3065 = vst [vmem:[#allocation3 + $0x80] sm:$0xff] %v3054
    %3066 = vst.msk [vmem:[#allocation3 + $0x88] sm:$0xff] %vm47, %v3049
    %v3067 = vld [vmem:[#allocation2] sm:$0xff]
    %v3068 = vld [vmem:[#allocation2 + $0x8] sm:$0xff]
    %v3069 = vld [vmem:[#allocation2 + $0x10] sm:$0xff]
    %v3070 = vld [vmem:[#allocation2 + $0x18] sm:$0xff]
    %v3071 = vld [vmem:[#allocation2 + $0x20] sm:$0xff]
    %v3072 = vld [vmem:[#allocation2 + $0x28] sm:$0xff]
    %v3073 = vld [vmem:[#allocation2 + $0x30] sm:$0xff]
    %3081 = vrot.lane.b32.xlu0 %v3067, 1
    %v3082 = vpop.permute.xlu0 %3081
    %3083 = vrot.lane.b32.xlu0 %v3068, 1
    %v3084 = vpop.permute.xlu0 %3083
    %3085 = vrot.lane.b32.xlu0 %v3069, 1
    %v3086 = vpop.permute.xlu0 %3085
    %3087 = vrot.lane.b32.xlu0 %v3070, 1
    %v3088 = vpop.permute.xlu0 %3087
    %3089 = vrot.lane.b32.xlu0 %v3071, 1
    %v3090 = vpop.permute.xlu0 %3089
    %3091 = vrot.lane.b32.xlu0 %v3072, 1
    %v3092 = vpop.permute.xlu0 %3091
    %3093 = vrot.lane.b32.xlu0 %v3073, 1
    %v3094 = vpop.permute.xlu0 %3093
    %v3095 = vsel %vm392, %v3082, %v3084
    %v3096 = vsel %vm392, %v3084, %v3086
    %v3097 = vsel %vm392, %v3086, %v3088
    %v3098 = vsel %vm392, %v3088, %v3090
    %v3099 = vsel %vm392, %v3090, %v3092
    %v3100 = vsel %vm392, %v3092, %v3094
    %3107 = vst [vmem:[#allocation3 + $0x90] sm:$0xff] %v3095
    %3108 = vst [vmem:[#allocation3 + $0x98] sm:$0xff] %v3096
    %3109 = vst [vmem:[#allocation3 + $0xa0] sm:$0xff] %v3097
    %3110 = vst [vmem:[#allocation3 + $0xa8] sm:$0xff] %v3098
    %3111 = vst [vmem:[#allocation3 + $0xb0] sm:$0xff] %v3099
    %3112 = vst.msk [vmem:[#allocation3 + $0xb8] sm:$0xff] %vm47, %v3100
    %3113 = vst [vmem:[#allocation3 + $0xc0] sm:$0xff] %v2932
    %3114 = vst [vmem:[#allocation3 + $0xc8] sm:$0xff] %v2933
    %3115 = vst [vmem:[#allocation3 + $0xd0] sm:$0xff] %v2934
    %3116 = vst [vmem:[#allocation3 + $0xd8] sm:$0xff] %v2935
    %3117 = vst [vmem:[#allocation3 + $0xe0] sm:$0xff] %v2936
    %3118 = vst.msk [vmem:[#allocation3 + $0xe8] sm:$0xff] %vm47, %v2937
    %v3119 = vld [vmem:[#allocation2 + $0x8] sm:$0xff]
    %v3120 = vld [vmem:[#allocation2 + $0x10] sm:$0xff]
    %v3121 = vld [vmem:[#allocation2 + $0x18] sm:$0xff]
    %v3122 = vld [vmem:[#allocation2 + $0x20] sm:$0xff]
    %v3123 = vld [vmem:[#allocation2 + $0x28] sm:$0xff]
    %v3124 = vld [vmem:[#allocation2 + $0x30] sm:$0xff]
    %3131 = vrot.lane.b32.xlu0 %v3119, 127
    %v3132 = vpop.permute.xlu0 %3131
    %3133 = vrot.lane.b32.xlu0 %v3120, 127
    %v3134 = vpop.permute.xlu0 %3133
    %3135 = vrot.lane.b32.xlu0 %v3121, 127
    %v3136 = vpop.permute.xlu0 %3135
    %3137 = vrot.lane.b32.xlu0 %v3122, 127
    %v3138 = vpop.permute.xlu0 %3137
    %3139 = vrot.lane.b32.xlu0 %v3123, 127
    %v3140 = vpop.permute.xlu0 %3139
    %3141 = vrot.lane.b32.xlu0 %v3124, 127
    %v3142 = vpop.permute.xlu0 %3141
    %v3143 = vsel %vm441, %v3132, %v3134
    %v3144 = vsel %vm441, %v3134, %v3136
    %v3145 = vsel %vm441, %v3136, %v3138
    %v3146 = vsel %vm441, %v3138, %v3140
    %v3147 = vsel %vm441, %v3140, %v3142
    %3154 = vst [vmem:[#allocation3 + $0xf0] sm:$0xff] %v3143
    %3155 = vst [vmem:[#allocation3 + $0xf8] sm:$0xff] %v3144
    %3156 = vst [vmem:[#allocation3 + $0x100] sm:$0xff] %v3145
    %3157 = vst [vmem:[#allocation3 + $0x108] sm:$0xff] %v3146
    %3158 = vst [vmem:[#allocation3 + $0x110] sm:$0xff] %v3147
    %3159 = vst.msk [vmem:[#allocation3 + $0x118] sm:$0xff] %vm47, %v3142
    %v3160 = vld [vmem:[#allocation2 + $0x8] sm:$0xff]
    %v3161 = vld [vmem:[#allocation2 + $0x10] sm:$0xff]
    %v3162 = vld [vmem:[#allocation2 + $0x18] sm:$0xff]
    %v3163 = vld [vmem:[#allocation2 + $0x20] sm:$0xff]
    %v3164 = vld [vmem:[#allocation2 + $0x28] sm:$0xff]
    %v3165 = vld [vmem:[#allocation2 + $0x30] sm:$0xff]
    %3172 = vrot.lane.b32.xlu0 %v3160, 111
    %v3173 = vpop.permute.xlu0 %3172
    %3174 = vrot.lane.b32.xlu0 %v3161, 111
    %v3175 = vpop.permute.xlu0 %3174
    %3176 = vrot.lane.b32.xlu0 %v3162, 111
    %v3177 = vpop.permute.xlu0 %3176
    %3178 = vrot.lane.b32.xlu0 %v3163, 111
    %v3179 = vpop.permute.xlu0 %3178
    %3180 = vrot.lane.b32.xlu0 %v3164, 111
    %v3181 = vpop.permute.xlu0 %3180
    %3182 = vrot.lane.b32.xlu0 %v3165, 111
    %v3183 = vpop.permute.xlu0 %3182
    %v3184 = vsel %vm483, %v3173, %v3175
    %v3185 = vsel %vm483, %v3175, %v3177
    %v3186 = vsel %vm483, %v3177, %v3179
    %v3187 = vsel %vm483, %v3179, %v3181
    %v3188 = vsel %vm483, %v3181, %v3183
    %3195 = vst [vmem:[#allocation3 + $0x120] sm:$0xff] %v3184
    %3196 = vst [vmem:[#allocation3 + $0x128] sm:$0xff] %v3185
    %3197 = vst [vmem:[#allocation3 + $0x130] sm:$0xff] %v3186
    %3198 = vst [vmem:[#allocation3 + $0x138] sm:$0xff] %v3187
    %3199 = vst [vmem:[#allocation3 + $0x140] sm:$0xff] %v3188
    %3200 = vst.msk [vmem:[#allocation3 + $0x148] sm:$0xff] %vm47, %v3183
    %v3201 = vld [vmem:[#allocation2 + $0x8] sm:$0xff]
    %v3202 = vld [vmem:[#allocation2 + $0x10] sm:$0xff]
    %v3203 = vld [vmem:[#allocation2 + $0x18] sm:$0xff]
    %v3204 = vld [vmem:[#allocation2 + $0x20] sm:$0xff]
    %v3205 = vld [vmem:[#allocation2 + $0x28] sm:$0xff]
    %v3206 = vld [vmem:[#allocation2 + $0x30] sm:$0xff]
    %3213 = vrot.lane.b32.xlu0 %v3201, 110
    %v3214 = vpop.permute.xlu0 %3213
    %3215 = vrot.lane.b32.xlu0 %v3202, 110
    %v3216 = vpop.permute.xlu0 %3215
    %3217 = vrot.lane.b32.xlu0 %v3203, 110
    %v3218 = vpop.permute.xlu0 %3217
    %3219 = vrot.lane.b32.xlu0 %v3204, 110
    %v3220 = vpop.permute.xlu0 %3219
    %3221 = vrot.lane.b32.xlu0 %v3205, 110
    %v3222 = vpop.permute.xlu0 %3221
    %3223 = vrot.lane.b32.xlu0 %v3206, 110
    %v3224 = vpop.permute.xlu0 %3223
    %v3225 = vsel %vm525, %v3214, %v3216
    %v3226 = vsel %vm525, %v3216, %v3218
    %v3227 = vsel %vm525, %v3218, %v3220
    %v3228 = vsel %vm525, %v3220, %v3222
    %v3229 = vsel %vm525, %v3222, %v3224
    %3236 = vst [vmem:[#allocation3 + $0x150] sm:$0xff] %v3225
    %3237 = vst [vmem:[#allocation3 + $0x158] sm:$0xff] %v3226
    %3238 = vst [vmem:[#allocation3 + $0x160] sm:$0xff] %v3227
    %3239 = vst [vmem:[#allocation3 + $0x168] sm:$0xff] %v3228
    %3240 = vst [vmem:[#allocation3 + $0x170] sm:$0xff] %v3229
    %3241 = vst.msk [vmem:[#allocation3 + $0x178] sm:$0xff] %vm47, %v3224
    %v3242 = vld [vmem:[#allocation2 + $0x8] sm:$0xff]
    %v3243 = vld [vmem:[#allocation2 + $0x10] sm:$0xff]
    %v3244 = vld [vmem:[#allocation2 + $0x18] sm:$0xff]
    %v3245 = vld [vmem:[#allocation2 + $0x20] sm:$0xff]
    %v3246 = vld [vmem:[#allocation2 + $0x28] sm:$0xff]
    %v3247 = vld [vmem:[#allocation2 + $0x30] sm:$0xff]
    %3254 = vrot.lane.b32.xlu0 %v3242, 109
    %v3255 = vpop.permute.xlu0 %3254
    %3256 = vrot.lane.b32.xlu0 %v3243, 109
    %v3257 = vpop.permute.xlu0 %3256
    %3258 = vrot.lane.b32.xlu0 %v3244, 109
    %v3259 = vpop.permute.xlu0 %3258
    %3260 = vrot.lane.b32.xlu0 %v3245, 109
    %v3261 = vpop.permute.xlu0 %3260
    %3262 = vrot.lane.b32.xlu0 %v3246, 109
    %v3263 = vpop.permute.xlu0 %3262
    %3264 = vrot.lane.b32.xlu0 %v3247, 109
    %v3265 = vpop.permute.xlu0 %3264
    %v3266 = vsel %vm567, %v3255, %v3257
    %v3267 = vsel %vm567, %v3257, %v3259
    %v3268 = vsel %vm567, %v3259, %v3261
    %v3269 = vsel %vm567, %v3261, %v3263
    %v3270 = vsel %vm567, %v3263, %v3265
    %3277 = vst [vmem:[#allocation3 + $0x180] sm:$0xff] %v3266
    %3278 = vst [vmem:[#allocation3 + $0x188] sm:$0xff] %v3267
    %3279 = vst [vmem:[#allocation3 + $0x190] sm:$0xff] %v3268
    %3280 = vst [vmem:[#allocation3 + $0x198] sm:$0xff] %v3269
    %3281 = vst [vmem:[#allocation3 + $0x1a0] sm:$0xff] %v3270
    %3282 = vst.msk [vmem:[#allocation3 + $0x1a8] sm:$0xff] %vm47, %v3265
    %v3283 = vld [vmem:[#allocation3] sm:$0xff]
    %v3284 = vld [vmem:[#allocation3 + $0x8] sm:$0xff]
    %v3285 = vld [vmem:[#allocation3 + $0x10] sm:$0xff]
    %v3286 = vld [vmem:[#allocation3 + $0x18] sm:$0xff]
    %v3287 = vld [vmem:[#allocation3 + $0x20] sm:$0xff]
    %v3288 = vld [vmem:[#allocation3 + $0x28] sm:$0xff]
    %v3289 = vld [vmem:[#allocation3 + $0x30] sm:$0xff]
    %v3290 = vld [vmem:[#allocation3 + $0x38] sm:$0xff]
    %v3291 = vld [vmem:[#allocation3 + $0x40] sm:$0xff]
    %v3292 = vld [vmem:[#allocation3 + $0x48] sm:$0xff]
    %v3293 = vld [vmem:[#allocation3 + $0x50] sm:$0xff]
    %v3294 = vld [vmem:[#allocation3 + $0x58] sm:$0xff]
    %v3295 = vld [vmem:[#allocation3 + $0x60] sm:$0xff]
    %v3296 = vld [vmem:[#allocation3 + $0x68] sm:$0xff]
    %v3297 = vld [vmem:[#allocation3 + $0x70] sm:$0xff]
    %v3298 = vld [vmem:[#allocation3 + $0x78] sm:$0xff]
    %v3299 = vld [vmem:[#allocation3 + $0x80] sm:$0xff]
    %v3300 = vld [vmem:[#allocation3 + $0x88] sm:$0xff]
    %v3301 = vld [vmem:[#allocation3 + $0x90] sm:$0xff]
    %v3302 = vld [vmem:[#allocation3 + $0x98] sm:$0xff]
    %v3303 = vld [vmem:[#allocation3 + $0xa0] sm:$0xff]
    %v3304 = vld [vmem:[#allocation3 + $0xa8] sm:$0xff]
    %v3305 = vld [vmem:[#allocation3 + $0xb0] sm:$0xff]
    %v3306 = vld [vmem:[#allocation3 + $0xb8] sm:$0xff]
    %v3307 = vld [vmem:[#allocation3 + $0xc0] sm:$0xff]
    %v3308 = vld [vmem:[#allocation3 + $0xc8] sm:$0xff]
    %v3309 = vld [vmem:[#allocation3 + $0xd0] sm:$0xff]
    %v3310 = vld [vmem:[#allocation3 + $0xd8] sm:$0xff]
    %v3311 = vld [vmem:[#allocation3 + $0xe0] sm:$0xff]
    %v3312 = vld [vmem:[#allocation3 + $0xe8] sm:$0xff]
    %v3313 = vld [vmem:[#allocation3 + $0xf0] sm:$0xff]
    %v3314 = vld [vmem:[#allocation3 + $0xf8] sm:$0xff]
    %v3315 = vld [vmem:[#allocation3 + $0x100] sm:$0xff]
    %v3316 = vld [vmem:[#allocation3 + $0x108] sm:$0xff]
    %v3317 = vld [vmem:[#allocation3 + $0x110] sm:$0xff]
    %v3318 = vld [vmem:[#allocation3 + $0x118] sm:$0xff]
    %v3319 = vld [vmem:[#allocation3 + $0x120] sm:$0xff]
    %v3320 = vld [vmem:[#allocation3 + $0x128] sm:$0xff]
    %v3321 = vld [vmem:[#allocation3 + $0x130] sm:$0xff]
    %v3322 = vld [vmem:[#allocation3 + $0x138] sm:$0xff]
    %v3323 = vld [vmem:[#allocation3 + $0x140] sm:$0xff]
    %v3324 = vld [vmem:[#allocation3 + $0x148] sm:$0xff]
    %v3325 = vld [vmem:[#allocation3 + $0x150] sm:$0xff]
    %v3326 = vld [vmem:[#allocation3 + $0x158] sm:$0xff]
    %v3327 = vld [vmem:[#allocation3 + $0x160] sm:$0xff]
    %v3328 = vld [vmem:[#allocation3 + $0x168] sm:$0xff]
    %v3329 = vld [vmem:[#allocation3 + $0x170] sm:$0xff]
    %v3330 = vld [vmem:[#allocation3 + $0x178] sm:$0xff]
    %v3331 = vld [vmem:[#allocation3 + $0x180] sm:$0xff]
    %v3332 = vld [vmem:[#allocation3 + $0x188] sm:$0xff]
    %v3333 = vld [vmem:[#allocation3 + $0x190] sm:$0xff]
    %v3334 = vld [vmem:[#allocation3 + $0x198] sm:$0xff]
    %v3335 = vld [vmem:[#allocation3 + $0x1a0] sm:$0xff]
    %v3336 = vld [vmem:[#allocation3 + $0x1a8] sm:$0xff]
    %3337 = vmatpush.msra.mxu0 0.0
    %3338 = vmatpush.msra.mxu0 0.0
    %3339 = vmatpush.msra.mxu0 0.0
    %3340 = vmatpush.msra.mxu0 0.0
    %3341 = vmatpush.msra.mxu0 0.0
    %3342 = vmatpush.msra.mxu0 0.0
    %3343 = vmatpush.msra.mxu0 0.0
    %3344 = vmatpush.msra.mxu0 %v3331
    %3345 = vmatpush.msra.mxu0 %v3325
    %3346 = vmatpush.msra.mxu0 %v3319
    %3347 = vmatpush.msra.mxu0 %v3313
    %3348 = vmatpush.msra.mxu0 %v3307
    %3349 = vmatpush.msra.mxu0 %v3301
    %3350 = vmatpush.msra.mxu0 %v3295
    %3351 = vmatpush.msra.mxu0 %v3289
    %3352 = vmatpush.msra.mxu0 %v3283
    %3353 = vmatmul.f32.gmra.mxu0 %v2261
    %v3354 = vpop.f32.mrf.mxu0
    %v3355 = vadd.f32 %v2258, %v3354
    %3356 = vdwg.mxu0
    %3357 = vmatpush.msra.mxu0 0.0
    %3358 = vmatpush.msra.mxu0 0.0
    %3359 = vmatpush.msra.mxu0 0.0
    %3360 = vmatpush.msra.mxu0 0.0
    %3361 = vmatpush.msra.mxu0 0.0
    %3362 = vmatpush.msra.mxu0 0.0
    %3363 = vmatpush.msra.mxu0 0.0
    %3364 = vmatpush.msra.mxu0 %v3332
    %3365 = vmatpush.msra.mxu0 %v3326
    %3366 = vmatpush.msra.mxu0 %v3320
    %3367 = vmatpush.msra.mxu0 %v3314
    %3368 = vmatpush.msra.mxu0 %v3308
    %3369 = vmatpush.msra.mxu0 %v3302
    %3370 = vmatpush.msra.mxu0 %v3296
    %3371 = vmatpush.msra.mxu0 %v3290
    %3372 = vmatpush.msra.mxu0 %v3284
    %3373 = vmatmul.f32.gmra.mxu0 %v2261
    %v3374 = vpop.f32.mrf.mxu0
    %v3375 = vadd.f32 %v2258, %v3374
    %3376 = vdwg.mxu0
    %3377 = vmatpush.msra.mxu0 0.0
    %3378 = vmatpush.msra.mxu0 0.0
    %3379 = vmatpush.msra.mxu0 0.0
    %3380 = vmatpush.msra.mxu0 0.0
    %3381 = vmatpush.msra.mxu0 0.0
    %3382 = vmatpush.msra.mxu0 0.0
    %3383 = vmatpush.msra.mxu0 0.0
    %3384 = vmatpush.msra.mxu0 %v3333
    %3385 = vmatpush.msra.mxu0 %v3327
    %3386 = vmatpush.msra.mxu0 %v3321
    %3387 = vmatpush.msra.mxu0 %v3315
    %3388 = vmatpush.msra.mxu0 %v3309
    %3389 = vmatpush.msra.mxu0 %v3303
    %3390 = vmatpush.msra.mxu0 %v3297
    %3391 = vmatpush.msra.mxu0 %v3291
    %3392 = vmatpush.msra.mxu0 %v3285
    %3393 = vmatmul.f32.gmra.mxu0 %v2261
    %v3394 = vpop.f32.mrf.mxu0
    %v3395 = vadd.f32 %v2258, %v3394
    %3396 = vdwg.mxu0
    %3397 = vmatpush.msra.mxu0 0.0
    %3398 = vmatpush.msra.mxu0 0.0
    %3399 = vmatpush.msra.mxu0 0.0
    %3400 = vmatpush.msra.mxu0 0.0
    %3401 = vmatpush.msra.mxu0 0.0
    %3402 = vmatpush.msra.mxu0 0.0
    %3403 = vmatpush.msra.mxu0 0.0
    %3404 = vmatpush.msra.mxu0 %v3334
    %3405 = vmatpush.msra.mxu0 %v3328
    %3406 = vmatpush.msra.mxu0 %v3322
    %3407 = vmatpush.msra.mxu0 %v3316
    %3408 = vmatpush.msra.mxu0 %v3310
    %3409 = vmatpush.msra.mxu0 %v3304
    %3410 = vmatpush.msra.mxu0 %v3298
    %3411 = vmatpush.msra.mxu0 %v3292
    %3412 = vmatpush.msra.mxu0 %v3286
    %3413 = vmatmul.f32.gmra.mxu0 %v2261
    %v3414 = vpop.f32.mrf.mxu0
    %v3415 = vadd.f32 %v2258, %v3414
    %3416 = vdwg.mxu0
    %3417 = vmatpush.msra.mxu0 0.0
    %3418 = vmatpush.msra.mxu0 0.0
    %3419 = vmatpush.msra.mxu0 0.0
    %3420 = vmatpush.msra.mxu0 0.0
    %3421 = vmatpush.msra.mxu0 0.0
    %3422 = vmatpush.msra.mxu0 0.0
    %3423 = vmatpush.msra.mxu0 0.0
    %3424 = vmatpush.msra.mxu0 %v3335
    %3425 = vmatpush.msra.mxu0 %v3329
    %3426 = vmatpush.msra.mxu0 %v3323
    %3427 = vmatpush.msra.mxu0 %v3317
    %3428 = vmatpush.msra.mxu0 %v3311
    %3429 = vmatpush.msra.mxu0 %v3305
    %3430 = vmatpush.msra.mxu0 %v3299
    %3431 = vmatpush.msra.mxu0 %v3293
    %3432 = vmatpush.msra.mxu0 %v3287
    %3433 = vmatmul.f32.gmra.mxu0 %v2261
    %v3434 = vpop.f32.mrf.mxu0
    %v3435 = vadd.f32 %v2258, %v3434
    %3436 = vdwg.mxu0
    %3437 = vmatpush.msra.mxu0 0.0
    %3438 = vmatpush.msra.mxu0 0.0
    %3439 = vmatpush.msra.mxu0 0.0
    %3440 = vmatpush.msra.mxu0 0.0
    %3441 = vmatpush.msra.mxu0 0.0
    %3442 = vmatpush.msra.mxu0 0.0
    %3443 = vmatpush.msra.mxu0 0.0
    %3444 = vmatpush.msra.mxu0 %v3336
    %3445 = vmatpush.msra.mxu0 %v3330
    %3446 = vmatpush.msra.mxu0 %v3324
    %3447 = vmatpush.msra.mxu0 %v3318
    %3448 = vmatpush.msra.mxu0 %v3312
    %3449 = vmatpush.msra.mxu0 %v3306
    %3450 = vmatpush.msra.mxu0 %v3300
    %3451 = vmatpush.msra.mxu0 %v3294
    %3452 = vmatpush.msra.mxu0 %v3288
    %3453 = vmatmul.f32.gmra.mxu0 %v2261
    %v3454 = vpop.f32.mrf.mxu0
    %v3455 = vadd.f32 %v2258, %v3454
    %3456 = vdwg.mxu0
    %v3457 = vmax.f32 %v3355, 0.0
    %v3458 = vmax.f32 %v3375, 0.0
    %v3459 = vmax.f32 %v3395, 0.0
    %v3460 = vmax.f32 %v3415, 0.0
    %v3461 = vmax.f32 %v3435, 0.0
    %v3462 = vmax.f32 %v3455, 0.0
    %v3463 = vadd.f32 %v224, %v3457
    %v3464 = vadd.f32 %v225, %v3458
    %v3465 = vadd.f32 %v226, %v3459
    %v3466 = vadd.f32 %v227, %v3460
    %v3467 = vadd.f32 %v228, %v3461
    %v3468 = vadd.f32 %v229, %v3462
    %3469 = vst [vmem:[#allocation7] sm:$0xff] %v3463
    %3470 = vst [vmem:[#allocation7 + $0x8] sm:$0xff] %v3464
    %3471 = vst [vmem:[#allocation7 + $0x10] sm:$0xff] %v3465
    %3472 = vst [vmem:[#allocation7 + $0x18] sm:$0xff] %v3466
    %3473 = vst [vmem:[#allocation7 + $0x20] sm:$0xff] %v3467
    %3474 = vst.msk [vmem:[#allocation7 + $0x28] sm:$0xff] %vm47, %v3468
    // Predicated region
    $region38: #{tpu_custom_call.1} parent=1 // pred_check
      _
    $region39: #{tpu_custom_call.1} parent=1 // pred_check_branch
      %3476 = sbr.rel (0) target = $region41
    $region40: #{tpu_custom_call.1} parent=1 // pred_region
      %3478 = vsyncadd [#allocation6], 0
      %s3480 = sshll.u32 [#allocation7], 4
      %s3481 = int_to_ptr.vmem [resolvable:$true] %s3480
      %s3482 = sshll.u32 %s8, 4
      %s3483 = int_to_ptr.hbm [resolvable:$true] %s3482
      %3485 = dma.vmem_to_hbm [thread:$0]  %s3481, 768, %s3483, [#allocation6]
    $region41: #{tpu_custom_call.1} parent=1 // pred_fallthru
      _
    // Predicated region
    $region42: #{tpu_custom_call.1} parent=1 // pred_check
      _
    $region43: #{tpu_custom_call.1} parent=1 // pred_check_branch
      %3487 = sbr.rel (0) target = $region45
    $region44: #{tpu_custom_call.1} parent=1 // pred_region
      %3489 = dma.done [#allocation6], 768
    $region45: #{tpu_custom_call.1} parent=1 // pred_fallthru
      _
    %3490 = vsyncpa [#allocation5], 1
    %3491 = vsyncpa [#allocation6], 1

</llo_original>
